<compile_context>
chip_gen: v7x
topology: tpu7x:2x2x1
jax: 0.10.0
libtpu: 0.0.40
codegen_flags: <defaults>
</compile_context>

<pallas_src>
import functools

import numpy as np
import jax
import jax.numpy as jnp
from jax.experimental import pallas as pl
from jax.experimental.pallas import tpu as pltpu


# ----------------------------------------------------------------------------
# Pallas kernels
# ----------------------------------------------------------------------------
def _matmul_bias_kernel(a_ref, w_ref, b_ref, o_ref, *, relu):
    acc = jnp.dot(a_ref[...], w_ref[...], preferred_element_type=jnp.float32)
    acc = acc + b_ref[...]
    if relu:
        acc = jnp.maximum(acc, 0.0)
    o_ref[...] = acc.astype(o_ref.dtype)


def matmul_bias_relu(a, w, b):
    """relu(a @ w + b), single-block Pallas call (used for the small convs)."""
    M, K = a.shape
    K2, N = w.shape
    assert K == K2
    b2 = b.reshape(1, N).astype(jnp.float32)
    return pl.pallas_call(
        functools.partial(_matmul_bias_kernel, relu=True),
        out_shape=jax.ShapeDtypeStruct((M, N), jnp.float32),
        grid=(1,),
        in_specs=[
            pl.BlockSpec((M, K), lambda j: (0, 0)),
            pl.BlockSpec((K, N), lambda j: (0, 0)),
            pl.BlockSpec((1, N), lambda j: (0, 0)),
        ],
        out_specs=pl.BlockSpec((M, N), lambda j: (0, 0)),
        compiler_params=pltpu.CompilerParams(dimension_semantics=("parallel",)),
    )(a, w, b2)


def _classifier_kernel(x_ref, w1_ref, b1_ref, w2_ref, b2_ref, w3_ref, b3_ref,
                       o_ref, acc2_ref):
    j = pl.program_id(0)

    @pl.when(j == 0)
    def _():
        acc2_ref[...] = jnp.zeros_like(acc2_ref)

    # fc1 N-tile: bf16 operands on the MXU, f32 accumulation / bias / ReLU.
    h1 = jnp.dot(x_ref[...].astype(jnp.bfloat16), w1_ref[...],
                 preferred_element_type=jnp.float32)
    h1 = jnp.maximum(h1 + b1_ref[...], 0.0)
    # Partial fc2 contribution of this fc1 N-tile (K-reduction over the grid).
    acc2_ref[...] += jnp.dot(h1.astype(jnp.bfloat16), w2_ref[...],
                             preferred_element_type=jnp.float32)

    @pl.when(j == pl.num_programs(0) - 1)
    def _():
        h2 = jnp.maximum(acc2_ref[...] + b2_ref[...], 0.0)
        out = jnp.dot(h2, w3_ref[...], preferred_element_type=jnp.float32)
        o_ref[...] = (out + b3_ref[...]).astype(o_ref.dtype)


def fused_classifier(a, w1, b1, w2, b2, w3p, b3p, *, tn1=512):
    """fc1 -> ReLU -> fc2 -> ReLU -> fc3 fused in one pallas_call.

    a  : (M, K1) f32 activations
    w1 : (K1, N1) bf16   b1 : (N1,) f32
    w2 : (N1, N2) bf16   b2 : (N2,) f32
    w3p: (N2, NP) f32    b3p: (NP,) f32   (fc3 padded to NP=128 output lanes)
    """
    M, K1 = a.shape
    K1_, N1 = w1.shape
    assert K1 == K1_
    N2 = w2.shape[1]
    NP = w3p.shape[1]
    assert N1 % tn1 == 0
    grid = (N1 // tn1,)

    b1r = b1.reshape(1, N1).astype(jnp.float32)
    b2r = b2.reshape(1, N2).astype(jnp.float32)
    b3r = b3p.reshape(1, NP).astype(jnp.float32)

    # This kernel is weight-bytes-bound at tiny batch; tell XLA so.
    bytes_accessed = int(a.size * 4 + w1.size * 2 + w2.size * 2 + w3p.size * 4
                         + b1r.size * 4 + b2r.size * 4 + b3r.size * 4
                         + M * NP * 4)
    flops = int(2 * M * (K1 * N1 + N1 * N2 + N2 * NP))

    return pl.pallas_call(
        _classifier_kernel,
        out_shape=jax.ShapeDtypeStruct((M, NP), jnp.float32),
        grid=grid,
        in_specs=[
            pl.BlockSpec((M, K1), lambda j: (0, 0)),     # activations (resident)
            pl.BlockSpec((K1, tn1), lambda j: (0, j)),   # fc1 weight N-tile (bf16)
            pl.BlockSpec((1, tn1), lambda j: (0, j)),    # fc1 bias tile
            pl.BlockSpec((tn1, N2), lambda j: (j, 0)),   # fc2 weight K-tile (bf16)
            pl.BlockSpec((1, N2), lambda j: (0, 0)),     # fc2 bias (resident)
            pl.BlockSpec((N2, NP), lambda j: (0, 0)),    # fc3 weight (resident)
            pl.BlockSpec((1, NP), lambda j: (0, 0)),     # fc3 bias (resident)
        ],
        out_specs=pl.BlockSpec((M, NP), lambda j: (0, 0)),
        scratch_shapes=[pltpu.VMEM((M, N2), jnp.float32)],
        compiler_params=pltpu.CompilerParams(
            dimension_semantics=("arbitrary",)),  # grid axis is fc2's K-reduction
        cost_estimate=pl.CostEstimate(
            flops=flops, transcendentals=0, bytes_accessed=bytes_accessed),
    )(a, w1, b1r, w2, b2r, w3p, b3r)


# ----------------------------------------------------------------------------
# Layer glue (NHWC); heavy compute goes through the Pallas kernels
# ----------------------------------------------------------------------------
def conv2x2_relu(x, w, b):
    """Conv2d(kernel_size=2, stride=1, 'VALID') + ReLU with NHWC activations.

    im2col = 4 shifted slices concatenated along the channel (lane) dim; the
    matmul runs on the MXU in a Pallas kernel with Cout as the lane-dense
    output dim.  w is in PyTorch (Cout, Cin, KH, KW) layout.
    """
    N, H, W, Cin = x.shape
    Cout = w.shape[0]
    OH, OW = H - 1, W - 1
    taps = [x[:, dy:dy + OH, dx:dx + OW, :] for dy in (0, 1) for dx in (0, 1)]
    patches = jnp.concatenate(taps, axis=-1)                  # (N, OH, OW, 4*Cin)
    a = patches.reshape(N * OH * OW, 4 * Cin)                 # (kh, kw, cin) order
    wm = jnp.transpose(w, (2, 3, 1, 0)).reshape(4 * Cin, Cout)
    out = matmul_bias_relu(a, wm, b)                          # (N*OH*OW, Cout)
    return out.reshape(N, OH, OW, Cout)


def maxpool2d(x, k):
    """Non-overlapping k x k max pool, NHWC.  Delegated to XLA (see header)."""
    return jax.lax.reduce_window(x, -jnp.inf, jax.lax.max,
                                 (1, k, k, 1), (1, k, k, 1), "VALID")


def _adaptive_avg_matrix(in_size, out_size):
    """PyTorch AdaptiveAvgPool index rule: start=floor(i*in/out),
    end=ceil((i+1)*in/out).  (For out>in, each output row selects one input.)"""
    m = np.zeros((out_size, in_size), dtype=np.float32)
    for i in range(out_size):
        s = (i * in_size) // out_size
        e = -((-(i + 1) * in_size) // out_size)
        m[i, s:e] = 1.0 / (e - s)
    return m


def prepare_params(params, input_hw=(28, 28)):
    """One-time (eager, outside jit) transform of PyTorch-layout params:
      - fold AdaptiveAvgPool2d((6,6)) into fc1's weight, with rows reordered to
        the NHWC flatten order used by the forward pass,
      - store fc1/fc2 weights in bf16 (halves weight HBM traffic),
      - pad fc3 to 128 output lanes (unmasked stores; sliced in the wrapper)."""
    H, W = input_hw
    h3 = ((H - 1) // 3 - 1) // 2 - 1      # conv1 -> pool3 -> conv2 -> pool2 -> conv3
    w3 = ((W - 1) // 3 - 1) // 2 - 1
    C3 = params["conv3_w"].shape[0]

    lh = jnp.asarray(_adaptive_avg_matrix(h3, 6))             # (6, h3)
    lw = jnp.asarray(_adaptive_avg_matrix(w3, 6))             # (6, w3)
    n1 = params["fc1_w"].shape[1]
    w1 = params["fc1_w"].reshape(C3, 6, 6, n1)                # torch flatten (c,i,j)
    # fc1(adaptive_pool(x)) == fc1_eff(x), rows in (p,q,c) = NHWC flatten order.
    w1_eff = jnp.einsum("ip,jq,cijo->pqco", lh, lw, w1).reshape(h3 * w3 * C3, n1)

    NP = 128
    n2, n3 = params["fc3_w"].shape
    w3p = jnp.zeros((n2, NP), jnp.float32).at[:, :n3].set(params["fc3_w"])
    b3p = jnp.zeros((NP,), jnp.float32).at[:n3].set(params["fc3_b"])

    return {
        "conv1_w": params["conv1_w"], "conv1_b": params["conv1_b"],
        "conv2_w": params["conv2_w"], "conv2_b": params["conv2_b"],
        "conv3_w": params["conv3_w"], "conv3_b": params["conv3_b"],
        "fc1_w": w1_eff.astype(jnp.bfloat16), "fc1_b": params["fc1_b"],
        "fc2_w": params["fc2_w"].astype(jnp.bfloat16), "fc2_b": params["fc2_b"],
        "fc3_w": w3p, "fc3_b": b3p,
        "n_classes": int(n3),
    }


# ----------------------------------------------------------------------------
# CNN forward (matches the PyTorch module, eval mode)
# ----------------------------------------------------------------------------
def cnn_forward(x, params):
    # NCHW -> NHWC once; feature-extractor activations stay NHWC throughout.
    x = jnp.transpose(x, (0, 2, 3, 1))
    x = conv2x2_relu(x, params["conv1_w"], params["conv1_b"])
    x = maxpool2d(x, 3)
    x = conv2x2_relu(x, params["conv2_w"], params["conv2_b"])
    x = maxpool2d(x, 2)
    x = conv2x2_relu(x, params["conv3_w"], params["conv3_b"])
    # AdaptiveAvgPool2d((6,6)) + torch.flatten(x, 1): the pool is folded into
    # fc1's weight (prepare_params), so flatten the conv3 output directly.
    a = x.reshape(x.shape[0], -1)
    # classifier: fc1 -> ReLU -> fc2 -> ReLU -> fc3 fused in one Pallas kernel.
    # Dropout layers are identity in eval-mode forward.
    out = fused_classifier(a, params["fc1_w"], params["fc1_b"],
                           params["fc2_w"], params["fc2_b"],
                           params["fc3_w"], params["fc3_b"])
    return out[:, :params["n_classes"]]


def init_params(key):
    ks = jax.random.split(key, 12)

    def u(k, shape, fan_in):
        bound = 1.0 / np.sqrt(fan_in)
        return jax.random.uniform(k, shape, jnp.float32, -bound, bound)

    p = {}
    p["conv1_w"] = u(ks[0], (32, 1, 2, 2), 1 * 4)
    p["conv1_b"] = u(ks[1], (32,), 1 * 4)
    p["conv2_w"] = u(ks[2], (64, 32, 2, 2), 32 * 4)
    p["conv2_b"] = u(ks[3], (64,), 32 * 4)
    p["conv3_w"] = u(ks[4], (128, 64, 2, 2), 64 * 4)
    p["conv3_b"] = u(ks[5], (128,), 64 * 4)
    # Linear weights stored as (in, out) so forward is x @ W + b
    p["fc1_w"] = u(ks[6], (128 * 6 * 6, 1024), 128 * 6 * 6)
    p["fc1_b"] = u(ks[7], (1024,), 128 * 6 * 6)
    p["fc2_w"] = u(ks[8], (1024, 256), 1024)
    p["fc2_b"] = u(ks[9], (256,), 1024)
    p["fc3_w"] = u(ks[10], (256, 10), 256)
    p["fc3_b"] = u(ks[11], (10,), 256)
    return p


# Pure-JAX f32 reference (NCHW, original un-folded / un-quantized weights).
def reference_forward(x, params):
    def conv(x, w, b):
        y = jax.lax.conv_general_dilated(
            x, w, (1, 1), "VALID", dimension_numbers=("NCHW", "OIHW", "NCHW"))
        return jax.nn.relu(y + b.reshape(1, -1, 1, 1))

    def pool(x, k):
        return jax.lax.reduce_window(
            x, -jnp.inf, jax.lax.max, (1, 1, k, k), (1, 1, k, k), "VALID")

    x = conv(x, params["conv1_w"], params["conv1_b"]); x = pool(x, 3)
    x = conv(x, params["conv2_w"], params["conv2_b"]); x = pool(x, 2)
    x = conv(x, params["conv3_w"], params["conv3_b"])
    N, C, H, W = x.shape
    lh = jnp.asarray(_adaptive_avg_matrix(H, 6))
    lw = jnp.asarray(_adaptive_avg_matrix(W, 6))
    x = jnp.einsum("ip,ncpq,jq->ncij", lh, x, lw)
    x = x.reshape(N, -1)
    x = jax.nn.relu(x @ params["fc1_w"] + params["fc1_b"])
    x = jax.nn.relu(x @ params["fc2_w"] + params["fc2_b"])
    return x @ params["fc3_w"] + params["fc3_b"]


if __name__ == "__main__":
    key = jax.random.PRNGKey(0)
    pkey, xkey = jax.random.split(key)
    params = init_params(pkey)
    prepared = prepare_params(params, input_hw=(28, 28))

    # MNIST-like input: batch=2, 1 channel, 28x28 (forward implies 1 input channel).
    x = jax.random.normal(xkey, (2, 1, 28, 28), jnp.float32)

    fwd = jax.jit(lambda xx: cnn_forward(xx, prepared))
    out = jax.block_until_ready(fwd(x))
    assert out.shape == (2, 10)

    ref = reference_forward(x, params)
    np.testing.assert_allclose(np.asarray(out), np.asarray(ref), rtol=2e-2, atol=2e-2)

    print("KERNEL_OK")
</pallas_src>

<mosaic_0001>
module attributes {stable_mosaic.version = 11 : i64} {
  func.func @_matmul_bias_kernel(%arg0: i32, %arg1: memref<1458x4xf32, #tpu.memory_space<vmem>>, %arg2: memref<4x32xf32, #tpu.memory_space<vmem>>, %arg3: memref<1x32xf32, #tpu.memory_space<vmem>>, %arg4: memref<1458x32xf32, #tpu.memory_space<vmem>>) attributes {dimension_semantics = [#tpu.dimension_semantics<parallel>], iteration_bounds = array<i64: 1>, scalar_prefetch = 0 : i64, scratch_operands = 0 : i64, tpu.core_type = #tpu.core_type<tc>, window_params = [{pipeline_mode = #tpu.pipeline_mode<synchronous>, transform_indices = @transform_0, window_bounds = array<i64: 1458, 4>}, {pipeline_mode = #tpu.pipeline_mode<synchronous>, transform_indices = @transform_1, window_bounds = array<i64: 4, 32>}, {pipeline_mode = #tpu.pipeline_mode<synchronous>, transform_indices = @transform_2, window_bounds = array<i64: 1, 32>}, {pipeline_mode = #tpu.pipeline_mode<synchronous>, transform_indices = @transform_3, window_bounds = array<i64: 1458, 32>}]} {
    %c0 = arith.constant 0 : index
    %c0_0 = arith.constant 0 : index
    %0 = vector.load %arg1[%c0, %c0_0] : memref<1458x4xf32, #tpu.memory_space<vmem>>, vector<1458x4xf32>
    %c0_1 = arith.constant 0 : index
    %c0_2 = arith.constant 0 : index
    %1 = vector.load %arg2[%c0_1, %c0_2] : memref<4x32xf32, #tpu.memory_space<vmem>>, vector<4x32xf32>
    %cst = arith.constant dense<0.000000e+00> : vector<1458x32xf32>
    %2 = tpu.matmul %0, %1, %cst {dimension_numbers = #tpu.dot_dimension_numbers<[1], [0], [0], [1], [0, 0, 1, 1], [], []>} : vector<1458x4xf32>, vector<4x32xf32>, vector<1458x32xf32> -> vector<1458x32xf32>
    %c0_3 = arith.constant 0 : index
    %c0_4 = arith.constant 0 : index
    %3 = vector.load %arg3[%c0_3, %c0_4] : memref<1x32xf32, #tpu.memory_space<vmem>>, vector<1x32xf32>
    %4 = vector.broadcast %3 : vector<1x32xf32> to vector<1458x32xf32>
    %5 = arith.addf %2, %4 : vector<1458x32xf32>
    %cst_5 = arith.constant 0.000000e+00 : f32
    %6 = vector.broadcast %cst_5 : f32 to vector<1458x32xf32>
    %7 = arith.maximumf %5, %6 : vector<1458x32xf32>
    %c0_6 = arith.constant 0 : index
    %c0_7 = arith.constant 0 : index
    %8 = vector.load %arg4[%c0_6, %c0_7] : memref<1458x32xf32, #tpu.memory_space<vmem>>, vector<1458x32xf32>
    tpu.vector_store %arg4[%c0_6, %c0_7], %7 {strides = array<i32>} : memref<1458x32xf32, #tpu.memory_space<vmem>>, vector<1458x32xf32>,
    return
  }
  func.func @transform_0(%arg0: i32) -> (i32, i32) {
    %c0_i32 = arith.constant 0 : i32
    %c0_i32_0 = arith.constant 0 : i32
    %c0_i32_1 = arith.constant 0 : i32
    return %c0_i32, %c0_i32_0 : i32, i32
  }
  func.func @transform_1(%arg0: i32) -> (i32, i32) {
    %c0_i32 = arith.constant 0 : i32
    %c0_i32_0 = arith.constant 0 : i32
    %c0_i32_1 = arith.constant 0 : i32
    return %c0_i32, %c0_i32_0 : i32, i32
  }
  func.func @transform_2(%arg0: i32) -> (i32, i32) {
    %c0_i32 = arith.constant 0 : i32
    %c0_i32_0 = arith.constant 0 : i32
    %c0_i32_1 = arith.constant 0 : i32
    return %c0_i32, %c0_i32_0 : i32, i32
  }
  func.func @transform_3(%arg0: i32) -> (i32, i32) {
    %c0_i32 = arith.constant 0 : i32
    %c0_i32_0 = arith.constant 0 : i32
    %c0_i32_1 = arith.constant 0 : i32
    return %c0_i32, %c0_i32_0 : i32, i32
  }
}

module attributes {stable_mosaic.version = 11 : i64} {
  func.func @_matmul_bias_kernel(%arg0: i32, %arg1: memref<128x128xf32, #tpu.memory_space<vmem>>, %arg2: memref<128x64xf32, #tpu.memory_space<vmem>>, %arg3: memref<1x64xf32, #tpu.memory_space<vmem>>, %arg4: memref<128x64xf32, #tpu.memory_space<vmem>>) attributes {dimension_semantics = [#tpu.dimension_semantics<parallel>], iteration_bounds = array<i64: 1>, scalar_prefetch = 0 : i64, scratch_operands = 0 : i64, tpu.core_type = #tpu.core_type<tc>, window_params = [{pipeline_mode = #tpu.pipeline_mode<synchronous>, transform_indices = @transform_0, window_bounds = array<i64: 128, 128>}, {pipeline_mode = #tpu.pipeline_mode<synchronous>, transform_indices = @transform_1, window_bounds = array<i64: 128, 64>}, {pipeline_mode = #tpu.pipeline_mode<synchronous>, transform_indices = @transform_2, window_bounds = array<i64: 1, 64>}, {pipeline_mode = #tpu.pipeline_mode<synchronous>, transform_indices = @transform_3, window_bounds = array<i64: 128, 64>}]} {
    %c0 = arith.constant 0 : index
    %c0_0 = arith.constant 0 : index
    %0 = vector.load %arg1[%c0, %c0_0] : memref<128x128xf32, #tpu.memory_space<vmem>>, vector<128x128xf32>
    %c0_1 = arith.constant 0 : index
    %c0_2 = arith.constant 0 : index
    %1 = vector.load %arg2[%c0_1, %c0_2] : memref<128x64xf32, #tpu.memory_space<vmem>>, vector<128x64xf32>
    %cst = arith.constant dense<0.000000e+00> : vector<128x64xf32>
    %2 = tpu.matmul %0, %1, %cst {dimension_numbers = #tpu.dot_dimension_numbers<[1], [0], [0], [1], [0, 0, 1, 1], [], []>} : vector<128x128xf32>, vector<128x64xf32>, vector<128x64xf32> -> vector<128x64xf32>
    %c0_3 = arith.constant 0 : index
    %c0_4 = arith.constant 0 : index
    %3 = vector.load %arg3[%c0_3, %c0_4] : memref<1x64xf32, #tpu.memory_space<vmem>>, vector<1x64xf32>
    %4 = vector.broadcast %3 : vector<1x64xf32> to vector<128x64xf32>
    %5 = arith.addf %2, %4 : vector<128x64xf32>
    %cst_5 = arith.constant 0.000000e+00 : f32
    %6 = vector.broadcast %cst_5 : f32 to vector<128x64xf32>
    %7 = arith.maximumf %5, %6 : vector<128x64xf32>
    %c0_6 = arith.constant 0 : index
    %c0_7 = arith.constant 0 : index
    %8 = vector.load %arg4[%c0_6, %c0_7] : memref<128x64xf32, #tpu.memory_space<vmem>>, vector<128x64xf32>
    tpu.vector_store %arg4[%c0_6, %c0_7], %7 {strides = array<i32>} : memref<128x64xf32, #tpu.memory_space<vmem>>, vector<128x64xf32>,
    return
  }
  func.func @transform_0(%arg0: i32) -> (i32, i32) {
    %c0_i32 = arith.constant 0 : i32
    %c0_i32_0 = arith.constant 0 : i32
    %c0_i32_1 = arith.constant 0 : i32
    return %c0_i32, %c0_i32_0 : i32, i32
  }
  func.func @transform_1(%arg0: i32) -> (i32, i32) {
    %c0_i32 = arith.constant 0 : i32
    %c0_i32_0 = arith.constant 0 : i32
    %c0_i32_1 = arith.constant 0 : i32
    return %c0_i32, %c0_i32_0 : i32, i32
  }
  func.func @transform_2(%arg0: i32) -> (i32, i32) {
    %c0_i32 = arith.constant 0 : i32
    %c0_i32_0 = arith.constant 0 : i32
    %c0_i32_1 = arith.constant 0 : i32
    return %c0_i32, %c0_i32_0 : i32, i32
  }
  func.func @transform_3(%arg0: i32) -> (i32, i32) {
    %c0_i32 = arith.constant 0 : i32
    %c0_i32_0 = arith.constant 0 : i32
    %c0_i32_1 = arith.constant 0 : i32
    return %c0_i32, %c0_i32_0 : i32, i32
  }
}

module attributes {stable_mosaic.version = 11 : i64} {
  func.func @_matmul_bias_kernel(%arg0: i32, %arg1: memref<18x256xf32, #tpu.memory_space<vmem>>, %arg2: memref<256x128xf32, #tpu.memory_space<vmem>>, %arg3: memref<1x128xf32, #tpu.memory_space<vmem>>, %arg4: memref<18x128xf32, #tpu.memory_space<vmem>>) attributes {dimension_semantics = [#tpu.dimension_semantics<parallel>], iteration_bounds = array<i64: 1>, scalar_prefetch = 0 : i64, scratch_operands = 0 : i64, tpu.core_type = #tpu.core_type<tc>, window_params = [{pipeline_mode = #tpu.pipeline_mode<synchronous>, transform_indices = @transform_0, window_bounds = array<i64: 18, 256>}, {pipeline_mode = #tpu.pipeline_mode<synchronous>, transform_indices = @transform_1, window_bounds = array<i64: 256, 128>}, {pipeline_mode = #tpu.pipeline_mode<synchronous>, transform_indices = @transform_2, window_bounds = array<i64: 1, 128>}, {pipeline_mode = #tpu.pipeline_mode<synchronous>, transform_indices = @transform_3, window_bounds = array<i64: 18, 128>}]} {
    %c0 = arith.constant 0 : index
    %c0_0 = arith.constant 0 : index
    %0 = vector.load %arg1[%c0, %c0_0] : memref<18x256xf32, #tpu.memory_space<vmem>>, vector<18x256xf32>
    %c0_1 = arith.constant 0 : index
    %c0_2 = arith.constant 0 : index
    %1 = vector.load %arg2[%c0_1, %c0_2] : memref<256x128xf32, #tpu.memory_space<vmem>>, vector<256x128xf32>
    %cst = arith.constant dense<0.000000e+00> : vector<18x128xf32>
    %2 = tpu.matmul %0, %1, %cst {dimension_numbers = #tpu.dot_dimension_numbers<[1], [0], [0], [1], [0, 0, 1, 1], [], []>} : vector<18x256xf32>, vector<256x128xf32>, vector<18x128xf32> -> vector<18x128xf32>
    %c0_3 = arith.constant 0 : index
    %c0_4 = arith.constant 0 : index
    %3 = vector.load %arg3[%c0_3, %c0_4] : memref<1x128xf32, #tpu.memory_space<vmem>>, vector<1x128xf32>
    %4 = vector.broadcast %3 : vector<1x128xf32> to vector<18x128xf32>
    %5 = arith.addf %2, %4 : vector<18x128xf32>
    %cst_5 = arith.constant 0.000000e+00 : f32
    %6 = vector.broadcast %cst_5 : f32 to vector<18x128xf32>
    %7 = arith.maximumf %5, %6 : vector<18x128xf32>
    %c0_6 = arith.constant 0 : index
    %c0_7 = arith.constant 0 : index
    %8 = vector.load %arg4[%c0_6, %c0_7] : memref<18x128xf32, #tpu.memory_space<vmem>>, vector<18x128xf32>
    tpu.vector_store %arg4[%c0_6, %c0_7], %7 {strides = array<i32>} : memref<18x128xf32, #tpu.memory_space<vmem>>, vector<18x128xf32>,
    return
  }
  func.func @transform_0(%arg0: i32) -> (i32, i32) {
    %c0_i32 = arith.constant 0 : i32
    %c0_i32_0 = arith.constant 0 : i32
    %c0_i32_1 = arith.constant 0 : i32
    return %c0_i32, %c0_i32_0 : i32, i32
  }
  func.func @transform_1(%arg0: i32) -> (i32, i32) {
    %c0_i32 = arith.constant 0 : i32
    %c0_i32_0 = arith.constant 0 : i32
    %c0_i32_1 = arith.constant 0 : i32
    return %c0_i32, %c0_i32_0 : i32, i32
  }
  func.func @transform_2(%arg0: i32) -> (i32, i32) {
    %c0_i32 = arith.constant 0 : i32
    %c0_i32_0 = arith.constant 0 : i32
    %c0_i32_1 = arith.constant 0 : i32
    return %c0_i32, %c0_i32_0 : i32, i32
  }
  func.func @transform_3(%arg0: i32) -> (i32, i32) {
    %c0_i32 = arith.constant 0 : i32
    %c0_i32_0 = arith.constant 0 : i32
    %c0_i32_1 = arith.constant 0 : i32
    return %c0_i32, %c0_i32_0 : i32, i32
  }
}

module attributes {stable_mosaic.version = 11 : i64} {
  func.func @_classifier_kernel(%arg0: i32, %arg1: memref<2x1152xf32, #tpu.memory_space<vmem>>, %arg2: memref<1152x512xbf16, #tpu.memory_space<vmem>>, %arg3: memref<1x512xf32, #tpu.memory_space<vmem>>, %arg4: memref<512x256xbf16, #tpu.memory_space<vmem>>, %arg5: memref<1x256xf32, #tpu.memory_space<vmem>>, %arg6: memref<256x128xf32, #tpu.memory_space<vmem>>, %arg7: memref<1x128xf32, #tpu.memory_space<vmem>>, %arg8: memref<2x128xf32, #tpu.memory_space<vmem>>, %arg9: memref<2x256xf32, #tpu.memory_space<vmem>>) attributes {dimension_semantics = [#tpu.dimension_semantics<arbitrary>], iteration_bounds = array<i64: 2>, scalar_prefetch = 0 : i64, scratch_operands = 1 : i64, tpu.core_type = #tpu.core_type<tc>, window_params = [{pipeline_mode = #tpu.pipeline_mode<synchronous>, transform_indices = @transform_0, window_bounds = array<i64: 2, 1152>}, {transform_indices = @transform_1, window_bounds = array<i64: 1152, 512>}, {transform_indices = @transform_2, window_bounds = array<i64: 1, 512>}, {transform_indices = @transform_3, window_bounds = array<i64: 512, 256>}, {pipeline_mode = #tpu.pipeline_mode<synchronous>, transform_indices = @transform_4, window_bounds = array<i64: 1, 256>}, {pipeline_mode = #tpu.pipeline_mode<synchronous>, transform_indices = @transform_5, window_bounds = array<i64: 256, 128>}, {pipeline_mode = #tpu.pipeline_mode<synchronous>, transform_indices = @transform_6, window_bounds = array<i64: 1, 128>}, {pipeline_mode = #tpu.pipeline_mode<synchronous>, transform_indices = @transform_7, window_bounds = array<i64: 2, 128>}]} {
    %c0_i32 = arith.constant 0 : i32
    %0 = arith.cmpi eq, %arg0, %c0_i32 : i32
    %1 = arith.extui %0 : i1 to i32
    %c0_i32_0 = arith.constant 0 : i32
    %2 = arith.cmpi ne, %1, %c0_i32_0 : i32
    scf.if %2 {
      %cst_15 = arith.constant 0.000000e+00 : f32
      %21 = vector.broadcast %cst_15 : f32 to vector<2x256xf32>
      %c0_16 = arith.constant 0 : index
      %c0_17 = arith.constant 0 : index
      %22 = vector.load %arg9[%c0_16, %c0_17] : memref<2x256xf32, #tpu.memory_space<vmem>>, vector<2x256xf32>
      tpu.vector_store %arg9[%c0_16, %c0_17], %21 {strides = array<i32>} : memref<2x256xf32, #tpu.memory_space<vmem>>, vector<2x256xf32>,
    } else {
    }
    %c0 = arith.constant 0 : index
    %c0_1 = arith.constant 0 : index
    %3 = vector.load %arg1[%c0, %c0_1] : memref<2x1152xf32, #tpu.memory_space<vmem>>, vector<2x1152xf32>
    %4 = arith.truncf %3 : vector<2x1152xf32> to vector<2x1152xbf16>
    %c0_2 = arith.constant 0 : index
    %c0_3 = arith.constant 0 : index
    %5 = vector.load %arg2[%c0_2, %c0_3] : memref<1152x512xbf16, #tpu.memory_space<vmem>>, vector<1152x512xbf16>
    %cst = arith.constant dense<0.000000e+00> : vector<2x512xf32>
    %6 = tpu.matmul %4, %5, %cst {dimension_numbers = #tpu.dot_dimension_numbers<[1], [0], [0], [1], [0, 0, 1, 1], [], []>} : vector<2x1152xbf16>, vector<1152x512xbf16>, vector<2x512xf32> -> vector<2x512xf32>
    %c0_4 = arith.constant 0 : index
    %c0_5 = arith.constant 0 : index
    %7 = vector.load %arg3[%c0_4, %c0_5] : memref<1x512xf32, #tpu.memory_space<vmem>>, vector<1x512xf32>
    %8 = vector.broadcast %7 : vector<1x512xf32> to vector<2x512xf32>
    %9 = arith.addf %6, %8 : vector<2x512xf32>
    %cst_6 = arith.constant 0.000000e+00 : f32
    %10 = vector.broadcast %cst_6 : f32 to vector<2x512xf32>
    %11 = arith.maximumf %9, %10 : vector<2x512xf32>
    %c0_7 = arith.constant 0 : index
    %c0_8 = arith.constant 0 : index
    %12 = vector.load %arg9[%c0_7, %c0_8] : memref<2x256xf32, #tpu.memory_space<vmem>>, vector<2x256xf32>
    %13 = arith.truncf %11 : vector<2x512xf32> to vector<2x512xbf16>
    %c0_9 = arith.constant 0 : index
    %c0_10 = arith.constant 0 : index
    %14 = vector.load %arg4[%c0_9, %c0_10] : memref<512x256xbf16, #tpu.memory_space<vmem>>, vector<512x256xbf16>
    %cst_11 = arith.constant dense<0.000000e+00> : vector<2x256xf32>
    %15 = tpu.matmul %13, %14, %cst_11 {dimension_numbers = #tpu.dot_dimension_numbers<[1], [0], [0], [1], [0, 0, 1, 1], [], []>} : vector<2x512xbf16>, vector<512x256xbf16>, vector<2x256xf32> -> vector<2x256xf32>
    %16 = arith.addf %12, %15 : vector<2x256xf32>
    %c0_12 = arith.constant 0 : index
    %c0_13 = arith.constant 0 : index
    %17 = vector.load %arg9[%c0_12, %c0_13] : memref<2x256xf32, #tpu.memory_space<vmem>>, vector<2x256xf32>
    tpu.vector_store %arg9[%c0_12, %c0_13], %16 {strides = array<i32>} : memref<2x256xf32, #tpu.memory_space<vmem>>, vector<2x256xf32>,
    %c1_i32 = arith.constant 1 : i32
    %18 = arith.cmpi eq, %arg0, %c1_i32 : i32
    %19 = arith.extui %18 : i1 to i32
    %c0_i32_14 = arith.constant 0 : i32
    %20 = arith.cmpi ne, %19, %c0_i32_14 : i32
    scf.if %20 {
      %c0_15 = arith.constant 0 : index
      %c0_16 = arith.constant 0 : index
      %21 = vector.load %arg9[%c0_15, %c0_16] : memref<2x256xf32, #tpu.memory_space<vmem>>, vector<2x256xf32>
      %c0_17 = arith.constant 0 : index
      %c0_18 = arith.constant 0 : index
      %22 = vector.load %arg5[%c0_17, %c0_18] : memref<1x256xf32, #tpu.memory_space<vmem>>, vector<1x256xf32>
      %23 = vector.broadcast %22 : vector<1x256xf32> to vector<2x256xf32>
      %24 = arith.addf %21, %23 : vector<2x256xf32>
      %cst_19 = arith.constant 0.000000e+00 : f32
      %25 = vector.broadcast %cst_19 : f32 to vector<2x256xf32>
      %26 = arith.maximumf %24, %25 : vector<2x256xf32>
      %c0_20 = arith.constant 0 : index
      %c0_21 = arith.constant 0 : index
      %27 = vector.load %arg6[%c0_20, %c0_21] : memref<256x128xf32, #tpu.memory_space<vmem>>, vector<256x128xf32>
      %cst_22 = arith.constant dense<0.000000e+00> : vector<2x128xf32>
      %28 = tpu.matmul %26, %27, %cst_22 {dimension_numbers = #tpu.dot_dimension_numbers<[1], [0], [0], [1], [0, 0, 1, 1], [], []>} : vector<2x256xf32>, vector<256x128xf32>, vector<2x128xf32> -> vector<2x128xf32>
      %c0_23 = arith.constant 0 : index
      %c0_24 = arith.constant 0 : index
      %29 = vector.load %arg7[%c0_23, %c0_24] : memref<1x128xf32, #tpu.memory_space<vmem>>, vector<1x128xf32>
      %30 = vector.broadcast %29 : vector<1x128xf32> to vector<2x128xf32>
      %31 = arith.addf %28, %30 : vector<2x128xf32>
      %c0_25 = arith.constant 0 : index
      %c0_26 = arith.constant 0 : index
      %32 = vector.load %arg8[%c0_25, %c0_26] : memref<2x128xf32, #tpu.memory_space<vmem>>, vector<2x128xf32>
      tpu.vector_store %arg8[%c0_25, %c0_26], %31 {strides = array<i32>} : memref<2x128xf32, #tpu.memory_space<vmem>>, vector<2x128xf32>,
    } else {
    }
    return
  }
  func.func @transform_0(%arg0: i32) -> (i32, i32) {
    %c0_i32 = arith.constant 0 : i32
    %c0_i32_0 = arith.constant 0 : i32
    %c0_i32_1 = arith.constant 0 : i32
    return %c0_i32, %c0_i32_0 : i32, i32
  }
  func.func @transform_1(%arg0: i32) -> (i32, i32) {
    %c0_i32 = arith.constant 0 : i32
    %c0_i32_0 = arith.constant 0 : i32
    return %c0_i32, %arg0 : i32, i32
  }
  func.func @transform_2(%arg0: i32) -> (i32, i32) {
    %c0_i32 = arith.constant 0 : i32
    %c0_i32_0 = arith.constant 0 : i32
    return %c0_i32, %arg0 : i32, i32
  }
  func.func @transform_3(%arg0: i32) -> (i32, i32) {
    %c0_i32 = arith.constant 0 : i32
    %c0_i32_0 = arith.constant 0 : i32
    return %arg0, %c0_i32 : i32, i32
  }
  func.func @transform_4(%arg0: i32) -> (i32, i32) {
    %c0_i32 = arith.constant 0 : i32
    %c0_i32_0 = arith.constant 0 : i32
    %c0_i32_1 = arith.constant 0 : i32
    return %c0_i32, %c0_i32_0 : i32, i32
  }
  func.func @transform_5(%arg0: i32) -> (i32, i32) {
    %c0_i32 = arith.constant 0 : i32
    %c0_i32_0 = arith.constant 0 : i32
    %c0_i32_1 = arith.constant 0 : i32
    return %c0_i32, %c0_i32_0 : i32, i32
  }
  func.func @transform_6(%arg0: i32) -> (i32, i32) {
    %c0_i32 = arith.constant 0 : i32
    %c0_i32_0 = arith.constant 0 : i32
    %c0_i32_1 = arith.constant 0 : i32
    return %c0_i32, %c0_i32_0 : i32, i32
  }
  func.func @transform_7(%arg0: i32) -> (i32, i32) {
    %c0_i32 = arith.constant 0 : i32
    %c0_i32_0 = arith.constant 0 : i32
    %c0_i32_1 = arith.constant 0 : i32
    return %c0_i32, %c0_i32_0 : i32, i32
  }
}

</mosaic_0001>

<llo_original>
// kernel: _lambda_.4
$region0: #{_lambda_.4}
  #allocation0 [shape = 'u32[]', space=smem, size = 0x4, offset = 0x4, fixed_abs, tag = 'smem constant byte address 0x4 - core index']
  #allocation1 [shape = 'u32[144,128]{1,0:T(1,128)}', space=vmem, size = 0x12000, scoped, tag = 'internal scratch']
  %s0 = inlined_call_operand.vmem [shape: f32[1458,4], index: 0, kind: input, shape index: {}]
  %s1 = inlined_call_operand.vmem [shape: f32[4,32], index: 1, kind: input, shape index: {}]
  %s2 = inlined_call_operand.vmem [shape: f32[1,32], index: 2, kind: input, shape index: {}]
  %s3 = inlined_call_operand.vmem [shape: f32[1458,32], index: 3, kind: output, shape index: {}]
  %s4 = sld [smem:[#allocation0]]
  $region22: #{_lambda_.4} parent=0
    _
  %s6 = ssub.s32 1, %s4
  %s7 = scalar_select 0, %s6, %s4
  // Predicated region
  $region2: #{_lambda_.4} parent=0 // pred_check
    _
  $region3: #{_lambda_.4} parent=0 // pred_check_branch
    %9 = sbr.rel (0) target = $region5
  $region4: #{_lambda_.4} parent=0 // pred_region
    _
  $region5: #{_lambda_.4} parent=0 // pred_fallthru
    _
  // Predicated region
  $region6: #{_lambda_.4} parent=0 // pred_check
    _
  $region7: #{_lambda_.4} parent=0 // pred_check_branch
    %11 = sbr.rel (0) target = $region9
  $region8: #{_lambda_.4} parent=0 // pred_region
    _
  $region9: #{_lambda_.4} parent=0 // pred_fallthru
    _
  // Predicated region
  $region10: #{_lambda_.4} parent=0 // pred_check
    _
  $region11: #{_lambda_.4} parent=0 // pred_check_branch
    %13 = sbr.rel (0) target = $region13
  $region12: #{_lambda_.4} parent=0 // pred_region
    _
  $region13: #{_lambda_.4} parent=0 // pred_fallthru
    _
  %v14 = vld [vmem:[%s0] sm:$0xff]
  %v15 = vld [vmem:[%s0 + $0x8] sm:$0xff]
  %v16 = vld [vmem:[%s0 + $0x10] sm:$0xff]
  %v17 = vld [vmem:[%s0 + $0x18] sm:$0xff]
  %v18 = vld [vmem:[%s0 + $0x20] sm:$0xff]
  %v19 = vld [vmem:[%s0 + $0x28] sm:$0xff]
  %v20 = vld [vmem:[%s0 + $0x30] sm:$0xff]
  %v21 = vld [vmem:[%s0 + $0x38] sm:$0xff]
  %v22 = vld [vmem:[%s0 + $0x40] sm:$0xff]
  %v23 = vld [vmem:[%s0 + $0x48] sm:$0xff]
  %v24 = vld [vmem:[%s0 + $0x50] sm:$0xff]
  %v25 = vld [vmem:[%s0 + $0x58] sm:$0xff]
  %v26 = vld [vmem:[%s0 + $0x60] sm:$0xff]
  %v27 = vld [vmem:[%s0 + $0x68] sm:$0xff]
  %v28 = vld [vmem:[%s0 + $0x70] sm:$0xff]
  %v29 = vld [vmem:[%s0 + $0x78] sm:$0xff]
  %v30 = vld [vmem:[%s0 + $0x80] sm:$0xff]
  %v31 = vld [vmem:[%s0 + $0x88] sm:$0xff]
  %v32 = vld [vmem:[%s0 + $0x90] sm:$0xff]
  %v33 = vld [vmem:[%s0 + $0x98] sm:$0xff]
  %v34 = vld [vmem:[%s0 + $0xa0] sm:$0xff]
  %v35 = vld [vmem:[%s0 + $0xa8] sm:$0xff]
  %v36 = vld [vmem:[%s0 + $0xb0] sm:$0xff]
  %v37 = vld [vmem:[%s0 + $0xb8] sm:$0xff]
  %v38 = vld [vmem:[%s0 + $0xc0] sm:$0xff]
  %v39 = vld [vmem:[%s0 + $0xc8] sm:$0xff]
  %v40 = vld [vmem:[%s0 + $0xd0] sm:$0xff]
  %v41 = vld [vmem:[%s0 + $0xd8] sm:$0xff]
  %v42 = vld [vmem:[%s0 + $0xe0] sm:$0xff]
  %v43 = vld [vmem:[%s0 + $0xe8] sm:$0xff]
  %v44 = vld [vmem:[%s0 + $0xf0] sm:$0xff]
  %v45 = vld [vmem:[%s0 + $0xf8] sm:$0xff]
  %v46 = vld [vmem:[%s0 + $0x100] sm:$0xff]
  %v47 = vld [vmem:[%s0 + $0x108] sm:$0xff]
  %v48 = vld [vmem:[%s0 + $0x110] sm:$0xff]
  %v49 = vld [vmem:[%s0 + $0x118] sm:$0xff]
  %v50 = vld [vmem:[%s0 + $0x120] sm:$0xff]
  %v51 = vld [vmem:[%s0 + $0x128] sm:$0xff]
  %v52 = vld [vmem:[%s0 + $0x130] sm:$0xff]
  %v53 = vld [vmem:[%s0 + $0x138] sm:$0xff]
  %v54 = vld [vmem:[%s0 + $0x140] sm:$0xff]
  %v55 = vld [vmem:[%s0 + $0x148] sm:$0xff]
  %v56 = vld [vmem:[%s0 + $0x150] sm:$0xff]
  %v57 = vld [vmem:[%s0 + $0x158] sm:$0xff]
  %v58 = vld [vmem:[%s0 + $0x160] sm:$0xff]
  %v59 = vld [vmem:[%s0 + $0x168] sm:$0xff]
  %v60 = vld [vmem:[%s0 + $0x170] sm:$0xff]
  %v61 = vld [vmem:[%s0 + $0x178] sm:$0xff]
  %v62 = vld [vmem:[%s0 + $0x180] sm:$0xff]
  %v63 = vld [vmem:[%s0 + $0x188] sm:$0xff]
  %v64 = vld [vmem:[%s0 + $0x190] sm:$0xff]
  %v65 = vld [vmem:[%s0 + $0x198] sm:$0xff]
  %v66 = vld [vmem:[%s0 + $0x1a0] sm:$0xff]
  %v67 = vld [vmem:[%s0 + $0x1a8] sm:$0xff]
  %v68 = vld [vmem:[%s0 + $0x1b0] sm:$0xff]
  %v69 = vld [vmem:[%s0 + $0x1b8] sm:$0xff]
  %v70 = vld [vmem:[%s0 + $0x1c0] sm:$0xff]
  %v71 = vld [vmem:[%s0 + $0x1c8] sm:$0xff]
  %v72 = vld [vmem:[%s0 + $0x1d0] sm:$0xff]
  %v73 = vld [vmem:[%s0 + $0x1d8] sm:$0xff]
  %v74 = vld [vmem:[%s0 + $0x1e0] sm:$0xff]
  %v75 = vld [vmem:[%s0 + $0x1e8] sm:$0xff]
  %v76 = vld [vmem:[%s0 + $0x1f0] sm:$0xff]
  %v77 = vld [vmem:[%s0 + $0x1f8] sm:$0xff]
  %v78 = vld [vmem:[%s0 + $0x200] sm:$0xff]
  %v79 = vld [vmem:[%s0 + $0x208] sm:$0xff]
  %v80 = vld [vmem:[%s0 + $0x210] sm:$0xff]
  %v81 = vld [vmem:[%s0 + $0x218] sm:$0xff]
  %v82 = vld [vmem:[%s0 + $0x220] sm:$0xff]
  %v83 = vld [vmem:[%s0 + $0x228] sm:$0xff]
  %v84 = vld [vmem:[%s0 + $0x230] sm:$0xff]
  %v85 = vld [vmem:[%s0 + $0x238] sm:$0xff]
  %v86 = vld [vmem:[%s0 + $0x240] sm:$0xff]
  %v87 = vld [vmem:[%s0 + $0x248] sm:$0xff]
  %v88 = vld [vmem:[%s0 + $0x250] sm:$0xff]
  %v89 = vld [vmem:[%s0 + $0x258] sm:$0xff]
  %v90 = vld [vmem:[%s0 + $0x260] sm:$0xff]
  %v91 = vld [vmem:[%s0 + $0x268] sm:$0xff]
  %v92 = vld [vmem:[%s0 + $0x270] sm:$0xff]
  %v93 = vld [vmem:[%s0 + $0x278] sm:$0xff]
  %v94 = vld [vmem:[%s0 + $0x280] sm:$0xff]
  %v95 = vld [vmem:[%s0 + $0x288] sm:$0xff]
  %v96 = vld [vmem:[%s0 + $0x290] sm:$0xff]
  %v97 = vld [vmem:[%s0 + $0x298] sm:$0xff]
  %v98 = vld [vmem:[%s0 + $0x2a0] sm:$0xff]
  %v99 = vld [vmem:[%s0 + $0x2a8] sm:$0xff]
  %v100 = vld [vmem:[%s0 + $0x2b0] sm:$0xff]
  %v101 = vld [vmem:[%s0 + $0x2b8] sm:$0xff]
  %v102 = vld [vmem:[%s0 + $0x2c0] sm:$0xff]
  %v103 = vld [vmem:[%s0 + $0x2c8] sm:$0xff]
  %v104 = vld [vmem:[%s0 + $0x2d0] sm:$0xff]
  %v105 = vld [vmem:[%s0 + $0x2d8] sm:$0xff]
  %v106 = vld [vmem:[%s0 + $0x2e0] sm:$0xff]
  %v107 = vld [vmem:[%s0 + $0x2e8] sm:$0xff]
  %v108 = vld [vmem:[%s0 + $0x2f0] sm:$0xff]
  %v109 = vld [vmem:[%s0 + $0x2f8] sm:$0xff]
  %v110 = vld [vmem:[%s0 + $0x300] sm:$0xff]
  %v111 = vld [vmem:[%s0 + $0x308] sm:$0xff]
  %v112 = vld [vmem:[%s0 + $0x310] sm:$0xff]
  %v113 = vld [vmem:[%s0 + $0x318] sm:$0xff]
  %v114 = vld [vmem:[%s0 + $0x320] sm:$0xff]
  %v115 = vld [vmem:[%s0 + $0x328] sm:$0xff]
  %v116 = vld [vmem:[%s0 + $0x330] sm:$0xff]
  %v117 = vld [vmem:[%s0 + $0x338] sm:$0xff]
  %v118 = vld [vmem:[%s0 + $0x340] sm:$0xff]
  %v119 = vld [vmem:[%s0 + $0x348] sm:$0xff]
  %v120 = vld [vmem:[%s0 + $0x350] sm:$0xff]
  %v121 = vld [vmem:[%s0 + $0x358] sm:$0xff]
  %v122 = vld [vmem:[%s0 + $0x360] sm:$0xff]
  %v123 = vld [vmem:[%s0 + $0x368] sm:$0xff]
  %v124 = vld [vmem:[%s0 + $0x370] sm:$0xff]
  %v125 = vld [vmem:[%s0 + $0x378] sm:$0xff]
  %v126 = vld [vmem:[%s0 + $0x380] sm:$0xff]
  %v127 = vld [vmem:[%s0 + $0x388] sm:$0xff]
  %v128 = vld [vmem:[%s0 + $0x390] sm:$0xff]
  %v129 = vld [vmem:[%s0 + $0x398] sm:$0xff]
  %v130 = vld [vmem:[%s0 + $0x3a0] sm:$0xff]
  %v131 = vld [vmem:[%s0 + $0x3a8] sm:$0xff]
  %v132 = vld [vmem:[%s0 + $0x3b0] sm:$0xff]
  %v133 = vld [vmem:[%s0 + $0x3b8] sm:$0xff]
  %v134 = vld [vmem:[%s0 + $0x3c0] sm:$0xff]
  %v135 = vld [vmem:[%s0 + $0x3c8] sm:$0xff]
  %v136 = vld [vmem:[%s0 + $0x3d0] sm:$0xff]
  %v137 = vld [vmem:[%s0 + $0x3d8] sm:$0xff]
  %v138 = vld [vmem:[%s0 + $0x3e0] sm:$0xff]
  %v139 = vld [vmem:[%s0 + $0x3e8] sm:$0xff]
  %v140 = vld [vmem:[%s0 + $0x3f0] sm:$0xff]
  %v141 = vld [vmem:[%s0 + $0x3f8] sm:$0xff]
  %v142 = vld [vmem:[%s0 + $0x400] sm:$0xff]
  %v143 = vld [vmem:[%s0 + $0x408] sm:$0xff]
  %v144 = vld [vmem:[%s0 + $0x410] sm:$0xff]
  %v145 = vld [vmem:[%s0 + $0x418] sm:$0xff]
  %v146 = vld [vmem:[%s0 + $0x420] sm:$0xff]
  %v147 = vld [vmem:[%s0 + $0x428] sm:$0xff]
  %v148 = vld [vmem:[%s0 + $0x430] sm:$0xff]
  %v149 = vld [vmem:[%s0 + $0x438] sm:$0xff]
  %v150 = vld [vmem:[%s0 + $0x440] sm:$0xff]
  %v151 = vld [vmem:[%s0 + $0x448] sm:$0xff]
  %v152 = vld [vmem:[%s0 + $0x450] sm:$0xff]
  %v153 = vld [vmem:[%s0 + $0x458] sm:$0xff]
  %v154 = vld [vmem:[%s0 + $0x460] sm:$0xff]
  %v155 = vld [vmem:[%s0 + $0x468] sm:$0xff]
  %v156 = vld [vmem:[%s0 + $0x470] sm:$0xff]
  %v157 = vld [vmem:[%s0 + $0x478] sm:$0xff]
  %v158 = vld [vmem:[%s0 + $0x480] sm:$0xff]
  %v159 = vld [vmem:[%s0 + $0x488] sm:$0xff]
  %v160 = vld [vmem:[%s0 + $0x490] sm:$0xff]
  %v161 = vld [vmem:[%s0 + $0x498] sm:$0xff]
  %v162 = vld [vmem:[%s0 + $0x4a0] sm:$0xff]
  %v163 = vld [vmem:[%s0 + $0x4a8] sm:$0xff]
  %v164 = vld [vmem:[%s0 + $0x4b0] sm:$0xff]
  %v165 = vld [vmem:[%s0 + $0x4b8] sm:$0xff]
  %v166 = vld [vmem:[%s0 + $0x4c0] sm:$0xff]
  %v167 = vld [vmem:[%s0 + $0x4c8] sm:$0xff]
  %v168 = vld [vmem:[%s0 + $0x4d0] sm:$0xff]
  %v169 = vld [vmem:[%s0 + $0x4d8] sm:$0xff]
  %v170 = vld [vmem:[%s0 + $0x4e0] sm:$0xff]
  %v171 = vld [vmem:[%s0 + $0x4e8] sm:$0xff]
  %v172 = vld [vmem:[%s0 + $0x4f0] sm:$0xff]
  %v173 = vld [vmem:[%s0 + $0x4f8] sm:$0xff]
  %v174 = vld [vmem:[%s0 + $0x500] sm:$0xff]
  %v175 = vld [vmem:[%s0 + $0x508] sm:$0xff]
  %v176 = vld [vmem:[%s0 + $0x510] sm:$0xff]
  %v177 = vld [vmem:[%s0 + $0x518] sm:$0xff]
  %v178 = vld [vmem:[%s0 + $0x520] sm:$0xff]
  %v179 = vld [vmem:[%s0 + $0x528] sm:$0xff]
  %v180 = vld [vmem:[%s0 + $0x530] sm:$0xff]
  %v181 = vld [vmem:[%s0 + $0x538] sm:$0xff]
  %v182 = vld [vmem:[%s0 + $0x540] sm:$0xff]
  %v183 = vld [vmem:[%s0 + $0x548] sm:$0xff]
  %v184 = vld [vmem:[%s0 + $0x550] sm:$0xff]
  %v185 = vld [vmem:[%s0 + $0x558] sm:$0xff]
  %v186 = vld [vmem:[%s0 + $0x560] sm:$0xff]
  %v187 = vld [vmem:[%s0 + $0x568] sm:$0xff]
  %v188 = vld [vmem:[%s0 + $0x570] sm:$0xff]
  %v189 = vld [vmem:[%s0 + $0x578] sm:$0xff]
  %v190 = vld [vmem:[%s0 + $0x580] sm:$0xff]
  %v191 = vld [vmem:[%s0 + $0x588] sm:$0xff]
  %v192 = vld [vmem:[%s0 + $0x590] sm:$0xff]
  %v193 = vld [vmem:[%s0 + $0x598] sm:$0xff]
  %v194 = vld [vmem:[%s0 + $0x5a0] sm:$0xff]
  %v195 = vld [vmem:[%s0 + $0x5a8] sm:$0xff]
  %v196 = vld [vmem:[%s0 + $0x5b0] sm:$0x3]
  %v197 = vld [vmem:[%s1] sm:$0xf]
  %v198 = vld [vmem:[%s2] sm:$0x1]
  %v200 = vlaneseq
  %v201 = vshrl.u32 %v200, 7
  %v202 = vsub.s32 0, %v201
  %v203 = vrot.slane %v198, %v202
  %vm205 = vcmask 31744
  %v207 = vsel %vm205, %v14, 0
  %v210 = vsel %vm205, %v15, 0
  %v213 = vsel %vm205, %v16, 0
  %v216 = vsel %vm205, %v17, 0
  %v219 = vsel %vm205, %v18, 0
  %v222 = vsel %vm205, %v19, 0
  %v225 = vsel %vm205, %v20, 0
  %v228 = vsel %vm205, %v21, 0
  %v231 = vsel %vm205, %v22, 0
  %v234 = vsel %vm205, %v23, 0
  %v237 = vsel %vm205, %v24, 0
  %v240 = vsel %vm205, %v25, 0
  %v243 = vsel %vm205, %v26, 0
  %v246 = vsel %vm205, %v27, 0
  %v249 = vsel %vm205, %v28, 0
  %v252 = vsel %vm205, %v29, 0
  %v255 = vsel %vm205, %v30, 0
  %v258 = vsel %vm205, %v31, 0
  %v261 = vsel %vm205, %v32, 0
  %v264 = vsel %vm205, %v33, 0
  %v267 = vsel %vm205, %v34, 0
  %v270 = vsel %vm205, %v35, 0
  %v273 = vsel %vm205, %v36, 0
  %v276 = vsel %vm205, %v37, 0
  %v279 = vsel %vm205, %v38, 0
  %v282 = vsel %vm205, %v39, 0
  %v285 = vsel %vm205, %v40, 0
  %v288 = vsel %vm205, %v41, 0
  %v291 = vsel %vm205, %v42, 0
  %v294 = vsel %vm205, %v43, 0
  %v297 = vsel %vm205, %v44, 0
  %v300 = vsel %vm205, %v45, 0
  %v303 = vsel %vm205, %v46, 0
  %v306 = vsel %vm205, %v47, 0
  %v309 = vsel %vm205, %v48, 0
  %v312 = vsel %vm205, %v49, 0
  %v315 = vsel %vm205, %v50, 0
  %v318 = vsel %vm205, %v51, 0
  %v321 = vsel %vm205, %v52, 0
  %v324 = vsel %vm205, %v53, 0
  %v327 = vsel %vm205, %v54, 0
  %v330 = vsel %vm205, %v55, 0
  %v333 = vsel %vm205, %v56, 0
  %v336 = vsel %vm205, %v57, 0
  %v339 = vsel %vm205, %v58, 0
  %v342 = vsel %vm205, %v59, 0
  %v345 = vsel %vm205, %v60, 0
  %v348 = vsel %vm205, %v61, 0
  %v351 = vsel %vm205, %v62, 0
  %v354 = vsel %vm205, %v63, 0
  %v357 = vsel %vm205, %v64, 0
  %v360 = vsel %vm205, %v65, 0
  %v363 = vsel %vm205, %v66, 0
  %v366 = vsel %vm205, %v67, 0
  %v369 = vsel %vm205, %v68, 0
  %v372 = vsel %vm205, %v69, 0
  %v375 = vsel %vm205, %v70, 0
  %v378 = vsel %vm205, %v71, 0
  %v381 = vsel %vm205, %v72, 0
  %v384 = vsel %vm205, %v73, 0
  %v387 = vsel %vm205, %v74, 0
  %v390 = vsel %vm205, %v75, 0
  %v393 = vsel %vm205, %v76, 0
  %v396 = vsel %vm205, %v77, 0
  %v399 = vsel %vm205, %v78, 0
  %v402 = vsel %vm205, %v79, 0
  %v405 = vsel %vm205, %v80, 0
  %v408 = vsel %vm205, %v81, 0
  %v411 = vsel %vm205, %v82, 0
  %v414 = vsel %vm205, %v83, 0
  %v417 = vsel %vm205, %v84, 0
  %v420 = vsel %vm205, %v85, 0
  %v423 = vsel %vm205, %v86, 0
  %v426 = vsel %vm205, %v87, 0
  %v429 = vsel %vm205, %v88, 0
  %v432 = vsel %vm205, %v89, 0
  %v435 = vsel %vm205, %v90, 0
  %v438 = vsel %vm205, %v91, 0
  %v441 = vsel %vm205, %v92, 0
  %v444 = vsel %vm205, %v93, 0
  %v447 = vsel %vm205, %v94, 0
  %v450 = vsel %vm205, %v95, 0
  %v453 = vsel %vm205, %v96, 0
  %v456 = vsel %vm205, %v97, 0
  %v459 = vsel %vm205, %v98, 0
  %v462 = vsel %vm205, %v99, 0
  %v465 = vsel %vm205, %v100, 0
  %v468 = vsel %vm205, %v101, 0
  %v471 = vsel %vm205, %v102, 0
  %v474 = vsel %vm205, %v103, 0
  %v477 = vsel %vm205, %v104, 0
  %v480 = vsel %vm205, %v105, 0
  %v483 = vsel %vm205, %v106, 0
  %v486 = vsel %vm205, %v107, 0
  %v489 = vsel %vm205, %v108, 0
  %v492 = vsel %vm205, %v109, 0
  %v495 = vsel %vm205, %v110, 0
  %v498 = vsel %vm205, %v111, 0
  %v501 = vsel %vm205, %v112, 0
  %v504 = vsel %vm205, %v113, 0
  %v507 = vsel %vm205, %v114, 0
  %v510 = vsel %vm205, %v115, 0
  %v513 = vsel %vm205, %v116, 0
  %v516 = vsel %vm205, %v117, 0
  %v519 = vsel %vm205, %v118, 0
  %v522 = vsel %vm205, %v119, 0
  %v525 = vsel %vm205, %v120, 0
  %v528 = vsel %vm205, %v121, 0
  %v531 = vsel %vm205, %v122, 0
  %v534 = vsel %vm205, %v123, 0
  %v537 = vsel %vm205, %v124, 0
  %v540 = vsel %vm205, %v125, 0
  %v543 = vsel %vm205, %v126, 0
  %v546 = vsel %vm205, %v127, 0
  %v549 = vsel %vm205, %v128, 0
  %v552 = vsel %vm205, %v129, 0
  %v555 = vsel %vm205, %v130, 0
  %v558 = vsel %vm205, %v131, 0
  %v561 = vsel %vm205, %v132, 0
  %v564 = vsel %vm205, %v133, 0
  %v567 = vsel %vm205, %v134, 0
  %v570 = vsel %vm205, %v135, 0
  %v573 = vsel %vm205, %v136, 0
  %v576 = vsel %vm205, %v137, 0
  %v579 = vsel %vm205, %v138, 0
  %v582 = vsel %vm205, %v139, 0
  %v585 = vsel %vm205, %v140, 0
  %v588 = vsel %vm205, %v141, 0
  %v591 = vsel %vm205, %v142, 0
  %v594 = vsel %vm205, %v143, 0
  %v597 = vsel %vm205, %v144, 0
  %v600 = vsel %vm205, %v145, 0
  %v603 = vsel %vm205, %v146, 0
  %v606 = vsel %vm205, %v147, 0
  %v609 = vsel %vm205, %v148, 0
  %v612 = vsel %vm205, %v149, 0
  %v615 = vsel %vm205, %v150, 0
  %v618 = vsel %vm205, %v151, 0
  %v621 = vsel %vm205, %v152, 0
  %v624 = vsel %vm205, %v153, 0
  %v627 = vsel %vm205, %v154, 0
  %v630 = vsel %vm205, %v155, 0
  %v633 = vsel %vm205, %v156, 0
  %v636 = vsel %vm205, %v157, 0
  %v639 = vsel %vm205, %v158, 0
  %v642 = vsel %vm205, %v159, 0
  %v645 = vsel %vm205, %v160, 0
  %v648 = vsel %vm205, %v161, 0
  %v651 = vsel %vm205, %v162, 0
  %v654 = vsel %vm205, %v163, 0
  %v657 = vsel %vm205, %v164, 0
  %v660 = vsel %vm205, %v165, 0
  %v663 = vsel %vm205, %v166, 0
  %v666 = vsel %vm205, %v167, 0
  %v669 = vsel %vm205, %v168, 0
  %v672 = vsel %vm205, %v169, 0
  %v675 = vsel %vm205, %v170, 0
  %v678 = vsel %vm205, %v171, 0
  %v681 = vsel %vm205, %v172, 0
  %v684 = vsel %vm205, %v173, 0
  %v687 = vsel %vm205, %v174, 0
  %v690 = vsel %vm205, %v175, 0
  %v693 = vsel %vm205, %v176, 0
  %v696 = vsel %vm205, %v177, 0
  %v699 = vsel %vm205, %v178, 0
  %v702 = vsel %vm205, %v179, 0
  %v705 = vsel %vm205, %v180, 0
  %v708 = vsel %vm205, %v181, 0
  %v711 = vsel %vm205, %v182, 0
  %v714 = vsel %vm205, %v183, 0
  %v717 = vsel %vm205, %v184, 0
  %v720 = vsel %vm205, %v185, 0
  %v723 = vsel %vm205, %v186, 0
  %v726 = vsel %vm205, %v187, 0
  %v729 = vsel %vm205, %v188, 0
  %v732 = vsel %vm205, %v189, 0
  %v735 = vsel %vm205, %v190, 0
  %v738 = vsel %vm205, %v191, 0
  %v741 = vsel %vm205, %v192, 0
  %v744 = vsel %vm205, %v193, 0
  %v747 = vsel %vm205, %v194, 0
  %v750 = vsel %vm205, %v195, 0
  %v753 = vsel %vm205, %v196, 0
  %vm755 = vcmask 1043456
  %v757 = vsel %vm755, %v197, 0
  %759 = vmatprep.subr.mxu0 0.0
  %760 = vmatpush1.msra.mxu0 %v757
  %761 = vmatprep.subr.mxu0 0.0
  %762 = vmatpush1.msra.mxu0 0.0
  %763 = vmatprep.subr.mxu0 0.0
  %764 = vmatpush1.msra.mxu0 0.0
  %765 = vmatprep.subr.mxu0 0.0
  %766 = vmatpush1.msra.mxu0 0.0
  %767 = vmatprep.subr.mxu0 0.0
  %768 = vmatpush1.msra.mxu0 0.0
  %769 = vmatprep.subr.mxu0 0.0
  %770 = vmatpush1.msra.mxu0 0.0
  %771 = vmatprep.subr.mxu0 0.0
  %772 = vmatpush1.msra.mxu0 0.0
  %773 = vmatprep.subr.mxu0 0.0
  %774 = vmatpush1.msra.mxu0 0.0
  %775 = vmatprep.subr.mxu0 0.0
  %776 = vmatpush1.msra.mxu0 0.0
  %777 = vmatprep.subr.mxu0 0.0
  %778 = vmatpush1.msra.mxu0 0.0
  %779 = vmatprep.subr.mxu0 0.0
  %780 = vmatpush1.msra.mxu0 0.0
  %781 = vmatprep.subr.mxu0 0.0
  %782 = vmatpush1.msra.mxu0 0.0
  %783 = vmatprep.subr.mxu0 0.0
  %784 = vmatpush1.msra.mxu0 0.0
  %785 = vmatprep.subr.mxu0 0.0
  %786 = vmatpush1.msra.mxu0 0.0
  %787 = vmatprep.subr.mxu0 0.0
  %788 = vmatpush1.msra.mxu0 0.0
  %789 = vmatprep.subr.mxu0 0.0
  %790 = vmatpush1.msra.mxu0 0.0
  %791 = vmatprep.subr.mxu0 0.0
  %792 = vmatpush1.msra.mxu0 0.0
  %793 = vmatprep.subr.mxu0 0.0
  %794 = vmatpush1.msra.mxu0 0.0
  %795 = vmatprep.subr.mxu0 0.0
  %796 = vmatpush1.msra.mxu0 0.0
  %797 = vmatprep.subr.mxu0 0.0
  %798 = vmatpush1.msra.mxu0 0.0
  %799 = vmatprep.subr.mxu0 0.0
  %800 = vmatpush1.msra.mxu0 0.0
  %801 = vmatprep.subr.mxu0 0.0
  %802 = vmatpush1.msra.mxu0 0.0
  %803 = vmatprep.subr.mxu0 0.0
  %804 = vmatpush1.msra.mxu0 0.0
  %805 = vmatprep.subr.mxu0 0.0
  %806 = vmatpush1.msra.mxu0 0.0
  %807 = vmatprep.subr.mxu0 0.0
  %808 = vmatpush1.msra.mxu0 0.0
  %809 = vmatprep.subr.mxu0 0.0
  %810 = vmatpush1.msra.mxu0 0.0
  %811 = vmatprep.subr.mxu0 0.0
  %812 = vmatpush1.msra.mxu0 0.0
  %813 = vmatprep.subr.mxu0 0.0
  %814 = vmatpush1.msra.mxu0 0.0
  %815 = vmatprep.subr.mxu0 0.0
  %816 = vmatpush1.msra.mxu0 0.0
  %817 = vmatprep.subr.mxu0 0.0
  %818 = vmatpush1.msra.mxu0 0.0
  %819 = vmatprep.subr.mxu0 0.0
  %820 = vmatpush1.msra.mxu0 0.0
  %821 = vmatprep.subr.mxu0 0.0
  %822 = vmatpush1.msra.mxu0 0.0
  %823 = vmatprep.mubr.f32.mxu0 0.0
  %824 = vmatmul.mubr.f32.gmra.mrb[0].mxu0 %v207
  %v825 = vpop.f32.mrb[0].mxu0
  %v826 = vadd.f32 %v203, %v825
  %v827 = vpop.f32.mrb[0].mxu0
  %828 = vmatprep.mubr.f32.mxu0 0.0
  %829 = vmatmul.mubr.f32.gmra.mrb[0].mxu0 %v210
  %v830 = vpop.f32.mrb[0].mxu0
  %v831 = vadd.f32 %v203, %v830
  %v832 = vpop.f32.mrb[0].mxu0
  %833 = vmatprep.mubr.f32.mxu0 0.0
  %834 = vmatmul.mubr.f32.gmra.mrb[0].mxu0 %v213
  %v835 = vpop.f32.mrb[0].mxu0
  %v836 = vadd.f32 %v203, %v835
  %v837 = vpop.f32.mrb[0].mxu0
  %838 = vmatprep.mubr.f32.mxu0 0.0
  %839 = vmatmul.mubr.f32.gmra.mrb[0].mxu0 %v216
  %v840 = vpop.f32.mrb[0].mxu0
  %v841 = vadd.f32 %v203, %v840
  %v842 = vpop.f32.mrb[0].mxu0
  %843 = vmatprep.mubr.f32.mxu0 0.0
  %844 = vmatmul.mubr.f32.gmra.mrb[0].mxu0 %v219
  %v845 = vpop.f32.mrb[0].mxu0
  %v846 = vadd.f32 %v203, %v845
  %v847 = vpop.f32.mrb[0].mxu0
  %848 = vmatprep.mubr.f32.mxu0 0.0
  %849 = vmatmul.mubr.f32.gmra.mrb[0].mxu0 %v222
  %v850 = vpop.f32.mrb[0].mxu0
  %v851 = vadd.f32 %v203, %v850
  %v852 = vpop.f32.mrb[0].mxu0
  %853 = vmatprep.mubr.f32.mxu0 0.0
  %854 = vmatmul.mubr.f32.gmra.mrb[0].mxu0 %v225
  %v855 = vpop.f32.mrb[0].mxu0
  %v856 = vadd.f32 %v203, %v855
  %v857 = vpop.f32.mrb[0].mxu0
  %858 = vmatprep.mubr.f32.mxu0 0.0
  %859 = vmatmul.mubr.f32.gmra.mrb[0].mxu0 %v228
  %v860 = vpop.f32.mrb[0].mxu0
  %v861 = vadd.f32 %v203, %v860
  %v862 = vpop.f32.mrb[0].mxu0
  %863 = vmatprep.mubr.f32.mxu0 0.0
  %864 = vmatmul.mubr.f32.gmra.mrb[0].mxu0 %v231
  %v865 = vpop.f32.mrb[0].mxu0
  %v866 = vadd.f32 %v203, %v865
  %v867 = vpop.f32.mrb[0].mxu0
  %868 = vmatprep.mubr.f32.mxu0 0.0
  %869 = vmatmul.mubr.f32.gmra.mrb[0].mxu0 %v234
  %v870 = vpop.f32.mrb[0].mxu0
  %v871 = vadd.f32 %v203, %v870
  %v872 = vpop.f32.mrb[0].mxu0
  %873 = vmatprep.mubr.f32.mxu0 0.0
  %874 = vmatmul.mubr.f32.gmra.mrb[0].mxu0 %v237
  %v875 = vpop.f32.mrb[0].mxu0
  %v876 = vadd.f32 %v203, %v875
  %v877 = vpop.f32.mrb[0].mxu0
  %878 = vmatprep.mubr.f32.mxu0 0.0
  %879 = vmatmul.mubr.f32.gmra.mrb[0].mxu0 %v240
  %v880 = vpop.f32.mrb[0].mxu0
  %v881 = vadd.f32 %v203, %v880
  %v882 = vpop.f32.mrb[0].mxu0
  %883 = vmatprep.mubr.f32.mxu0 0.0
  %884 = vmatmul.mubr.f32.gmra.mrb[0].mxu0 %v243
  %v885 = vpop.f32.mrb[0].mxu0
  %v886 = vadd.f32 %v203, %v885
  %v887 = vpop.f32.mrb[0].mxu0
  %888 = vmatprep.mubr.f32.mxu0 0.0
  %889 = vmatmul.mubr.f32.gmra.mrb[0].mxu0 %v246
  %v890 = vpop.f32.mrb[0].mxu0
  %v891 = vadd.f32 %v203, %v890
  %v892 = vpop.f32.mrb[0].mxu0
  %893 = vmatprep.mubr.f32.mxu0 0.0
  %894 = vmatmul.mubr.f32.gmra.mrb[0].mxu0 %v249
  %v895 = vpop.f32.mrb[0].mxu0
  %v896 = vadd.f32 %v203, %v895
  %v897 = vpop.f32.mrb[0].mxu0
  %898 = vmatprep.mubr.f32.mxu0 0.0
  %899 = vmatmul.mubr.f32.gmra.mrb[0].mxu0 %v252
  %v900 = vpop.f32.mrb[0].mxu0
  %v901 = vadd.f32 %v203, %v900
  %v902 = vpop.f32.mrb[0].mxu0
  %903 = vmatprep.mubr.f32.mxu0 0.0
  %904 = vmatmul.mubr.f32.gmra.mrb[0].mxu0 %v255
  %v905 = vpop.f32.mrb[0].mxu0
  %v906 = vadd.f32 %v203, %v905
  %v907 = vpop.f32.mrb[0].mxu0
  %908 = vmatprep.mubr.f32.mxu0 0.0
  %909 = vmatmul.mubr.f32.gmra.mrb[0].mxu0 %v258
  %v910 = vpop.f32.mrb[0].mxu0
  %v911 = vadd.f32 %v203, %v910
  %v912 = vpop.f32.mrb[0].mxu0
  %913 = vmatprep.mubr.f32.mxu0 0.0
  %914 = vmatmul.mubr.f32.gmra.mrb[0].mxu0 %v261
  %v915 = vpop.f32.mrb[0].mxu0
  %v916 = vadd.f32 %v203, %v915
  %v917 = vpop.f32.mrb[0].mxu0
  %918 = vmatprep.mubr.f32.mxu0 0.0
  %919 = vmatmul.mubr.f32.gmra.mrb[0].mxu0 %v264
  %v920 = vpop.f32.mrb[0].mxu0
  %v921 = vadd.f32 %v203, %v920
  %v922 = vpop.f32.mrb[0].mxu0
  %923 = vmatprep.mubr.f32.mxu0 0.0
  %924 = vmatmul.mubr.f32.gmra.mrb[0].mxu0 %v267
  %v925 = vpop.f32.mrb[0].mxu0
  %v926 = vadd.f32 %v203, %v925
  %v927 = vpop.f32.mrb[0].mxu0
  %928 = vmatprep.mubr.f32.mxu0 0.0
  %929 = vmatmul.mubr.f32.gmra.mrb[0].mxu0 %v270
  %v930 = vpop.f32.mrb[0].mxu0
  %v931 = vadd.f32 %v203, %v930
  %v932 = vpop.f32.mrb[0].mxu0
  %933 = vmatprep.mubr.f32.mxu0 0.0
  %934 = vmatmul.mubr.f32.gmra.mrb[0].mxu0 %v273
  %v935 = vpop.f32.mrb[0].mxu0
  %v936 = vadd.f32 %v203, %v935
  %v937 = vpop.f32.mrb[0].mxu0
  %938 = vmatprep.mubr.f32.mxu0 0.0
  %939 = vmatmul.mubr.f32.gmra.mrb[0].mxu0 %v276
  %v940 = vpop.f32.mrb[0].mxu0
  %v941 = vadd.f32 %v203, %v940
  %v942 = vpop.f32.mrb[0].mxu0
  %943 = vmatprep.mubr.f32.mxu0 0.0
  %944 = vmatmul.mubr.f32.gmra.mrb[0].mxu0 %v279
  %v945 = vpop.f32.mrb[0].mxu0
  %v946 = vadd.f32 %v203, %v945
  %v947 = vpop.f32.mrb[0].mxu0
  %948 = vmatprep.mubr.f32.mxu0 0.0
  %949 = vmatmul.mubr.f32.gmra.mrb[0].mxu0 %v282
  %v950 = vpop.f32.mrb[0].mxu0
  %v951 = vadd.f32 %v203, %v950
  %v952 = vpop.f32.mrb[0].mxu0
  %953 = vmatprep.mubr.f32.mxu0 0.0
  %954 = vmatmul.mubr.f32.gmra.mrb[0].mxu0 %v285
  %v955 = vpop.f32.mrb[0].mxu0
  %v956 = vadd.f32 %v203, %v955
  %v957 = vpop.f32.mrb[0].mxu0
  %958 = vmatprep.mubr.f32.mxu0 0.0
  %959 = vmatmul.mubr.f32.gmra.mrb[0].mxu0 %v288
  %v960 = vpop.f32.mrb[0].mxu0
  %v961 = vadd.f32 %v203, %v960
  %v962 = vpop.f32.mrb[0].mxu0
  %963 = vmatprep.mubr.f32.mxu0 0.0
  %964 = vmatmul.mubr.f32.gmra.mrb[0].mxu0 %v291
  %v965 = vpop.f32.mrb[0].mxu0
  %v966 = vadd.f32 %v203, %v965
  %v967 = vpop.f32.mrb[0].mxu0
  %968 = vmatprep.mubr.f32.mxu0 0.0
  %969 = vmatmul.mubr.f32.gmra.mrb[0].mxu0 %v294
  %v970 = vpop.f32.mrb[0].mxu0
  %v971 = vadd.f32 %v203, %v970
  %v972 = vpop.f32.mrb[0].mxu0
  %973 = vmatprep.mubr.f32.mxu0 0.0
  %974 = vmatmul.mubr.f32.gmra.mrb[0].mxu0 %v297
  %v975 = vpop.f32.mrb[0].mxu0
  %v976 = vadd.f32 %v203, %v975
  %v977 = vpop.f32.mrb[0].mxu0
  %978 = vmatprep.mubr.f32.mxu0 0.0
  %979 = vmatmul.mubr.f32.gmra.mrb[0].mxu0 %v300
  %v980 = vpop.f32.mrb[0].mxu0
  %v981 = vadd.f32 %v203, %v980
  %v982 = vpop.f32.mrb[0].mxu0
  %983 = vmatprep.mubr.f32.mxu0 0.0
  %984 = vmatmul.mubr.f32.gmra.mrb[0].mxu0 %v303
  %v985 = vpop.f32.mrb[0].mxu0
  %v986 = vadd.f32 %v203, %v985
  %v987 = vpop.f32.mrb[0].mxu0
  %988 = vmatprep.mubr.f32.mxu0 0.0
  %989 = vmatmul.mubr.f32.gmra.mrb[0].mxu0 %v306
  %v990 = vpop.f32.mrb[0].mxu0
  %v991 = vadd.f32 %v203, %v990
  %v992 = vpop.f32.mrb[0].mxu0
  %993 = vmatprep.mubr.f32.mxu0 0.0
  %994 = vmatmul.mubr.f32.gmra.mrb[0].mxu0 %v309
  %v995 = vpop.f32.mrb[0].mxu0
  %v996 = vadd.f32 %v203, %v995
  %v997 = vpop.f32.mrb[0].mxu0
  %998 = vmatprep.mubr.f32.mxu0 0.0
  %999 = vmatmul.mubr.f32.gmra.mrb[0].mxu0 %v312
  %v1000 = vpop.f32.mrb[0].mxu0
  %v1001 = vadd.f32 %v203, %v1000
  %v1002 = vpop.f32.mrb[0].mxu0
  %1003 = vmatprep.mubr.f32.mxu0 0.0
  %1004 = vmatmul.mubr.f32.gmra.mrb[0].mxu0 %v315
  %v1005 = vpop.f32.mrb[0].mxu0
  %v1006 = vadd.f32 %v203, %v1005
  %v1007 = vpop.f32.mrb[0].mxu0
  %1008 = vmatprep.mubr.f32.mxu0 0.0
  %1009 = vmatmul.mubr.f32.gmra.mrb[0].mxu0 %v318
  %v1010 = vpop.f32.mrb[0].mxu0
  %v1011 = vadd.f32 %v203, %v1010
  %v1012 = vpop.f32.mrb[0].mxu0
  %1013 = vmatprep.mubr.f32.mxu0 0.0
  %1014 = vmatmul.mubr.f32.gmra.mrb[0].mxu0 %v321
  %v1015 = vpop.f32.mrb[0].mxu0
  %v1016 = vadd.f32 %v203, %v1015
  %v1017 = vpop.f32.mrb[0].mxu0
  %1018 = vmatprep.mubr.f32.mxu0 0.0
  %1019 = vmatmul.mubr.f32.gmra.mrb[0].mxu0 %v324
  %v1020 = vpop.f32.mrb[0].mxu0
  %v1021 = vadd.f32 %v203, %v1020
  %v1022 = vpop.f32.mrb[0].mxu0
  %1023 = vmatprep.mubr.f32.mxu0 0.0
  %1024 = vmatmul.mubr.f32.gmra.mrb[0].mxu0 %v327
  %v1025 = vpop.f32.mrb[0].mxu0
  %v1026 = vadd.f32 %v203, %v1025
  %v1027 = vpop.f32.mrb[0].mxu0
  %1028 = vmatprep.mubr.f32.mxu0 0.0
  %1029 = vmatmul.mubr.f32.gmra.mrb[0].mxu0 %v330
  %v1030 = vpop.f32.mrb[0].mxu0
  %v1031 = vadd.f32 %v203, %v1030
  %v1032 = vpop.f32.mrb[0].mxu0
  %1033 = vmatprep.mubr.f32.mxu0 0.0
  %1034 = vmatmul.mubr.f32.gmra.mrb[0].mxu0 %v333
  %v1035 = vpop.f32.mrb[0].mxu0
  %v1036 = vadd.f32 %v203, %v1035
  %v1037 = vpop.f32.mrb[0].mxu0
  %1038 = vmatprep.mubr.f32.mxu0 0.0
  %1039 = vmatmul.mubr.f32.gmra.mrb[0].mxu0 %v336
  %v1040 = vpop.f32.mrb[0].mxu0
  %v1041 = vadd.f32 %v203, %v1040
  %v1042 = vpop.f32.mrb[0].mxu0
  %1043 = vmatprep.mubr.f32.mxu0 0.0
  %1044 = vmatmul.mubr.f32.gmra.mrb[0].mxu0 %v339
  %v1045 = vpop.f32.mrb[0].mxu0
  %v1046 = vadd.f32 %v203, %v1045
  %v1047 = vpop.f32.mrb[0].mxu0
  %1048 = vmatprep.mubr.f32.mxu0 0.0
  %1049 = vmatmul.mubr.f32.gmra.mrb[0].mxu0 %v342
  %v1050 = vpop.f32.mrb[0].mxu0
  %v1051 = vadd.f32 %v203, %v1050
  %v1052 = vpop.f32.mrb[0].mxu0
  %1053 = vmatprep.mubr.f32.mxu0 0.0
  %1054 = vmatmul.mubr.f32.gmra.mrb[0].mxu0 %v345
  %v1055 = vpop.f32.mrb[0].mxu0
  %v1056 = vadd.f32 %v203, %v1055
  %v1057 = vpop.f32.mrb[0].mxu0
  %1058 = vmatprep.mubr.f32.mxu0 0.0
  %1059 = vmatmul.mubr.f32.gmra.mrb[0].mxu0 %v348
  %v1060 = vpop.f32.mrb[0].mxu0
  %v1061 = vadd.f32 %v203, %v1060
  %v1062 = vpop.f32.mrb[0].mxu0
  %1063 = vmatprep.mubr.f32.mxu0 0.0
  %1064 = vmatmul.mubr.f32.gmra.mrb[0].mxu0 %v351
  %v1065 = vpop.f32.mrb[0].mxu0
  %v1066 = vadd.f32 %v203, %v1065
  %v1067 = vpop.f32.mrb[0].mxu0
  %1068 = vmatprep.mubr.f32.mxu0 0.0
  %1069 = vmatmul.mubr.f32.gmra.mrb[0].mxu0 %v354
  %v1070 = vpop.f32.mrb[0].mxu0
  %v1071 = vadd.f32 %v203, %v1070
  %v1072 = vpop.f32.mrb[0].mxu0
  %1073 = vmatprep.mubr.f32.mxu0 0.0
  %1074 = vmatmul.mubr.f32.gmra.mrb[0].mxu0 %v357
  %v1075 = vpop.f32.mrb[0].mxu0
  %v1076 = vadd.f32 %v203, %v1075
  %v1077 = vpop.f32.mrb[0].mxu0
  %1078 = vmatprep.mubr.f32.mxu0 0.0
  %1079 = vmatmul.mubr.f32.gmra.mrb[0].mxu0 %v360
  %v1080 = vpop.f32.mrb[0].mxu0
  %v1081 = vadd.f32 %v203, %v1080
  %v1082 = vpop.f32.mrb[0].mxu0
  %1083 = vmatprep.mubr.f32.mxu0 0.0
  %1084 = vmatmul.mubr.f32.gmra.mrb[0].mxu0 %v363
  %v1085 = vpop.f32.mrb[0].mxu0
  %v1086 = vadd.f32 %v203, %v1085
  %v1087 = vpop.f32.mrb[0].mxu0
  %1088 = vmatprep.mubr.f32.mxu0 0.0
  %1089 = vmatmul.mubr.f32.gmra.mrb[0].mxu0 %v366
  %v1090 = vpop.f32.mrb[0].mxu0
  %v1091 = vadd.f32 %v203, %v1090
  %v1092 = vpop.f32.mrb[0].mxu0
  %1093 = vmatprep.mubr.f32.mxu0 0.0
  %1094 = vmatmul.mubr.f32.gmra.mrb[0].mxu0 %v369
  %v1095 = vpop.f32.mrb[0].mxu0
  %v1096 = vadd.f32 %v203, %v1095
  %v1097 = vpop.f32.mrb[0].mxu0
  %1098 = vmatprep.mubr.f32.mxu0 0.0
  %1099 = vmatmul.mubr.f32.gmra.mrb[0].mxu0 %v372
  %v1100 = vpop.f32.mrb[0].mxu0
  %v1101 = vadd.f32 %v203, %v1100
  %v1102 = vpop.f32.mrb[0].mxu0
  %1103 = vmatprep.mubr.f32.mxu0 0.0
  %1104 = vmatmul.mubr.f32.gmra.mrb[0].mxu0 %v375
  %v1105 = vpop.f32.mrb[0].mxu0
  %v1106 = vadd.f32 %v203, %v1105
  %v1107 = vpop.f32.mrb[0].mxu0
  %1108 = vmatprep.mubr.f32.mxu0 0.0
  %1109 = vmatmul.mubr.f32.gmra.mrb[0].mxu0 %v378
  %v1110 = vpop.f32.mrb[0].mxu0
  %v1111 = vadd.f32 %v203, %v1110
  %v1112 = vpop.f32.mrb[0].mxu0
  %1113 = vmatprep.mubr.f32.mxu0 0.0
  %1114 = vmatmul.mubr.f32.gmra.mrb[0].mxu0 %v381
  %v1115 = vpop.f32.mrb[0].mxu0
  %v1116 = vadd.f32 %v203, %v1115
  %v1117 = vpop.f32.mrb[0].mxu0
  %1118 = vmatprep.mubr.f32.mxu0 0.0
  %1119 = vmatmul.mubr.f32.gmra.mrb[0].mxu0 %v384
  %v1120 = vpop.f32.mrb[0].mxu0
  %v1121 = vadd.f32 %v203, %v1120
  %v1122 = vpop.f32.mrb[0].mxu0
  %1123 = vmatprep.mubr.f32.mxu0 0.0
  %1124 = vmatmul.mubr.f32.gmra.mrb[0].mxu0 %v387
  %v1125 = vpop.f32.mrb[0].mxu0
  %v1126 = vadd.f32 %v203, %v1125
  %v1127 = vpop.f32.mrb[0].mxu0
  %1128 = vmatprep.mubr.f32.mxu0 0.0
  %1129 = vmatmul.mubr.f32.gmra.mrb[0].mxu0 %v390
  %v1130 = vpop.f32.mrb[0].mxu0
  %v1131 = vadd.f32 %v203, %v1130
  %v1132 = vpop.f32.mrb[0].mxu0
  %1133 = vmatprep.mubr.f32.mxu0 0.0
  %1134 = vmatmul.mubr.f32.gmra.mrb[0].mxu0 %v393
  %v1135 = vpop.f32.mrb[0].mxu0
  %v1136 = vadd.f32 %v203, %v1135
  %v1137 = vpop.f32.mrb[0].mxu0
  %1138 = vmatprep.mubr.f32.mxu0 0.0
  %1139 = vmatmul.mubr.f32.gmra.mrb[0].mxu0 %v396
  %v1140 = vpop.f32.mrb[0].mxu0
  %v1141 = vadd.f32 %v203, %v1140
  %v1142 = vpop.f32.mrb[0].mxu0
  %1143 = vmatprep.mubr.f32.mxu0 0.0
  %1144 = vmatmul.mubr.f32.gmra.mrb[0].mxu0 %v399
  %v1145 = vpop.f32.mrb[0].mxu0
  %v1146 = vadd.f32 %v203, %v1145
  %v1147 = vpop.f32.mrb[0].mxu0
  %1148 = vmatprep.mubr.f32.mxu0 0.0
  %1149 = vmatmul.mubr.f32.gmra.mrb[0].mxu0 %v402
  %v1150 = vpop.f32.mrb[0].mxu0
  %v1151 = vadd.f32 %v203, %v1150
  %v1152 = vpop.f32.mrb[0].mxu0
  %1153 = vmatprep.mubr.f32.mxu0 0.0
  %1154 = vmatmul.mubr.f32.gmra.mrb[0].mxu0 %v405
  %v1155 = vpop.f32.mrb[0].mxu0
  %v1156 = vadd.f32 %v203, %v1155
  %v1157 = vpop.f32.mrb[0].mxu0
  %1158 = vmatprep.mubr.f32.mxu0 0.0
  %1159 = vmatmul.mubr.f32.gmra.mrb[0].mxu0 %v408
  %v1160 = vpop.f32.mrb[0].mxu0
  %v1161 = vadd.f32 %v203, %v1160
  %v1162 = vpop.f32.mrb[0].mxu0
  %1163 = vmatprep.mubr.f32.mxu0 0.0
  %1164 = vmatmul.mubr.f32.gmra.mrb[0].mxu0 %v411
  %v1165 = vpop.f32.mrb[0].mxu0
  %v1166 = vadd.f32 %v203, %v1165
  %v1167 = vpop.f32.mrb[0].mxu0
  %1168 = vmatprep.mubr.f32.mxu0 0.0
  %1169 = vmatmul.mubr.f32.gmra.mrb[0].mxu0 %v414
  %v1170 = vpop.f32.mrb[0].mxu0
  %v1171 = vadd.f32 %v203, %v1170
  %v1172 = vpop.f32.mrb[0].mxu0
  %1173 = vmatprep.mubr.f32.mxu0 0.0
  %1174 = vmatmul.mubr.f32.gmra.mrb[0].mxu0 %v417
  %v1175 = vpop.f32.mrb[0].mxu0
  %v1176 = vadd.f32 %v203, %v1175
  %v1177 = vpop.f32.mrb[0].mxu0
  %1178 = vmatprep.mubr.f32.mxu0 0.0
  %1179 = vmatmul.mubr.f32.gmra.mrb[0].mxu0 %v420
  %v1180 = vpop.f32.mrb[0].mxu0
  %v1181 = vadd.f32 %v203, %v1180
  %v1182 = vpop.f32.mrb[0].mxu0
  %1183 = vmatprep.mubr.f32.mxu0 0.0
  %1184 = vmatmul.mubr.f32.gmra.mrb[0].mxu0 %v423
  %v1185 = vpop.f32.mrb[0].mxu0
  %v1186 = vadd.f32 %v203, %v1185
  %v1187 = vpop.f32.mrb[0].mxu0
  %1188 = vmatprep.mubr.f32.mxu0 0.0
  %1189 = vmatmul.mubr.f32.gmra.mrb[0].mxu0 %v426
  %v1190 = vpop.f32.mrb[0].mxu0
  %v1191 = vadd.f32 %v203, %v1190
  %v1192 = vpop.f32.mrb[0].mxu0
  %1193 = vmatprep.mubr.f32.mxu0 0.0
  %1194 = vmatmul.mubr.f32.gmra.mrb[0].mxu0 %v429
  %v1195 = vpop.f32.mrb[0].mxu0
  %v1196 = vadd.f32 %v203, %v1195
  %v1197 = vpop.f32.mrb[0].mxu0
  %1198 = vmatprep.mubr.f32.mxu0 0.0
  %1199 = vmatmul.mubr.f32.gmra.mrb[0].mxu0 %v432
  %v1200 = vpop.f32.mrb[0].mxu0
  %v1201 = vadd.f32 %v203, %v1200
  %v1202 = vpop.f32.mrb[0].mxu0
  %1203 = vmatprep.mubr.f32.mxu0 0.0
  %1204 = vmatmul.mubr.f32.gmra.mrb[0].mxu0 %v435
  %v1205 = vpop.f32.mrb[0].mxu0
  %v1206 = vadd.f32 %v203, %v1205
  %v1207 = vpop.f32.mrb[0].mxu0
  %1208 = vmatprep.mubr.f32.mxu0 0.0
  %1209 = vmatmul.mubr.f32.gmra.mrb[0].mxu0 %v438
  %v1210 = vpop.f32.mrb[0].mxu0
  %v1211 = vadd.f32 %v203, %v1210
  %v1212 = vpop.f32.mrb[0].mxu0
  %1213 = vmatprep.mubr.f32.mxu0 0.0
  %1214 = vmatmul.mubr.f32.gmra.mrb[0].mxu0 %v441
  %v1215 = vpop.f32.mrb[0].mxu0
  %v1216 = vadd.f32 %v203, %v1215
  %v1217 = vpop.f32.mrb[0].mxu0
  %1218 = vmatprep.mubr.f32.mxu0 0.0
  %1219 = vmatmul.mubr.f32.gmra.mrb[0].mxu0 %v444
  %v1220 = vpop.f32.mrb[0].mxu0
  %v1221 = vadd.f32 %v203, %v1220
  %v1222 = vpop.f32.mrb[0].mxu0
  %1223 = vmatprep.mubr.f32.mxu0 0.0
  %1224 = vmatmul.mubr.f32.gmra.mrb[0].mxu0 %v447
  %v1225 = vpop.f32.mrb[0].mxu0
  %v1226 = vadd.f32 %v203, %v1225
  %v1227 = vpop.f32.mrb[0].mxu0
  %1228 = vmatprep.mubr.f32.mxu0 0.0
  %1229 = vmatmul.mubr.f32.gmra.mrb[0].mxu0 %v450
  %v1230 = vpop.f32.mrb[0].mxu0
  %v1231 = vadd.f32 %v203, %v1230
  %v1232 = vpop.f32.mrb[0].mxu0
  %1233 = vmatprep.mubr.f32.mxu0 0.0
  %1234 = vmatmul.mubr.f32.gmra.mrb[0].mxu0 %v453
  %v1235 = vpop.f32.mrb[0].mxu0
  %v1236 = vadd.f32 %v203, %v1235
  %v1237 = vpop.f32.mrb[0].mxu0
  %1238 = vmatprep.mubr.f32.mxu0 0.0
  %1239 = vmatmul.mubr.f32.gmra.mrb[0].mxu0 %v456
  %v1240 = vpop.f32.mrb[0].mxu0
  %v1241 = vadd.f32 %v203, %v1240
  %v1242 = vpop.f32.mrb[0].mxu0
  %1243 = vmatprep.mubr.f32.mxu0 0.0
  %1244 = vmatmul.mubr.f32.gmra.mrb[0].mxu0 %v459
  %v1245 = vpop.f32.mrb[0].mxu0
  %v1246 = vadd.f32 %v203, %v1245
  %v1247 = vpop.f32.mrb[0].mxu0
  %1248 = vmatprep.mubr.f32.mxu0 0.0
  %1249 = vmatmul.mubr.f32.gmra.mrb[0].mxu0 %v462
  %v1250 = vpop.f32.mrb[0].mxu0
  %v1251 = vadd.f32 %v203, %v1250
  %v1252 = vpop.f32.mrb[0].mxu0
  %1253 = vmatprep.mubr.f32.mxu0 0.0
  %1254 = vmatmul.mubr.f32.gmra.mrb[0].mxu0 %v465
  %v1255 = vpop.f32.mrb[0].mxu0
  %v1256 = vadd.f32 %v203, %v1255
  %v1257 = vpop.f32.mrb[0].mxu0
  %1258 = vmatprep.mubr.f32.mxu0 0.0
  %1259 = vmatmul.mubr.f32.gmra.mrb[0].mxu0 %v468
  %v1260 = vpop.f32.mrb[0].mxu0
  %v1261 = vadd.f32 %v203, %v1260
  %v1262 = vpop.f32.mrb[0].mxu0
  %1263 = vmatprep.mubr.f32.mxu0 0.0
  %1264 = vmatmul.mubr.f32.gmra.mrb[0].mxu0 %v471
  %v1265 = vpop.f32.mrb[0].mxu0
  %v1266 = vadd.f32 %v203, %v1265
  %v1267 = vpop.f32.mrb[0].mxu0
  %1268 = vmatprep.mubr.f32.mxu0 0.0
  %1269 = vmatmul.mubr.f32.gmra.mrb[0].mxu0 %v474
  %v1270 = vpop.f32.mrb[0].mxu0
  %v1271 = vadd.f32 %v203, %v1270
  %v1272 = vpop.f32.mrb[0].mxu0
  %1273 = vmatprep.mubr.f32.mxu0 0.0
  %1274 = vmatmul.mubr.f32.gmra.mrb[0].mxu0 %v477
  %v1275 = vpop.f32.mrb[0].mxu0
  %v1276 = vadd.f32 %v203, %v1275
  %v1277 = vpop.f32.mrb[0].mxu0
  %1278 = vmatprep.mubr.f32.mxu0 0.0
  %1279 = vmatmul.mubr.f32.gmra.mrb[0].mxu0 %v480
  %v1280 = vpop.f32.mrb[0].mxu0
  %v1281 = vadd.f32 %v203, %v1280
  %v1282 = vpop.f32.mrb[0].mxu0
  %1283 = vmatprep.mubr.f32.mxu0 0.0
  %1284 = vmatmul.mubr.f32.gmra.mrb[0].mxu0 %v483
  %v1285 = vpop.f32.mrb[0].mxu0
  %v1286 = vadd.f32 %v203, %v1285
  %v1287 = vpop.f32.mrb[0].mxu0
  %1288 = vmatprep.mubr.f32.mxu0 0.0
  %1289 = vmatmul.mubr.f32.gmra.mrb[0].mxu0 %v486
  %v1290 = vpop.f32.mrb[0].mxu0
  %v1291 = vadd.f32 %v203, %v1290
  %v1292 = vpop.f32.mrb[0].mxu0
  %1293 = vmatprep.mubr.f32.mxu0 0.0
  %1294 = vmatmul.mubr.f32.gmra.mrb[0].mxu0 %v489
  %v1295 = vpop.f32.mrb[0].mxu0
  %v1296 = vadd.f32 %v203, %v1295
  %v1297 = vpop.f32.mrb[0].mxu0
  %1298 = vmatprep.mubr.f32.mxu0 0.0
  %1299 = vmatmul.mubr.f32.gmra.mrb[0].mxu0 %v492
  %v1300 = vpop.f32.mrb[0].mxu0
  %v1301 = vadd.f32 %v203, %v1300
  %v1302 = vpop.f32.mrb[0].mxu0
  %1303 = vmatprep.mubr.f32.mxu0 0.0
  %1304 = vmatmul.mubr.f32.gmra.mrb[0].mxu0 %v495
  %v1305 = vpop.f32.mrb[0].mxu0
  %v1306 = vadd.f32 %v203, %v1305
  %v1307 = vpop.f32.mrb[0].mxu0
  %1308 = vmatprep.mubr.f32.mxu0 0.0
  %1309 = vmatmul.mubr.f32.gmra.mrb[0].mxu0 %v498
  %v1310 = vpop.f32.mrb[0].mxu0
  %v1311 = vadd.f32 %v203, %v1310
  %v1312 = vpop.f32.mrb[0].mxu0
  %1313 = vmatprep.mubr.f32.mxu0 0.0
  %1314 = vmatmul.mubr.f32.gmra.mrb[0].mxu0 %v501
  %v1315 = vpop.f32.mrb[0].mxu0
  %v1316 = vadd.f32 %v203, %v1315
  %v1317 = vpop.f32.mrb[0].mxu0
  %1318 = vmatprep.mubr.f32.mxu0 0.0
  %1319 = vmatmul.mubr.f32.gmra.mrb[0].mxu0 %v504
  %v1320 = vpop.f32.mrb[0].mxu0
  %v1321 = vadd.f32 %v203, %v1320
  %v1322 = vpop.f32.mrb[0].mxu0
  %1323 = vmatprep.mubr.f32.mxu0 0.0
  %1324 = vmatmul.mubr.f32.gmra.mrb[0].mxu0 %v507
  %v1325 = vpop.f32.mrb[0].mxu0
  %v1326 = vadd.f32 %v203, %v1325
  %v1327 = vpop.f32.mrb[0].mxu0
  %1328 = vmatprep.mubr.f32.mxu0 0.0
  %1329 = vmatmul.mubr.f32.gmra.mrb[0].mxu0 %v510
  %v1330 = vpop.f32.mrb[0].mxu0
  %v1331 = vadd.f32 %v203, %v1330
  %v1332 = vpop.f32.mrb[0].mxu0
  %1333 = vmatprep.mubr.f32.mxu0 0.0
  %1334 = vmatmul.mubr.f32.gmra.mrb[0].mxu0 %v513
  %v1335 = vpop.f32.mrb[0].mxu0
  %v1336 = vadd.f32 %v203, %v1335
  %v1337 = vpop.f32.mrb[0].mxu0
  %1338 = vmatprep.mubr.f32.mxu0 0.0
  %1339 = vmatmul.mubr.f32.gmra.mrb[0].mxu0 %v516
  %v1340 = vpop.f32.mrb[0].mxu0
  %v1341 = vadd.f32 %v203, %v1340
  %v1342 = vpop.f32.mrb[0].mxu0
  %1343 = vmatprep.mubr.f32.mxu0 0.0
  %1344 = vmatmul.mubr.f32.gmra.mrb[0].mxu0 %v519
  %v1345 = vpop.f32.mrb[0].mxu0
  %v1346 = vadd.f32 %v203, %v1345
  %v1347 = vpop.f32.mrb[0].mxu0
  %1348 = vmatprep.mubr.f32.mxu0 0.0
  %1349 = vmatmul.mubr.f32.gmra.mrb[0].mxu0 %v522
  %v1350 = vpop.f32.mrb[0].mxu0
  %v1351 = vadd.f32 %v203, %v1350
  %v1352 = vpop.f32.mrb[0].mxu0
  %1353 = vmatprep.mubr.f32.mxu0 0.0
  %1354 = vmatmul.mubr.f32.gmra.mrb[0].mxu0 %v525
  %v1355 = vpop.f32.mrb[0].mxu0
  %v1356 = vadd.f32 %v203, %v1355
  %v1357 = vpop.f32.mrb[0].mxu0
  %1358 = vmatprep.mubr.f32.mxu0 0.0
  %1359 = vmatmul.mubr.f32.gmra.mrb[0].mxu0 %v528
  %v1360 = vpop.f32.mrb[0].mxu0
  %v1361 = vadd.f32 %v203, %v1360
  %v1362 = vpop.f32.mrb[0].mxu0
  %1363 = vmatprep.mubr.f32.mxu0 0.0
  %1364 = vmatmul.mubr.f32.gmra.mrb[0].mxu0 %v531
  %v1365 = vpop.f32.mrb[0].mxu0
  %v1366 = vadd.f32 %v203, %v1365
  %v1367 = vpop.f32.mrb[0].mxu0
  %1368 = vmatprep.mubr.f32.mxu0 0.0
  %1369 = vmatmul.mubr.f32.gmra.mrb[0].mxu0 %v534
  %v1370 = vpop.f32.mrb[0].mxu0
  %v1371 = vadd.f32 %v203, %v1370
  %v1372 = vpop.f32.mrb[0].mxu0
  %1373 = vmatprep.mubr.f32.mxu0 0.0
  %1374 = vmatmul.mubr.f32.gmra.mrb[0].mxu0 %v537
  %v1375 = vpop.f32.mrb[0].mxu0
  %v1376 = vadd.f32 %v203, %v1375
  %v1377 = vpop.f32.mrb[0].mxu0
  %1378 = vmatprep.mubr.f32.mxu0 0.0
  %1379 = vmatmul.mubr.f32.gmra.mrb[0].mxu0 %v540
  %v1380 = vpop.f32.mrb[0].mxu0
  %v1381 = vadd.f32 %v203, %v1380
  %v1382 = vpop.f32.mrb[0].mxu0
  %1383 = vmatprep.mubr.f32.mxu0 0.0
  %1384 = vmatmul.mubr.f32.gmra.mrb[0].mxu0 %v543
  %v1385 = vpop.f32.mrb[0].mxu0
  %v1386 = vadd.f32 %v203, %v1385
  %v1387 = vpop.f32.mrb[0].mxu0
  %1388 = vmatprep.mubr.f32.mxu0 0.0
  %1389 = vmatmul.mubr.f32.gmra.mrb[0].mxu0 %v546
  %v1390 = vpop.f32.mrb[0].mxu0
  %v1391 = vadd.f32 %v203, %v1390
  %v1392 = vpop.f32.mrb[0].mxu0
  %1393 = vmatprep.mubr.f32.mxu0 0.0
  %1394 = vmatmul.mubr.f32.gmra.mrb[0].mxu0 %v549
  %v1395 = vpop.f32.mrb[0].mxu0
  %v1396 = vadd.f32 %v203, %v1395
  %v1397 = vpop.f32.mrb[0].mxu0
  %1398 = vmatprep.mubr.f32.mxu0 0.0
  %1399 = vmatmul.mubr.f32.gmra.mrb[0].mxu0 %v552
  %v1400 = vpop.f32.mrb[0].mxu0
  %v1401 = vadd.f32 %v203, %v1400
  %v1402 = vpop.f32.mrb[0].mxu0
  %1403 = vmatprep.mubr.f32.mxu0 0.0
  %1404 = vmatmul.mubr.f32.gmra.mrb[0].mxu0 %v555
  %v1405 = vpop.f32.mrb[0].mxu0
  %v1406 = vadd.f32 %v203, %v1405
  %v1407 = vpop.f32.mrb[0].mxu0
  %1408 = vmatprep.mubr.f32.mxu0 0.0
  %1409 = vmatmul.mubr.f32.gmra.mrb[0].mxu0 %v558
  %v1410 = vpop.f32.mrb[0].mxu0
  %v1411 = vadd.f32 %v203, %v1410
  %v1412 = vpop.f32.mrb[0].mxu0
  %1413 = vmatprep.mubr.f32.mxu0 0.0
  %1414 = vmatmul.mubr.f32.gmra.mrb[0].mxu0 %v561
  %v1415 = vpop.f32.mrb[0].mxu0
  %v1416 = vadd.f32 %v203, %v1415
  %v1417 = vpop.f32.mrb[0].mxu0
  %1418 = vmatprep.mubr.f32.mxu0 0.0
  %1419 = vmatmul.mubr.f32.gmra.mrb[0].mxu0 %v564
  %v1420 = vpop.f32.mrb[0].mxu0
  %v1421 = vadd.f32 %v203, %v1420
  %v1422 = vpop.f32.mrb[0].mxu0
  %1423 = vmatprep.mubr.f32.mxu0 0.0
  %1424 = vmatmul.mubr.f32.gmra.mrb[0].mxu0 %v567
  %v1425 = vpop.f32.mrb[0].mxu0
  %v1426 = vadd.f32 %v203, %v1425
  %v1427 = vpop.f32.mrb[0].mxu0
  %1428 = vmatprep.mubr.f32.mxu0 0.0
  %1429 = vmatmul.mubr.f32.gmra.mrb[0].mxu0 %v570
  %v1430 = vpop.f32.mrb[0].mxu0
  %v1431 = vadd.f32 %v203, %v1430
  %v1432 = vpop.f32.mrb[0].mxu0
  %1433 = vmatprep.mubr.f32.mxu0 0.0
  %1434 = vmatmul.mubr.f32.gmra.mrb[0].mxu0 %v573
  %v1435 = vpop.f32.mrb[0].mxu0
  %v1436 = vadd.f32 %v203, %v1435
  %v1437 = vpop.f32.mrb[0].mxu0
  %1438 = vmatprep.mubr.f32.mxu0 0.0
  %1439 = vmatmul.mubr.f32.gmra.mrb[0].mxu0 %v576
  %v1440 = vpop.f32.mrb[0].mxu0
  %v1441 = vadd.f32 %v203, %v1440
  %v1442 = vpop.f32.mrb[0].mxu0
  %1443 = vmatprep.mubr.f32.mxu0 0.0
  %1444 = vmatmul.mubr.f32.gmra.mrb[0].mxu0 %v579
  %v1445 = vpop.f32.mrb[0].mxu0
  %v1446 = vadd.f32 %v203, %v1445
  %v1447 = vpop.f32.mrb[0].mxu0
  %1448 = vmatprep.mubr.f32.mxu0 0.0
  %1449 = vmatmul.mubr.f32.gmra.mrb[0].mxu0 %v582
  %v1450 = vpop.f32.mrb[0].mxu0
  %v1451 = vadd.f32 %v203, %v1450
  %v1452 = vpop.f32.mrb[0].mxu0
  %1453 = vmatprep.mubr.f32.mxu0 0.0
  %1454 = vmatmul.mubr.f32.gmra.mrb[0].mxu0 %v585
  %v1455 = vpop.f32.mrb[0].mxu0
  %v1456 = vadd.f32 %v203, %v1455
  %v1457 = vpop.f32.mrb[0].mxu0
  %1458 = vmatprep.mubr.f32.mxu0 0.0
  %1459 = vmatmul.mubr.f32.gmra.mrb[0].mxu0 %v588
  %v1460 = vpop.f32.mrb[0].mxu0
  %v1461 = vadd.f32 %v203, %v1460
  %v1462 = vpop.f32.mrb[0].mxu0
  %1463 = vmatprep.mubr.f32.mxu0 0.0
  %1464 = vmatmul.mubr.f32.gmra.mrb[0].mxu0 %v591
  %v1465 = vpop.f32.mrb[0].mxu0
  %v1466 = vadd.f32 %v203, %v1465
  %v1467 = vpop.f32.mrb[0].mxu0
  %1468 = vmatprep.mubr.f32.mxu0 0.0
  %1469 = vmatmul.mubr.f32.gmra.mrb[0].mxu0 %v594
  %v1470 = vpop.f32.mrb[0].mxu0
  %v1471 = vadd.f32 %v203, %v1470
  %v1472 = vpop.f32.mrb[0].mxu0
  %1473 = vmatprep.mubr.f32.mxu0 0.0
  %1474 = vmatmul.mubr.f32.gmra.mrb[0].mxu0 %v597
  %v1475 = vpop.f32.mrb[0].mxu0
  %v1476 = vadd.f32 %v203, %v1475
  %v1477 = vpop.f32.mrb[0].mxu0
  %1478 = vmatprep.mubr.f32.mxu0 0.0
  %1479 = vmatmul.mubr.f32.gmra.mrb[0].mxu0 %v600
  %v1480 = vpop.f32.mrb[0].mxu0
  %v1481 = vadd.f32 %v203, %v1480
  %v1482 = vpop.f32.mrb[0].mxu0
  %1483 = vmatprep.mubr.f32.mxu0 0.0
  %1484 = vmatmul.mubr.f32.gmra.mrb[0].mxu0 %v603
  %v1485 = vpop.f32.mrb[0].mxu0
  %v1486 = vadd.f32 %v203, %v1485
  %v1487 = vpop.f32.mrb[0].mxu0
  %1488 = vmatprep.mubr.f32.mxu0 0.0
  %1489 = vmatmul.mubr.f32.gmra.mrb[0].mxu0 %v606
  %v1490 = vpop.f32.mrb[0].mxu0
  %v1491 = vadd.f32 %v203, %v1490
  %v1492 = vpop.f32.mrb[0].mxu0
  %1493 = vmatprep.mubr.f32.mxu0 0.0
  %1494 = vmatmul.mubr.f32.gmra.mrb[0].mxu0 %v609
  %v1495 = vpop.f32.mrb[0].mxu0
  %v1496 = vadd.f32 %v203, %v1495
  %v1497 = vpop.f32.mrb[0].mxu0
  %1498 = vmatprep.mubr.f32.mxu0 0.0
  %1499 = vmatmul.mubr.f32.gmra.mrb[0].mxu0 %v612
  %v1500 = vpop.f32.mrb[0].mxu0
  %v1501 = vadd.f32 %v203, %v1500
  %v1502 = vpop.f32.mrb[0].mxu0
  %1503 = vmatprep.mubr.f32.mxu0 0.0
  %1504 = vmatmul.mubr.f32.gmra.mrb[0].mxu0 %v615
  %v1505 = vpop.f32.mrb[0].mxu0
  %v1506 = vadd.f32 %v203, %v1505
  %v1507 = vpop.f32.mrb[0].mxu0
  %1508 = vmatprep.mubr.f32.mxu0 0.0
  %1509 = vmatmul.mubr.f32.gmra.mrb[0].mxu0 %v618
  %v1510 = vpop.f32.mrb[0].mxu0
  %v1511 = vadd.f32 %v203, %v1510
  %v1512 = vpop.f32.mrb[0].mxu0
  %1513 = vmatprep.mubr.f32.mxu0 0.0
  %1514 = vmatmul.mubr.f32.gmra.mrb[0].mxu0 %v621
  %v1515 = vpop.f32.mrb[0].mxu0
  %v1516 = vadd.f32 %v203, %v1515
  %v1517 = vpop.f32.mrb[0].mxu0
  %1518 = vmatprep.mubr.f32.mxu0 0.0
  %1519 = vmatmul.mubr.f32.gmra.mrb[0].mxu0 %v624
  %v1520 = vpop.f32.mrb[0].mxu0
  %v1521 = vadd.f32 %v203, %v1520
  %v1522 = vpop.f32.mrb[0].mxu0
  %1523 = vmatprep.mubr.f32.mxu0 0.0
  %1524 = vmatmul.mubr.f32.gmra.mrb[0].mxu0 %v627
  %v1525 = vpop.f32.mrb[0].mxu0
  %v1526 = vadd.f32 %v203, %v1525
  %v1527 = vpop.f32.mrb[0].mxu0
  %1528 = vmatprep.mubr.f32.mxu0 0.0
  %1529 = vmatmul.mubr.f32.gmra.mrb[0].mxu0 %v630
  %v1530 = vpop.f32.mrb[0].mxu0
  %v1531 = vadd.f32 %v203, %v1530
  %v1532 = vpop.f32.mrb[0].mxu0
  %1533 = vmatprep.mubr.f32.mxu0 0.0
  %1534 = vmatmul.mubr.f32.gmra.mrb[0].mxu0 %v633
  %v1535 = vpop.f32.mrb[0].mxu0
  %v1536 = vadd.f32 %v203, %v1535
  %v1537 = vpop.f32.mrb[0].mxu0
  %1538 = vmatprep.mubr.f32.mxu0 0.0
  %1539 = vmatmul.mubr.f32.gmra.mrb[0].mxu0 %v636
  %v1540 = vpop.f32.mrb[0].mxu0
  %v1541 = vadd.f32 %v203, %v1540
  %v1542 = vpop.f32.mrb[0].mxu0
  %1543 = vmatprep.mubr.f32.mxu0 0.0
  %1544 = vmatmul.mubr.f32.gmra.mrb[0].mxu0 %v639
  %v1545 = vpop.f32.mrb[0].mxu0
  %v1546 = vadd.f32 %v203, %v1545
  %v1547 = vpop.f32.mrb[0].mxu0
  %1548 = vmatprep.mubr.f32.mxu0 0.0
  %1549 = vmatmul.mubr.f32.gmra.mrb[0].mxu0 %v642
  %v1550 = vpop.f32.mrb[0].mxu0
  %v1551 = vadd.f32 %v203, %v1550
  %v1552 = vpop.f32.mrb[0].mxu0
  %1553 = vmatprep.mubr.f32.mxu0 0.0
  %1554 = vmatmul.mubr.f32.gmra.mrb[0].mxu0 %v645
  %v1555 = vpop.f32.mrb[0].mxu0
  %v1556 = vadd.f32 %v203, %v1555
  %v1557 = vpop.f32.mrb[0].mxu0
  %1558 = vmatprep.mubr.f32.mxu0 0.0
  %1559 = vmatmul.mubr.f32.gmra.mrb[0].mxu0 %v648
  %v1560 = vpop.f32.mrb[0].mxu0
  %v1561 = vadd.f32 %v203, %v1560
  %v1562 = vpop.f32.mrb[0].mxu0
  %1563 = vmatprep.mubr.f32.mxu0 0.0
  %1564 = vmatmul.mubr.f32.gmra.mrb[0].mxu0 %v651
  %v1565 = vpop.f32.mrb[0].mxu0
  %v1566 = vadd.f32 %v203, %v1565
  %v1567 = vpop.f32.mrb[0].mxu0
  %1568 = vmatprep.mubr.f32.mxu0 0.0
  %1569 = vmatmul.mubr.f32.gmra.mrb[0].mxu0 %v654
  %v1570 = vpop.f32.mrb[0].mxu0
  %v1571 = vadd.f32 %v203, %v1570
  %v1572 = vpop.f32.mrb[0].mxu0
  %1573 = vmatprep.mubr.f32.mxu0 0.0
  %1574 = vmatmul.mubr.f32.gmra.mrb[0].mxu0 %v657
  %v1575 = vpop.f32.mrb[0].mxu0
  %v1576 = vadd.f32 %v203, %v1575
  %v1577 = vpop.f32.mrb[0].mxu0
  %1578 = vmatprep.mubr.f32.mxu0 0.0
  %1579 = vmatmul.mubr.f32.gmra.mrb[0].mxu0 %v660
  %v1580 = vpop.f32.mrb[0].mxu0
  %v1581 = vadd.f32 %v203, %v1580
  %v1582 = vpop.f32.mrb[0].mxu0
  %1583 = vmatprep.mubr.f32.mxu0 0.0
  %1584 = vmatmul.mubr.f32.gmra.mrb[0].mxu0 %v663
  %v1585 = vpop.f32.mrb[0].mxu0
  %v1586 = vadd.f32 %v203, %v1585
  %v1587 = vpop.f32.mrb[0].mxu0
  %1588 = vmatprep.mubr.f32.mxu0 0.0
  %1589 = vmatmul.mubr.f32.gmra.mrb[0].mxu0 %v666
  %v1590 = vpop.f32.mrb[0].mxu0
  %v1591 = vadd.f32 %v203, %v1590
  %v1592 = vpop.f32.mrb[0].mxu0
  %1593 = vmatprep.mubr.f32.mxu0 0.0
  %1594 = vmatmul.mubr.f32.gmra.mrb[0].mxu0 %v669
  %v1595 = vpop.f32.mrb[0].mxu0
  %v1596 = vadd.f32 %v203, %v1595
  %v1597 = vpop.f32.mrb[0].mxu0
  %1598 = vmatprep.mubr.f32.mxu0 0.0
  %1599 = vmatmul.mubr.f32.gmra.mrb[0].mxu0 %v672
  %v1600 = vpop.f32.mrb[0].mxu0
  %v1601 = vadd.f32 %v203, %v1600
  %v1602 = vpop.f32.mrb[0].mxu0
  %1603 = vmatprep.mubr.f32.mxu0 0.0
  %1604 = vmatmul.mubr.f32.gmra.mrb[0].mxu0 %v675
  %v1605 = vpop.f32.mrb[0].mxu0
  %v1606 = vadd.f32 %v203, %v1605
  %v1607 = vpop.f32.mrb[0].mxu0
  %1608 = vmatprep.mubr.f32.mxu0 0.0
  %1609 = vmatmul.mubr.f32.gmra.mrb[0].mxu0 %v678
  %v1610 = vpop.f32.mrb[0].mxu0
  %v1611 = vadd.f32 %v203, %v1610
  %v1612 = vpop.f32.mrb[0].mxu0
  %1613 = vmatprep.mubr.f32.mxu0 0.0
  %1614 = vmatmul.mubr.f32.gmra.mrb[0].mxu0 %v681
  %v1615 = vpop.f32.mrb[0].mxu0
  %v1616 = vadd.f32 %v203, %v1615
  %v1617 = vpop.f32.mrb[0].mxu0
  %1618 = vmatprep.mubr.f32.mxu0 0.0
  %1619 = vmatmul.mubr.f32.gmra.mrb[0].mxu0 %v684
  %v1620 = vpop.f32.mrb[0].mxu0
  %v1621 = vadd.f32 %v203, %v1620
  %v1622 = vpop.f32.mrb[0].mxu0
  %1623 = vmatprep.mubr.f32.mxu0 0.0
  %1624 = vmatmul.mubr.f32.gmra.mrb[0].mxu0 %v687
  %v1625 = vpop.f32.mrb[0].mxu0
  %v1626 = vadd.f32 %v203, %v1625
  %v1627 = vpop.f32.mrb[0].mxu0
  %1628 = vmatprep.mubr.f32.mxu0 0.0
  %1629 = vmatmul.mubr.f32.gmra.mrb[0].mxu0 %v690
  %v1630 = vpop.f32.mrb[0].mxu0
  %v1631 = vadd.f32 %v203, %v1630
  %v1632 = vpop.f32.mrb[0].mxu0
  %1633 = vmatprep.mubr.f32.mxu0 0.0
  %1634 = vmatmul.mubr.f32.gmra.mrb[0].mxu0 %v693
  %v1635 = vpop.f32.mrb[0].mxu0
  %v1636 = vadd.f32 %v203, %v1635
  %v1637 = vpop.f32.mrb[0].mxu0
  %1638 = vmatprep.mubr.f32.mxu0 0.0
  %1639 = vmatmul.mubr.f32.gmra.mrb[0].mxu0 %v696
  %v1640 = vpop.f32.mrb[0].mxu0
  %v1641 = vadd.f32 %v203, %v1640
  %v1642 = vpop.f32.mrb[0].mxu0
  %1643 = vmatprep.mubr.f32.mxu0 0.0
  %1644 = vmatmul.mubr.f32.gmra.mrb[0].mxu0 %v699
  %v1645 = vpop.f32.mrb[0].mxu0
  %v1646 = vadd.f32 %v203, %v1645
  %v1647 = vpop.f32.mrb[0].mxu0
  %1648 = vmatprep.mubr.f32.mxu0 0.0
  %1649 = vmatmul.mubr.f32.gmra.mrb[0].mxu0 %v702
  %v1650 = vpop.f32.mrb[0].mxu0
  %v1651 = vadd.f32 %v203, %v1650
  %v1652 = vpop.f32.mrb[0].mxu0
  %1653 = vmatprep.mubr.f32.mxu0 0.0
  %1654 = vmatmul.mubr.f32.gmra.mrb[0].mxu0 %v705
  %v1655 = vpop.f32.mrb[0].mxu0
  %v1656 = vadd.f32 %v203, %v1655
  %v1657 = vpop.f32.mrb[0].mxu0
  %1658 = vmatprep.mubr.f32.mxu0 0.0
  %1659 = vmatmul.mubr.f32.gmra.mrb[0].mxu0 %v708
  %v1660 = vpop.f32.mrb[0].mxu0
  %v1661 = vadd.f32 %v203, %v1660
  %v1662 = vpop.f32.mrb[0].mxu0
  %1663 = vmatprep.mubr.f32.mxu0 0.0
  %1664 = vmatmul.mubr.f32.gmra.mrb[0].mxu0 %v711
  %v1665 = vpop.f32.mrb[0].mxu0
  %v1666 = vadd.f32 %v203, %v1665
  %v1667 = vpop.f32.mrb[0].mxu0
  %1668 = vmatprep.mubr.f32.mxu0 0.0
  %1669 = vmatmul.mubr.f32.gmra.mrb[0].mxu0 %v714
  %v1670 = vpop.f32.mrb[0].mxu0
  %v1671 = vadd.f32 %v203, %v1670
  %v1672 = vpop.f32.mrb[0].mxu0
  %1673 = vmatprep.mubr.f32.mxu0 0.0
  %1674 = vmatmul.mubr.f32.gmra.mrb[0].mxu0 %v717
  %v1675 = vpop.f32.mrb[0].mxu0
  %v1676 = vadd.f32 %v203, %v1675
  %v1677 = vpop.f32.mrb[0].mxu0
  %1678 = vmatprep.mubr.f32.mxu0 0.0
  %1679 = vmatmul.mubr.f32.gmra.mrb[0].mxu0 %v720
  %v1680 = vpop.f32.mrb[0].mxu0
  %v1681 = vadd.f32 %v203, %v1680
  %v1682 = vpop.f32.mrb[0].mxu0
  %1683 = vmatprep.mubr.f32.mxu0 0.0
  %1684 = vmatmul.mubr.f32.gmra.mrb[0].mxu0 %v723
  %v1685 = vpop.f32.mrb[0].mxu0
  %v1686 = vadd.f32 %v203, %v1685
  %v1687 = vpop.f32.mrb[0].mxu0
  %1688 = vmatprep.mubr.f32.mxu0 0.0
  %1689 = vmatmul.mubr.f32.gmra.mrb[0].mxu0 %v726
  %v1690 = vpop.f32.mrb[0].mxu0
  %v1691 = vadd.f32 %v203, %v1690
  %v1692 = vpop.f32.mrb[0].mxu0
  %1693 = vmatprep.mubr.f32.mxu0 0.0
  %1694 = vmatmul.mubr.f32.gmra.mrb[0].mxu0 %v729
  %v1695 = vpop.f32.mrb[0].mxu0
  %v1696 = vadd.f32 %v203, %v1695
  %v1697 = vpop.f32.mrb[0].mxu0
  %1698 = vmatprep.mubr.f32.mxu0 0.0
  %1699 = vmatmul.mubr.f32.gmra.mrb[0].mxu0 %v732
  %v1700 = vpop.f32.mrb[0].mxu0
  %v1701 = vadd.f32 %v203, %v1700
  %v1702 = vpop.f32.mrb[0].mxu0
  %1703 = vmatprep.mubr.f32.mxu0 0.0
  %1704 = vmatmul.mubr.f32.gmra.mrb[0].mxu0 %v735
  %v1705 = vpop.f32.mrb[0].mxu0
  %v1706 = vadd.f32 %v203, %v1705
  %v1707 = vpop.f32.mrb[0].mxu0
  %1708 = vmatprep.mubr.f32.mxu0 0.0
  %1709 = vmatmul.mubr.f32.gmra.mrb[0].mxu0 %v738
  %v1710 = vpop.f32.mrb[0].mxu0
  %v1711 = vadd.f32 %v203, %v1710
  %v1712 = vpop.f32.mrb[0].mxu0
  %1713 = vmatprep.mubr.f32.mxu0 0.0
  %1714 = vmatmul.mubr.f32.gmra.mrb[0].mxu0 %v741
  %v1715 = vpop.f32.mrb[0].mxu0
  %v1716 = vadd.f32 %v203, %v1715
  %v1717 = vpop.f32.mrb[0].mxu0
  %1718 = vmatprep.mubr.f32.mxu0 0.0
  %1719 = vmatmul.mubr.f32.gmra.mrb[0].mxu0 %v744
  %v1720 = vpop.f32.mrb[0].mxu0
  %v1721 = vadd.f32 %v203, %v1720
  %v1722 = vpop.f32.mrb[0].mxu0
  %1723 = vmatprep.mubr.f32.mxu0 0.0
  %1724 = vmatmul.mubr.f32.gmra.mrb[0].mxu0 %v747
  %v1725 = vpop.f32.mrb[0].mxu0
  %v1726 = vadd.f32 %v203, %v1725
  %v1727 = vpop.f32.mrb[0].mxu0
  %1728 = vmatprep.mubr.f32.mxu0 0.0
  %1729 = vmatmul.mubr.f32.gmra.mrb[0].mxu0 %v750
  %v1730 = vpop.f32.mrb[0].mxu0
  %v1731 = vadd.f32 %v203, %v1730
  %v1732 = vpop.f32.mrb[0].mxu0
  %1733 = vmatprep.mubr.f32.mxu0 0.0
  %1734 = vmatmul.mubr.f32.gmra.mrb[0].mxu0 %v753
  %v1735 = vpop.f32.mrb[0].mxu0
  %v1736 = vadd.f32 %v203, %v1735
  %v1737 = vpop.f32.mrb[0].mxu0
  %1738 = vdwg.mxu0
  %v1739 = vmax.f32 %v826, 0.0
  %v1740 = vmax.f32 %v831, 0.0
  %v1741 = vmax.f32 %v836, 0.0
  %v1742 = vmax.f32 %v841, 0.0
  %v1743 = vmax.f32 %v846, 0.0
  %v1744 = vmax.f32 %v851, 0.0
  %v1745 = vmax.f32 %v856, 0.0
  %v1746 = vmax.f32 %v861, 0.0
  %v1747 = vmax.f32 %v866, 0.0
  %v1748 = vmax.f32 %v871, 0.0
  %v1749 = vmax.f32 %v876, 0.0
  %v1750 = vmax.f32 %v881, 0.0
  %v1751 = vmax.f32 %v886, 0.0
  %v1752 = vmax.f32 %v891, 0.0
  %v1753 = vmax.f32 %v896, 0.0
  %v1754 = vmax.f32 %v901, 0.0
  %v1755 = vmax.f32 %v906, 0.0
  %v1756 = vmax.f32 %v911, 0.0
  %v1757 = vmax.f32 %v916, 0.0
  %v1758 = vmax.f32 %v921, 0.0
  %v1759 = vmax.f32 %v926, 0.0
  %v1760 = vmax.f32 %v931, 0.0
  %v1761 = vmax.f32 %v936, 0.0
  %v1762 = vmax.f32 %v941, 0.0
  %v1763 = vmax.f32 %v946, 0.0
  %v1764 = vmax.f32 %v951, 0.0
  %v1765 = vmax.f32 %v956, 0.0
  %v1766 = vmax.f32 %v961, 0.0
  %v1767 = vmax.f32 %v966, 0.0
  %v1768 = vmax.f32 %v971, 0.0
  %v1769 = vmax.f32 %v976, 0.0
  %v1770 = vmax.f32 %v981, 0.0
  %v1771 = vmax.f32 %v986, 0.0
  %v1772 = vmax.f32 %v991, 0.0
  %v1773 = vmax.f32 %v996, 0.0
  %v1774 = vmax.f32 %v1001, 0.0
  %v1775 = vmax.f32 %v1006, 0.0
  %v1776 = vmax.f32 %v1011, 0.0
  %v1777 = vmax.f32 %v1016, 0.0
  %v1778 = vmax.f32 %v1021, 0.0
  %v1779 = vmax.f32 %v1026, 0.0
  %v1780 = vmax.f32 %v1031, 0.0
  %v1781 = vmax.f32 %v1036, 0.0
  %v1782 = vmax.f32 %v1041, 0.0
  %v1783 = vmax.f32 %v1046, 0.0
  %v1784 = vmax.f32 %v1051, 0.0
  %v1785 = vmax.f32 %v1056, 0.0
  %v1786 = vmax.f32 %v1061, 0.0
  %v1787 = vmax.f32 %v1066, 0.0
  %v1788 = vmax.f32 %v1071, 0.0
  %v1789 = vmax.f32 %v1076, 0.0
  %v1790 = vmax.f32 %v1081, 0.0
  %v1791 = vmax.f32 %v1086, 0.0
  %v1792 = vmax.f32 %v1091, 0.0
  %v1793 = vmax.f32 %v1096, 0.0
  %v1794 = vmax.f32 %v1101, 0.0
  %v1795 = vmax.f32 %v1106, 0.0
  %v1796 = vmax.f32 %v1111, 0.0
  %v1797 = vmax.f32 %v1116, 0.0
  %v1798 = vmax.f32 %v1121, 0.0
  %v1799 = vmax.f32 %v1126, 0.0
  %v1800 = vmax.f32 %v1131, 0.0
  %v1801 = vmax.f32 %v1136, 0.0
  %v1802 = vmax.f32 %v1141, 0.0
  %v1803 = vmax.f32 %v1146, 0.0
  %v1804 = vmax.f32 %v1151, 0.0
  %v1805 = vmax.f32 %v1156, 0.0
  %v1806 = vmax.f32 %v1161, 0.0
  %v1807 = vmax.f32 %v1166, 0.0
  %v1808 = vmax.f32 %v1171, 0.0
  %v1809 = vmax.f32 %v1176, 0.0
  %v1810 = vmax.f32 %v1181, 0.0
  %v1811 = vmax.f32 %v1186, 0.0
  %v1812 = vmax.f32 %v1191, 0.0
  %v1813 = vmax.f32 %v1196, 0.0
  %v1814 = vmax.f32 %v1201, 0.0
  %v1815 = vmax.f32 %v1206, 0.0
  %v1816 = vmax.f32 %v1211, 0.0
  %v1817 = vmax.f32 %v1216, 0.0
  %v1818 = vmax.f32 %v1221, 0.0
  %v1819 = vmax.f32 %v1226, 0.0
  %v1820 = vmax.f32 %v1231, 0.0
  %v1821 = vmax.f32 %v1236, 0.0
  %v1822 = vmax.f32 %v1241, 0.0
  %v1823 = vmax.f32 %v1246, 0.0
  %v1824 = vmax.f32 %v1251, 0.0
  %v1825 = vmax.f32 %v1256, 0.0
  %v1826 = vmax.f32 %v1261, 0.0
  %v1827 = vmax.f32 %v1266, 0.0
  %v1828 = vmax.f32 %v1271, 0.0
  %v1829 = vmax.f32 %v1276, 0.0
  %v1830 = vmax.f32 %v1281, 0.0
  %v1831 = vmax.f32 %v1286, 0.0
  %v1832 = vmax.f32 %v1291, 0.0
  %v1833 = vmax.f32 %v1296, 0.0
  %v1834 = vmax.f32 %v1301, 0.0
  %v1835 = vmax.f32 %v1306, 0.0
  %v1836 = vmax.f32 %v1311, 0.0
  %v1837 = vmax.f32 %v1316, 0.0
  %v1838 = vmax.f32 %v1321, 0.0
  %v1839 = vmax.f32 %v1326, 0.0
  %v1840 = vmax.f32 %v1331, 0.0
  %v1841 = vmax.f32 %v1336, 0.0
  %v1842 = vmax.f32 %v1341, 0.0
  %v1843 = vmax.f32 %v1346, 0.0
  %v1844 = vmax.f32 %v1351, 0.0
  %v1845 = vmax.f32 %v1356, 0.0
  %v1846 = vmax.f32 %v1361, 0.0
  %v1847 = vmax.f32 %v1366, 0.0
  %v1848 = vmax.f32 %v1371, 0.0
  %v1849 = vmax.f32 %v1376, 0.0
  %v1850 = vmax.f32 %v1381, 0.0
  %v1851 = vmax.f32 %v1386, 0.0
  %v1852 = vmax.f32 %v1391, 0.0
  %v1853 = vmax.f32 %v1396, 0.0
  %v1854 = vmax.f32 %v1401, 0.0
  %v1855 = vmax.f32 %v1406, 0.0
  %v1856 = vmax.f32 %v1411, 0.0
  %v1857 = vmax.f32 %v1416, 0.0
  %v1858 = vmax.f32 %v1421, 0.0
  %v1859 = vmax.f32 %v1426, 0.0
  %v1860 = vmax.f32 %v1431, 0.0
  %v1861 = vmax.f32 %v1436, 0.0
  %v1862 = vmax.f32 %v1441, 0.0
  %v1863 = vmax.f32 %v1446, 0.0
  %v1864 = vmax.f32 %v1451, 0.0
  %v1865 = vmax.f32 %v1456, 0.0
  %v1866 = vmax.f32 %v1461, 0.0
  %v1867 = vmax.f32 %v1466, 0.0
  %v1868 = vmax.f32 %v1471, 0.0
  %v1869 = vmax.f32 %v1476, 0.0
  %v1870 = vmax.f32 %v1481, 0.0
  %v1871 = vmax.f32 %v1486, 0.0
  %v1872 = vmax.f32 %v1491, 0.0
  %v1873 = vmax.f32 %v1496, 0.0
  %v1874 = vmax.f32 %v1501, 0.0
  %v1875 = vmax.f32 %v1506, 0.0
  %v1876 = vmax.f32 %v1511, 0.0
  %v1877 = vmax.f32 %v1516, 0.0
  %v1878 = vmax.f32 %v1521, 0.0
  %v1879 = vmax.f32 %v1526, 0.0
  %v1880 = vmax.f32 %v1531, 0.0
  %v1881 = vmax.f32 %v1536, 0.0
  %v1882 = vmax.f32 %v1541, 0.0
  %v1883 = vmax.f32 %v1546, 0.0
  %v1884 = vmax.f32 %v1551, 0.0
  %v1885 = vmax.f32 %v1556, 0.0
  %v1886 = vmax.f32 %v1561, 0.0
  %v1887 = vmax.f32 %v1566, 0.0
  %v1888 = vmax.f32 %v1571, 0.0
  %v1889 = vmax.f32 %v1576, 0.0
  %v1890 = vmax.f32 %v1581, 0.0
  %v1891 = vmax.f32 %v1586, 0.0
  %v1892 = vmax.f32 %v1591, 0.0
  %v1893 = vmax.f32 %v1596, 0.0
  %v1894 = vmax.f32 %v1601, 0.0
  %v1895 = vmax.f32 %v1606, 0.0
  %v1896 = vmax.f32 %v1611, 0.0
  %v1897 = vmax.f32 %v1616, 0.0
  %v1898 = vmax.f32 %v1621, 0.0
  %v1899 = vmax.f32 %v1626, 0.0
  %v1900 = vmax.f32 %v1631, 0.0
  %v1901 = vmax.f32 %v1636, 0.0
  %v1902 = vmax.f32 %v1641, 0.0
  %v1903 = vmax.f32 %v1646, 0.0
  %v1904 = vmax.f32 %v1651, 0.0
  %v1905 = vmax.f32 %v1656, 0.0
  %v1906 = vmax.f32 %v1661, 0.0
  %v1907 = vmax.f32 %v1666, 0.0
  %v1908 = vmax.f32 %v1671, 0.0
  %v1909 = vmax.f32 %v1676, 0.0
  %v1910 = vmax.f32 %v1681, 0.0
  %v1911 = vmax.f32 %v1686, 0.0
  %v1912 = vmax.f32 %v1691, 0.0
  %v1913 = vmax.f32 %v1696, 0.0
  %v1914 = vmax.f32 %v1701, 0.0
  %v1915 = vmax.f32 %v1706, 0.0
  %v1916 = vmax.f32 %v1711, 0.0
  %v1917 = vmax.f32 %v1716, 0.0
  %v1918 = vmax.f32 %v1721, 0.0
  %v1919 = vmax.f32 %v1726, 0.0
  %v1920 = vmax.f32 %v1731, 0.0
  %v1921 = vmax.f32 %v1736, 0.0
  %vm1922 = vcmask 261120
  %1923 = vst.msk [vmem:[%s3] sm:$0xff] %vm1922, %v1739
  %1924 = vst.msk [vmem:[%s3 + $0x8] sm:$0xff] %vm1922, %v1740
  %1925 = vst.msk [vmem:[%s3 + $0x10] sm:$0xff] %vm1922, %v1741
  %1926 = vst.msk [vmem:[%s3 + $0x18] sm:$0xff] %vm1922, %v1742
  %1927 = vst.msk [vmem:[%s3 + $0x20] sm:$0xff] %vm1922, %v1743
  %1928 = vst.msk [vmem:[%s3 + $0x28] sm:$0xff] %vm1922, %v1744
  %1929 = vst.msk [vmem:[%s3 + $0x30] sm:$0xff] %vm1922, %v1745
  %1930 = vst.msk [vmem:[%s3 + $0x38] sm:$0xff] %vm1922, %v1746
  %1931 = vst.msk [vmem:[%s3 + $0x40] sm:$0xff] %vm1922, %v1747
  %1932 = vst.msk [vmem:[%s3 + $0x48] sm:$0xff] %vm1922, %v1748
  %1933 = vst.msk [vmem:[%s3 + $0x50] sm:$0xff] %vm1922, %v1749
  %1934 = vst.msk [vmem:[%s3 + $0x58] sm:$0xff] %vm1922, %v1750
  %1935 = vst.msk [vmem:[%s3 + $0x60] sm:$0xff] %vm1922, %v1751
  %1936 = vst.msk [vmem:[%s3 + $0x68] sm:$0xff] %vm1922, %v1752
  %1937 = vst.msk [vmem:[%s3 + $0x70] sm:$0xff] %vm1922, %v1753
  %1938 = vst.msk [vmem:[%s3 + $0x78] sm:$0xff] %vm1922, %v1754
  %1939 = vst.msk [vmem:[%s3 + $0x80] sm:$0xff] %vm1922, %v1755
  %1940 = vst.msk [vmem:[%s3 + $0x88] sm:$0xff] %vm1922, %v1756
  %1941 = vst.msk [vmem:[%s3 + $0x90] sm:$0xff] %vm1922, %v1757
  %1942 = vst.msk [vmem:[%s3 + $0x98] sm:$0xff] %vm1922, %v1758
  %1943 = vst.msk [vmem:[%s3 + $0xa0] sm:$0xff] %vm1922, %v1759
  %1944 = vst.msk [vmem:[%s3 + $0xa8] sm:$0xff] %vm1922, %v1760
  %1945 = vst.msk [vmem:[%s3 + $0xb0] sm:$0xff] %vm1922, %v1761
  %1946 = vst.msk [vmem:[%s3 + $0xb8] sm:$0xff] %vm1922, %v1762
  %1947 = vst.msk [vmem:[%s3 + $0xc0] sm:$0xff] %vm1922, %v1763
  %1948 = vst.msk [vmem:[%s3 + $0xc8] sm:$0xff] %vm1922, %v1764
  %1949 = vst.msk [vmem:[%s3 + $0xd0] sm:$0xff] %vm1922, %v1765
  %1950 = vst.msk [vmem:[%s3 + $0xd8] sm:$0xff] %vm1922, %v1766
  %1951 = vst.msk [vmem:[%s3 + $0xe0] sm:$0xff] %vm1922, %v1767
  %1952 = vst.msk [vmem:[%s3 + $0xe8] sm:$0xff] %vm1922, %v1768
  %1953 = vst.msk [vmem:[%s3 + $0xf0] sm:$0xff] %vm1922, %v1769
  %1954 = vst.msk [vmem:[%s3 + $0xf8] sm:$0xff] %vm1922, %v1770
  %1955 = vst.msk [vmem:[%s3 + $0x100] sm:$0xff] %vm1922, %v1771
  %1956 = vst.msk [vmem:[%s3 + $0x108] sm:$0xff] %vm1922, %v1772
  %1957 = vst.msk [vmem:[%s3 + $0x110] sm:$0xff] %vm1922, %v1773
  %1958 = vst.msk [vmem:[%s3 + $0x118] sm:$0xff] %vm1922, %v1774
  %1959 = vst.msk [vmem:[%s3 + $0x120] sm:$0xff] %vm1922, %v1775
  %1960 = vst.msk [vmem:[%s3 + $0x128] sm:$0xff] %vm1922, %v1776
  %1961 = vst.msk [vmem:[%s3 + $0x130] sm:$0xff] %vm1922, %v1777
  %1962 = vst.msk [vmem:[%s3 + $0x138] sm:$0xff] %vm1922, %v1778
  %1963 = vst.msk [vmem:[%s3 + $0x140] sm:$0xff] %vm1922, %v1779
  %1964 = vst.msk [vmem:[%s3 + $0x148] sm:$0xff] %vm1922, %v1780
  %1965 = vst.msk [vmem:[%s3 + $0x150] sm:$0xff] %vm1922, %v1781
  %1966 = vst.msk [vmem:[%s3 + $0x158] sm:$0xff] %vm1922, %v1782
  %1967 = vst.msk [vmem:[%s3 + $0x160] sm:$0xff] %vm1922, %v1783
  %1968 = vst.msk [vmem:[%s3 + $0x168] sm:$0xff] %vm1922, %v1784
  %1969 = vst.msk [vmem:[%s3 + $0x170] sm:$0xff] %vm1922, %v1785
  %1970 = vst.msk [vmem:[%s3 + $0x178] sm:$0xff] %vm1922, %v1786
  %1971 = vst.msk [vmem:[%s3 + $0x180] sm:$0xff] %vm1922, %v1787
  %1972 = vst.msk [vmem:[%s3 + $0x188] sm:$0xff] %vm1922, %v1788
  %1973 = vst.msk [vmem:[%s3 + $0x190] sm:$0xff] %vm1922, %v1789
  %1974 = vst.msk [vmem:[%s3 + $0x198] sm:$0xff] %vm1922, %v1790
  %1975 = vst.msk [vmem:[%s3 + $0x1a0] sm:$0xff] %vm1922, %v1791
  %1976 = vst.msk [vmem:[%s3 + $0x1a8] sm:$0xff] %vm1922, %v1792
  %1977 = vst.msk [vmem:[%s3 + $0x1b0] sm:$0xff] %vm1922, %v1793
  %1978 = vst.msk [vmem:[%s3 + $0x1b8] sm:$0xff] %vm1922, %v1794
  %1979 = vst.msk [vmem:[%s3 + $0x1c0] sm:$0xff] %vm1922, %v1795
  %1980 = vst.msk [vmem:[%s3 + $0x1c8] sm:$0xff] %vm1922, %v1796
  %1981 = vst.msk [vmem:[%s3 + $0x1d0] sm:$0xff] %vm1922, %v1797
  %1982 = vst.msk [vmem:[%s3 + $0x1d8] sm:$0xff] %vm1922, %v1798
  %1983 = vst.msk [vmem:[%s3 + $0x1e0] sm:$0xff] %vm1922, %v1799
  %1984 = vst.msk [vmem:[%s3 + $0x1e8] sm:$0xff] %vm1922, %v1800
  %1985 = vst.msk [vmem:[%s3 + $0x1f0] sm:$0xff] %vm1922, %v1801
  %1986 = vst.msk [vmem:[%s3 + $0x1f8] sm:$0xff] %vm1922, %v1802
  %1987 = vst.msk [vmem:[%s3 + $0x200] sm:$0xff] %vm1922, %v1803
  %1988 = vst.msk [vmem:[%s3 + $0x208] sm:$0xff] %vm1922, %v1804
  %1989 = vst.msk [vmem:[%s3 + $0x210] sm:$0xff] %vm1922, %v1805
  %1990 = vst.msk [vmem:[%s3 + $0x218] sm:$0xff] %vm1922, %v1806
  %1991 = vst.msk [vmem:[%s3 + $0x220] sm:$0xff] %vm1922, %v1807
  %1992 = vst.msk [vmem:[%s3 + $0x228] sm:$0xff] %vm1922, %v1808
  %1993 = vst.msk [vmem:[%s3 + $0x230] sm:$0xff] %vm1922, %v1809
  %1994 = vst.msk [vmem:[%s3 + $0x238] sm:$0xff] %vm1922, %v1810
  %1995 = vst.msk [vmem:[%s3 + $0x240] sm:$0xff] %vm1922, %v1811
  %1996 = vst.msk [vmem:[%s3 + $0x248] sm:$0xff] %vm1922, %v1812
  %1997 = vst.msk [vmem:[%s3 + $0x250] sm:$0xff] %vm1922, %v1813
  %1998 = vst.msk [vmem:[%s3 + $0x258] sm:$0xff] %vm1922, %v1814
  %1999 = vst.msk [vmem:[%s3 + $0x260] sm:$0xff] %vm1922, %v1815
  %2000 = vst.msk [vmem:[%s3 + $0x268] sm:$0xff] %vm1922, %v1816
  %2001 = vst.msk [vmem:[%s3 + $0x270] sm:$0xff] %vm1922, %v1817
  %2002 = vst.msk [vmem:[%s3 + $0x278] sm:$0xff] %vm1922, %v1818
  %2003 = vst.msk [vmem:[%s3 + $0x280] sm:$0xff] %vm1922, %v1819
  %2004 = vst.msk [vmem:[%s3 + $0x288] sm:$0xff] %vm1922, %v1820
  %2005 = vst.msk [vmem:[%s3 + $0x290] sm:$0xff] %vm1922, %v1821
  %2006 = vst.msk [vmem:[%s3 + $0x298] sm:$0xff] %vm1922, %v1822
  %2007 = vst.msk [vmem:[%s3 + $0x2a0] sm:$0xff] %vm1922, %v1823
  %2008 = vst.msk [vmem:[%s3 + $0x2a8] sm:$0xff] %vm1922, %v1824
  %2009 = vst.msk [vmem:[%s3 + $0x2b0] sm:$0xff] %vm1922, %v1825
  %2010 = vst.msk [vmem:[%s3 + $0x2b8] sm:$0xff] %vm1922, %v1826
  %2011 = vst.msk [vmem:[%s3 + $0x2c0] sm:$0xff] %vm1922, %v1827
  %2012 = vst.msk [vmem:[%s3 + $0x2c8] sm:$0xff] %vm1922, %v1828
  %2013 = vst.msk [vmem:[%s3 + $0x2d0] sm:$0xff] %vm1922, %v1829
  %2014 = vst.msk [vmem:[%s3 + $0x2d8] sm:$0xff] %vm1922, %v1830
  %2015 = vst.msk [vmem:[%s3 + $0x2e0] sm:$0xff] %vm1922, %v1831
  %2016 = vst.msk [vmem:[%s3 + $0x2e8] sm:$0xff] %vm1922, %v1832
  %2017 = vst.msk [vmem:[%s3 + $0x2f0] sm:$0xff] %vm1922, %v1833
  %2018 = vst.msk [vmem:[%s3 + $0x2f8] sm:$0xff] %vm1922, %v1834
  %2019 = vst.msk [vmem:[%s3 + $0x300] sm:$0xff] %vm1922, %v1835
  %2020 = vst.msk [vmem:[%s3 + $0x308] sm:$0xff] %vm1922, %v1836
  %2021 = vst.msk [vmem:[%s3 + $0x310] sm:$0xff] %vm1922, %v1837
  %2022 = vst.msk [vmem:[%s3 + $0x318] sm:$0xff] %vm1922, %v1838
  %2023 = vst.msk [vmem:[%s3 + $0x320] sm:$0xff] %vm1922, %v1839
  %2024 = vst.msk [vmem:[%s3 + $0x328] sm:$0xff] %vm1922, %v1840
  %2025 = vst.msk [vmem:[%s3 + $0x330] sm:$0xff] %vm1922, %v1841
  %2026 = vst.msk [vmem:[%s3 + $0x338] sm:$0xff] %vm1922, %v1842
  %2027 = vst.msk [vmem:[%s3 + $0x340] sm:$0xff] %vm1922, %v1843
  %2028 = vst.msk [vmem:[%s3 + $0x348] sm:$0xff] %vm1922, %v1844
  %2029 = vst.msk [vmem:[%s3 + $0x350] sm:$0xff] %vm1922, %v1845
  %2030 = vst.msk [vmem:[%s3 + $0x358] sm:$0xff] %vm1922, %v1846
  %2031 = vst.msk [vmem:[%s3 + $0x360] sm:$0xff] %vm1922, %v1847
  %2032 = vst.msk [vmem:[%s3 + $0x368] sm:$0xff] %vm1922, %v1848
  %2033 = vst.msk [vmem:[%s3 + $0x370] sm:$0xff] %vm1922, %v1849
  %2034 = vst.msk [vmem:[%s3 + $0x378] sm:$0xff] %vm1922, %v1850
  %2035 = vst.msk [vmem:[%s3 + $0x380] sm:$0xff] %vm1922, %v1851
  %2036 = vst.msk [vmem:[%s3 + $0x388] sm:$0xff] %vm1922, %v1852
  %2037 = vst.msk [vmem:[%s3 + $0x390] sm:$0xff] %vm1922, %v1853
  %2038 = vst.msk [vmem:[%s3 + $0x398] sm:$0xff] %vm1922, %v1854
  %2039 = vst.msk [vmem:[%s3 + $0x3a0] sm:$0xff] %vm1922, %v1855
  %2040 = vst.msk [vmem:[%s3 + $0x3a8] sm:$0xff] %vm1922, %v1856
  %2041 = vst.msk [vmem:[%s3 + $0x3b0] sm:$0xff] %vm1922, %v1857
  %2042 = vst.msk [vmem:[%s3 + $0x3b8] sm:$0xff] %vm1922, %v1858
  %2043 = vst.msk [vmem:[%s3 + $0x3c0] sm:$0xff] %vm1922, %v1859
  %2044 = vst.msk [vmem:[%s3 + $0x3c8] sm:$0xff] %vm1922, %v1860
  %2045 = vst.msk [vmem:[%s3 + $0x3d0] sm:$0xff] %vm1922, %v1861
  %2046 = vst.msk [vmem:[%s3 + $0x3d8] sm:$0xff] %vm1922, %v1862
  %2047 = vst.msk [vmem:[%s3 + $0x3e0] sm:$0xff] %vm1922, %v1863
  %2048 = vst.msk [vmem:[%s3 + $0x3e8] sm:$0xff] %vm1922, %v1864
  %2049 = vst.msk [vmem:[%s3 + $0x3f0] sm:$0xff] %vm1922, %v1865
  %2050 = vst.msk [vmem:[%s3 + $0x3f8] sm:$0xff] %vm1922, %v1866
  %2051 = vst.msk [vmem:[%s3 + $0x400] sm:$0xff] %vm1922, %v1867
  %2052 = vst.msk [vmem:[%s3 + $0x408] sm:$0xff] %vm1922, %v1868
  %2053 = vst.msk [vmem:[%s3 + $0x410] sm:$0xff] %vm1922, %v1869
  %2054 = vst.msk [vmem:[%s3 + $0x418] sm:$0xff] %vm1922, %v1870
  %2055 = vst.msk [vmem:[%s3 + $0x420] sm:$0xff] %vm1922, %v1871
  %2056 = vst.msk [vmem:[%s3 + $0x428] sm:$0xff] %vm1922, %v1872
  %2057 = vst.msk [vmem:[%s3 + $0x430] sm:$0xff] %vm1922, %v1873
  %2058 = vst.msk [vmem:[%s3 + $0x438] sm:$0xff] %vm1922, %v1874
  %2059 = vst.msk [vmem:[%s3 + $0x440] sm:$0xff] %vm1922, %v1875
  %2060 = vst.msk [vmem:[%s3 + $0x448] sm:$0xff] %vm1922, %v1876
  %2061 = vst.msk [vmem:[%s3 + $0x450] sm:$0xff] %vm1922, %v1877
  %2062 = vst.msk [vmem:[%s3 + $0x458] sm:$0xff] %vm1922, %v1878
  %2063 = vst.msk [vmem:[%s3 + $0x460] sm:$0xff] %vm1922, %v1879
  %2064 = vst.msk [vmem:[%s3 + $0x468] sm:$0xff] %vm1922, %v1880
  %2065 = vst.msk [vmem:[%s3 + $0x470] sm:$0xff] %vm1922, %v1881
  %2066 = vst.msk [vmem:[%s3 + $0x478] sm:$0xff] %vm1922, %v1882
  %2067 = vst.msk [vmem:[%s3 + $0x480] sm:$0xff] %vm1922, %v1883
  %2068 = vst.msk [vmem:[%s3 + $0x488] sm:$0xff] %vm1922, %v1884
  %2069 = vst.msk [vmem:[%s3 + $0x490] sm:$0xff] %vm1922, %v1885
  %2070 = vst.msk [vmem:[%s3 + $0x498] sm:$0xff] %vm1922, %v1886
  %2071 = vst.msk [vmem:[%s3 + $0x4a0] sm:$0xff] %vm1922, %v1887
  %2072 = vst.msk [vmem:[%s3 + $0x4a8] sm:$0xff] %vm1922, %v1888
  %2073 = vst.msk [vmem:[%s3 + $0x4b0] sm:$0xff] %vm1922, %v1889
  %2074 = vst.msk [vmem:[%s3 + $0x4b8] sm:$0xff] %vm1922, %v1890
  %2075 = vst.msk [vmem:[%s3 + $0x4c0] sm:$0xff] %vm1922, %v1891
  %2076 = vst.msk [vmem:[%s3 + $0x4c8] sm:$0xff] %vm1922, %v1892
  %2077 = vst.msk [vmem:[%s3 + $0x4d0] sm:$0xff] %vm1922, %v1893
  %2078 = vst.msk [vmem:[%s3 + $0x4d8] sm:$0xff] %vm1922, %v1894
  %2079 = vst.msk [vmem:[%s3 + $0x4e0] sm:$0xff] %vm1922, %v1895
  %2080 = vst.msk [vmem:[%s3 + $0x4e8] sm:$0xff] %vm1922, %v1896
  %2081 = vst.msk [vmem:[%s3 + $0x4f0] sm:$0xff] %vm1922, %v1897
  %2082 = vst.msk [vmem:[%s3 + $0x4f8] sm:$0xff] %vm1922, %v1898
  %2083 = vst.msk [vmem:[%s3 + $0x500] sm:$0xff] %vm1922, %v1899
  %2084 = vst.msk [vmem:[%s3 + $0x508] sm:$0xff] %vm1922, %v1900
  %2085 = vst.msk [vmem:[%s3 + $0x510] sm:$0xff] %vm1922, %v1901
  %2086 = vst.msk [vmem:[%s3 + $0x518] sm:$0xff] %vm1922, %v1902
  %2087 = vst.msk [vmem:[%s3 + $0x520] sm:$0xff] %vm1922, %v1903
  %2088 = vst.msk [vmem:[%s3 + $0x528] sm:$0xff] %vm1922, %v1904
  %2089 = vst.msk [vmem:[%s3 + $0x530] sm:$0xff] %vm1922, %v1905
  %2090 = vst.msk [vmem:[%s3 + $0x538] sm:$0xff] %vm1922, %v1906
  %2091 = vst.msk [vmem:[%s3 + $0x540] sm:$0xff] %vm1922, %v1907
  %2092 = vst.msk [vmem:[%s3 + $0x548] sm:$0xff] %vm1922, %v1908
  %2093 = vst.msk [vmem:[%s3 + $0x550] sm:$0xff] %vm1922, %v1909
  %2094 = vst.msk [vmem:[%s3 + $0x558] sm:$0xff] %vm1922, %v1910
  %2095 = vst.msk [vmem:[%s3 + $0x560] sm:$0xff] %vm1922, %v1911
  %2096 = vst.msk [vmem:[%s3 + $0x568] sm:$0xff] %vm1922, %v1912
  %2097 = vst.msk [vmem:[%s3 + $0x570] sm:$0xff] %vm1922, %v1913
  %2098 = vst.msk [vmem:[%s3 + $0x578] sm:$0xff] %vm1922, %v1914
  %2099 = vst.msk [vmem:[%s3 + $0x580] sm:$0xff] %vm1922, %v1915
  %2100 = vst.msk [vmem:[%s3 + $0x588] sm:$0xff] %vm1922, %v1916
  %2101 = vst.msk [vmem:[%s3 + $0x590] sm:$0xff] %vm1922, %v1917
  %2102 = vst.msk [vmem:[%s3 + $0x598] sm:$0xff] %vm1922, %v1918
  %2103 = vst.msk [vmem:[%s3 + $0x5a0] sm:$0xff] %vm1922, %v1919
  %2104 = vst.msk [vmem:[%s3 + $0x5a8] sm:$0xff] %vm1922, %v1920
  %vm2105 = vcmask 254976
  %2106 = vst.msk [vmem:[%s3 + $0x5b0] sm:$0x3] %vm2105, %v1921
  // Predicated region
  $region14: #{_lambda_.4} parent=0 // pred_check
    _
  $region15: #{_lambda_.4} parent=0 // pred_check_branch
    %2108 = sbr.rel (0) target = $region17
  $region16: #{_lambda_.4} parent=0 // pred_region
    _
  $region17: #{_lambda_.4} parent=0 // pred_fallthru
    _
  // Predicated region
  $region18: #{_lambda_.4} parent=0 // pred_check
    _
  $region19: #{_lambda_.4} parent=0 // pred_check_branch
    %2110 = sbr.rel (0) target = $region21
  $region20: #{_lambda_.4} parent=0 // pred_region
    _
  $region21: #{_lambda_.4} parent=0 // pred_fallthru
    _

// kernel: _lambda_.5
$region0: #{_lambda_.5}
  #allocation0 [shape = 'u32[]', space=smem, size = 0x4, offset = 0x4, fixed_abs, tag = 'smem constant byte address 0x4 - core index']
  #allocation1 [shape = 'u32[144,128]{1,0:T(1,128)}', space=vmem, size = 0x12000, scoped, tag = 'internal scratch']
  %s0 = inlined_call_operand.vmem [shape: f32[128,128], index: 0, kind: input, shape index: {}]
  %s1 = inlined_call_operand.vmem [shape: f32[128,64], index: 1, kind: input, shape index: {}]
  %s2 = inlined_call_operand.vmem [shape: f32[1,64], index: 2, kind: input, shape index: {}]
  %s3 = inlined_call_operand.vmem [shape: f32[128,64], index: 3, kind: output, shape index: {}]
  %s4 = sld [smem:[#allocation0]]
  $region22: #{_lambda_.5} parent=0
    _
  %s6 = ssub.s32 1, %s4
  %s7 = scalar_select 0, %s6, %s4
  // Predicated region
  $region2: #{_lambda_.5} parent=0 // pred_check
    _
  $region3: #{_lambda_.5} parent=0 // pred_check_branch
    %9 = sbr.rel (0) target = $region5
  $region4: #{_lambda_.5} parent=0 // pred_region
    _
  $region5: #{_lambda_.5} parent=0 // pred_fallthru
    _
  // Predicated region
  $region6: #{_lambda_.5} parent=0 // pred_check
    _
  $region7: #{_lambda_.5} parent=0 // pred_check_branch
    %11 = sbr.rel (0) target = $region9
  $region8: #{_lambda_.5} parent=0 // pred_region
    _
  $region9: #{_lambda_.5} parent=0 // pred_fallthru
    _
  // Predicated region
  $region10: #{_lambda_.5} parent=0 // pred_check
    _
  $region11: #{_lambda_.5} parent=0 // pred_check_branch
    %13 = sbr.rel (0) target = $region13
  $region12: #{_lambda_.5} parent=0 // pred_region
    _
  $region13: #{_lambda_.5} parent=0 // pred_fallthru
    _
  %v14 = vld [vmem:[%s0] sm:$0xff]
  %v15 = vld [vmem:[%s0 + $0x8] sm:$0xff]
  %v16 = vld [vmem:[%s0 + $0x10] sm:$0xff]
  %v17 = vld [vmem:[%s0 + $0x18] sm:$0xff]
  %v18 = vld [vmem:[%s0 + $0x20] sm:$0xff]
  %v19 = vld [vmem:[%s0 + $0x28] sm:$0xff]
  %v20 = vld [vmem:[%s0 + $0x30] sm:$0xff]
  %v21 = vld [vmem:[%s0 + $0x38] sm:$0xff]
  %v22 = vld [vmem:[%s0 + $0x40] sm:$0xff]
  %v23 = vld [vmem:[%s0 + $0x48] sm:$0xff]
  %v24 = vld [vmem:[%s0 + $0x50] sm:$0xff]
  %v25 = vld [vmem:[%s0 + $0x58] sm:$0xff]
  %v26 = vld [vmem:[%s0 + $0x60] sm:$0xff]
  %v27 = vld [vmem:[%s0 + $0x68] sm:$0xff]
  %v28 = vld [vmem:[%s0 + $0x70] sm:$0xff]
  %v29 = vld [vmem:[%s0 + $0x78] sm:$0xff]
  %v30 = vld [vmem:[%s1] sm:$0xff]
  %v31 = vld [vmem:[%s1 + $0x8] sm:$0xff]
  %v32 = vld [vmem:[%s1 + $0x10] sm:$0xff]
  %v33 = vld [vmem:[%s1 + $0x18] sm:$0xff]
  %v34 = vld [vmem:[%s1 + $0x20] sm:$0xff]
  %v35 = vld [vmem:[%s1 + $0x28] sm:$0xff]
  %v36 = vld [vmem:[%s1 + $0x30] sm:$0xff]
  %v37 = vld [vmem:[%s1 + $0x38] sm:$0xff]
  %v38 = vld [vmem:[%s1 + $0x40] sm:$0xff]
  %v39 = vld [vmem:[%s1 + $0x48] sm:$0xff]
  %v40 = vld [vmem:[%s1 + $0x50] sm:$0xff]
  %v41 = vld [vmem:[%s1 + $0x58] sm:$0xff]
  %v42 = vld [vmem:[%s1 + $0x60] sm:$0xff]
  %v43 = vld [vmem:[%s1 + $0x68] sm:$0xff]
  %v44 = vld [vmem:[%s1 + $0x70] sm:$0xff]
  %v45 = vld [vmem:[%s1 + $0x78] sm:$0xff]
  %v46 = vld [vmem:[%s2] sm:$0x1]
  %v48 = vlaneseq
  %v49 = vshrl.u32 %v48, 7
  %v50 = vsub.s32 0, %v49
  %v51 = vrot.slane %v46, %v50
  %53 = vmatprep.subr.mxu0 0.0
  %54 = vmatpush1.msra.mxu0 %v30
  %55 = vmatprep.subr.mxu0 0.0
  %56 = vmatpush1.msra.mxu0 %v31
  %57 = vmatprep.subr.mxu0 0.0
  %58 = vmatpush1.msra.mxu0 %v32
  %59 = vmatprep.subr.mxu0 0.0
  %60 = vmatpush1.msra.mxu0 %v33
  %61 = vmatprep.subr.mxu0 0.0
  %62 = vmatpush1.msra.mxu0 %v34
  %63 = vmatprep.subr.mxu0 0.0
  %64 = vmatpush1.msra.mxu0 %v35
  %65 = vmatprep.subr.mxu0 0.0
  %66 = vmatpush1.msra.mxu0 %v36
  %67 = vmatprep.subr.mxu0 0.0
  %68 = vmatpush1.msra.mxu0 %v37
  %69 = vmatprep.subr.mxu0 0.0
  %70 = vmatpush1.msra.mxu0 %v38
  %71 = vmatprep.subr.mxu0 0.0
  %72 = vmatpush1.msra.mxu0 %v39
  %73 = vmatprep.subr.mxu0 0.0
  %74 = vmatpush1.msra.mxu0 %v40
  %75 = vmatprep.subr.mxu0 0.0
  %76 = vmatpush1.msra.mxu0 %v41
  %77 = vmatprep.subr.mxu0 0.0
  %78 = vmatpush1.msra.mxu0 %v42
  %79 = vmatprep.subr.mxu0 0.0
  %80 = vmatpush1.msra.mxu0 %v43
  %81 = vmatprep.subr.mxu0 0.0
  %82 = vmatpush1.msra.mxu0 %v44
  %83 = vmatprep.subr.mxu0 0.0
  %84 = vmatpush1.msra.mxu0 %v45
  %85 = vmatprep.subr.mxu0 0.0
  %86 = vmatpush1.msra.mxu0 0.0
  %87 = vmatprep.subr.mxu0 0.0
  %88 = vmatpush1.msra.mxu0 0.0
  %89 = vmatprep.subr.mxu0 0.0
  %90 = vmatpush1.msra.mxu0 0.0
  %91 = vmatprep.subr.mxu0 0.0
  %92 = vmatpush1.msra.mxu0 0.0
  %93 = vmatprep.subr.mxu0 0.0
  %94 = vmatpush1.msra.mxu0 0.0
  %95 = vmatprep.subr.mxu0 0.0
  %96 = vmatpush1.msra.mxu0 0.0
  %97 = vmatprep.subr.mxu0 0.0
  %98 = vmatpush1.msra.mxu0 0.0
  %99 = vmatprep.subr.mxu0 0.0
  %100 = vmatpush1.msra.mxu0 0.0
  %101 = vmatprep.subr.mxu0 0.0
  %102 = vmatpush1.msra.mxu0 0.0
  %103 = vmatprep.subr.mxu0 0.0
  %104 = vmatpush1.msra.mxu0 0.0
  %105 = vmatprep.subr.mxu0 0.0
  %106 = vmatpush1.msra.mxu0 0.0
  %107 = vmatprep.subr.mxu0 0.0
  %108 = vmatpush1.msra.mxu0 0.0
  %109 = vmatprep.subr.mxu0 0.0
  %110 = vmatpush1.msra.mxu0 0.0
  %111 = vmatprep.subr.mxu0 0.0
  %112 = vmatpush1.msra.mxu0 0.0
  %113 = vmatprep.subr.mxu0 0.0
  %114 = vmatpush1.msra.mxu0 0.0
  %115 = vmatprep.subr.mxu0 0.0
  %116 = vmatpush1.msra.mxu0 0.0
  %117 = vmatprep.mubr.f32.mxu0 0.0
  %118 = vmatmul.mubr.f32.gmra.mrb[0].mxu0 %v14
  %v119 = vpop.f32.mrb[0].mxu0
  %v120 = vadd.f32 %v51, %v119
  %v121 = vpop.f32.mrb[0].mxu0
  %122 = vmatprep.mubr.f32.mxu0 0.0
  %123 = vmatmul.mubr.f32.gmra.mrb[0].mxu0 %v15
  %v124 = vpop.f32.mrb[0].mxu0
  %v125 = vadd.f32 %v51, %v124
  %v126 = vpop.f32.mrb[0].mxu0
  %127 = vmatprep.mubr.f32.mxu0 0.0
  %128 = vmatmul.mubr.f32.gmra.mrb[0].mxu0 %v16
  %v129 = vpop.f32.mrb[0].mxu0
  %v130 = vadd.f32 %v51, %v129
  %v131 = vpop.f32.mrb[0].mxu0
  %132 = vmatprep.mubr.f32.mxu0 0.0
  %133 = vmatmul.mubr.f32.gmra.mrb[0].mxu0 %v17
  %v134 = vpop.f32.mrb[0].mxu0
  %v135 = vadd.f32 %v51, %v134
  %v136 = vpop.f32.mrb[0].mxu0
  %137 = vmatprep.mubr.f32.mxu0 0.0
  %138 = vmatmul.mubr.f32.gmra.mrb[0].mxu0 %v18
  %v139 = vpop.f32.mrb[0].mxu0
  %v140 = vadd.f32 %v51, %v139
  %v141 = vpop.f32.mrb[0].mxu0
  %142 = vmatprep.mubr.f32.mxu0 0.0
  %143 = vmatmul.mubr.f32.gmra.mrb[0].mxu0 %v19
  %v144 = vpop.f32.mrb[0].mxu0
  %v145 = vadd.f32 %v51, %v144
  %v146 = vpop.f32.mrb[0].mxu0
  %147 = vmatprep.mubr.f32.mxu0 0.0
  %148 = vmatmul.mubr.f32.gmra.mrb[0].mxu0 %v20
  %v149 = vpop.f32.mrb[0].mxu0
  %v150 = vadd.f32 %v51, %v149
  %v151 = vpop.f32.mrb[0].mxu0
  %152 = vmatprep.mubr.f32.mxu0 0.0
  %153 = vmatmul.mubr.f32.gmra.mrb[0].mxu0 %v21
  %v154 = vpop.f32.mrb[0].mxu0
  %v155 = vadd.f32 %v51, %v154
  %v156 = vpop.f32.mrb[0].mxu0
  %157 = vmatprep.mubr.f32.mxu0 0.0
  %158 = vmatmul.mubr.f32.gmra.mrb[0].mxu0 %v22
  %v159 = vpop.f32.mrb[0].mxu0
  %v160 = vadd.f32 %v51, %v159
  %v161 = vpop.f32.mrb[0].mxu0
  %162 = vmatprep.mubr.f32.mxu0 0.0
  %163 = vmatmul.mubr.f32.gmra.mrb[0].mxu0 %v23
  %v164 = vpop.f32.mrb[0].mxu0
  %v165 = vadd.f32 %v51, %v164
  %v166 = vpop.f32.mrb[0].mxu0
  %167 = vmatprep.mubr.f32.mxu0 0.0
  %168 = vmatmul.mubr.f32.gmra.mrb[0].mxu0 %v24
  %v169 = vpop.f32.mrb[0].mxu0
  %v170 = vadd.f32 %v51, %v169
  %v171 = vpop.f32.mrb[0].mxu0
  %172 = vmatprep.mubr.f32.mxu0 0.0
  %173 = vmatmul.mubr.f32.gmra.mrb[0].mxu0 %v25
  %v174 = vpop.f32.mrb[0].mxu0
  %v175 = vadd.f32 %v51, %v174
  %v176 = vpop.f32.mrb[0].mxu0
  %177 = vmatprep.mubr.f32.mxu0 0.0
  %178 = vmatmul.mubr.f32.gmra.mrb[0].mxu0 %v26
  %v179 = vpop.f32.mrb[0].mxu0
  %v180 = vadd.f32 %v51, %v179
  %v181 = vpop.f32.mrb[0].mxu0
  %182 = vmatprep.mubr.f32.mxu0 0.0
  %183 = vmatmul.mubr.f32.gmra.mrb[0].mxu0 %v27
  %v184 = vpop.f32.mrb[0].mxu0
  %v185 = vadd.f32 %v51, %v184
  %v186 = vpop.f32.mrb[0].mxu0
  %187 = vmatprep.mubr.f32.mxu0 0.0
  %188 = vmatmul.mubr.f32.gmra.mrb[0].mxu0 %v28
  %v189 = vpop.f32.mrb[0].mxu0
  %v190 = vadd.f32 %v51, %v189
  %v191 = vpop.f32.mrb[0].mxu0
  %192 = vmatprep.mubr.f32.mxu0 0.0
  %193 = vmatmul.mubr.f32.gmra.mrb[0].mxu0 %v29
  %v194 = vpop.f32.mrb[0].mxu0
  %v195 = vadd.f32 %v51, %v194
  %v196 = vpop.f32.mrb[0].mxu0
  %197 = vdwg.mxu0
  %v198 = vmax.f32 %v120, 0.0
  %v199 = vmax.f32 %v125, 0.0
  %v200 = vmax.f32 %v130, 0.0
  %v201 = vmax.f32 %v135, 0.0
  %v202 = vmax.f32 %v140, 0.0
  %v203 = vmax.f32 %v145, 0.0
  %v204 = vmax.f32 %v150, 0.0
  %v205 = vmax.f32 %v155, 0.0
  %v206 = vmax.f32 %v160, 0.0
  %v207 = vmax.f32 %v165, 0.0
  %v208 = vmax.f32 %v170, 0.0
  %v209 = vmax.f32 %v175, 0.0
  %v210 = vmax.f32 %v180, 0.0
  %v211 = vmax.f32 %v185, 0.0
  %v212 = vmax.f32 %v190, 0.0
  %v213 = vmax.f32 %v195, 0.0
  %vm214 = vcmask 523264
  %215 = vst.msk [vmem:[%s3] sm:$0xff] %vm214, %v198
  %216 = vst.msk [vmem:[%s3 + $0x8] sm:$0xff] %vm214, %v199
  %217 = vst.msk [vmem:[%s3 + $0x10] sm:$0xff] %vm214, %v200
  %218 = vst.msk [vmem:[%s3 + $0x18] sm:$0xff] %vm214, %v201
  %219 = vst.msk [vmem:[%s3 + $0x20] sm:$0xff] %vm214, %v202
  %220 = vst.msk [vmem:[%s3 + $0x28] sm:$0xff] %vm214, %v203
  %221 = vst.msk [vmem:[%s3 + $0x30] sm:$0xff] %vm214, %v204
  %222 = vst.msk [vmem:[%s3 + $0x38] sm:$0xff] %vm214, %v205
  %223 = vst.msk [vmem:[%s3 + $0x40] sm:$0xff] %vm214, %v206
  %224 = vst.msk [vmem:[%s3 + $0x48] sm:$0xff] %vm214, %v207
  %225 = vst.msk [vmem:[%s3 + $0x50] sm:$0xff] %vm214, %v208
  %226 = vst.msk [vmem:[%s3 + $0x58] sm:$0xff] %vm214, %v209
  %227 = vst.msk [vmem:[%s3 + $0x60] sm:$0xff] %vm214, %v210
  %228 = vst.msk [vmem:[%s3 + $0x68] sm:$0xff] %vm214, %v211
  %229 = vst.msk [vmem:[%s3 + $0x70] sm:$0xff] %vm214, %v212
  %230 = vst.msk [vmem:[%s3 + $0x78] sm:$0xff] %vm214, %v213
  // Predicated region
  $region14: #{_lambda_.5} parent=0 // pred_check
    _
  $region15: #{_lambda_.5} parent=0 // pred_check_branch
    %232 = sbr.rel (0) target = $region17
  $region16: #{_lambda_.5} parent=0 // pred_region
    _
  $region17: #{_lambda_.5} parent=0 // pred_fallthru
    _
  // Predicated region
  $region18: #{_lambda_.5} parent=0 // pred_check
    _
  $region19: #{_lambda_.5} parent=0 // pred_check_branch
    %234 = sbr.rel (0) target = $region21
  $region20: #{_lambda_.5} parent=0 // pred_region
    _
  $region21: #{_lambda_.5} parent=0 // pred_fallthru
    _

// kernel: _lambda_.6
$region0: #{_lambda_.6}
  #allocation0 [shape = 'u32[]', space=smem, size = 0x4, offset = 0x4, fixed_abs, tag = 'smem constant byte address 0x4 - core index']
  #allocation1 [shape = 'u32[144,128]{1,0:T(1,128)}', space=vmem, size = 0x12000, scoped, tag = 'internal scratch']
  %s0 = inlined_call_operand.vmem [shape: f32[18,256], index: 0, kind: input, shape index: {}]
  %s1 = inlined_call_operand.vmem [shape: f32[256,128], index: 1, kind: input, shape index: {}]
  %s2 = inlined_call_operand.vmem [shape: f32[1,128], index: 2, kind: input, shape index: {}]
  %s3 = inlined_call_operand.vmem [shape: f32[18,128], index: 3, kind: output, shape index: {}]
  %s4 = sld [smem:[#allocation0]]
  $region22: #{_lambda_.6} parent=0
    _
  %s6 = ssub.s32 1, %s4
  %s7 = scalar_select 0, %s6, %s4
  // Predicated region
  $region2: #{_lambda_.6} parent=0 // pred_check
    _
  $region3: #{_lambda_.6} parent=0 // pred_check_branch
    %9 = sbr.rel (0) target = $region5
  $region4: #{_lambda_.6} parent=0 // pred_region
    _
  $region5: #{_lambda_.6} parent=0 // pred_fallthru
    _
  // Predicated region
  $region6: #{_lambda_.6} parent=0 // pred_check
    _
  $region7: #{_lambda_.6} parent=0 // pred_check_branch
    %11 = sbr.rel (0) target = $region9
  $region8: #{_lambda_.6} parent=0 // pred_region
    _
  $region9: #{_lambda_.6} parent=0 // pred_fallthru
    _
  // Predicated region
  $region10: #{_lambda_.6} parent=0 // pred_check
    _
  $region11: #{_lambda_.6} parent=0 // pred_check_branch
    %13 = sbr.rel (0) target = $region13
  $region12: #{_lambda_.6} parent=0 // pred_region
    _
  $region13: #{_lambda_.6} parent=0 // pred_fallthru
    _
  %v14 = vld [vmem:[%s0] sm:$0xff]
  %v15 = vld [vmem:[%s0 + $0x8] sm:$0xff]
  %v16 = vld [vmem:[%s0 + $0x10] sm:$0xff]
  %v17 = vld [vmem:[%s0 + $0x18] sm:$0xff]
  %v18 = vld [vmem:[%s0 + $0x20] sm:$0x3]
  %v19 = vld [vmem:[%s0 + $0x28] sm:$0x3]
  %v20 = vld [vmem:[%s1] sm:$0xff]
  %v21 = vld [vmem:[%s1 + $0x8] sm:$0xff]
  %v22 = vld [vmem:[%s1 + $0x10] sm:$0xff]
  %v23 = vld [vmem:[%s1 + $0x18] sm:$0xff]
  %v24 = vld [vmem:[%s1 + $0x20] sm:$0xff]
  %v25 = vld [vmem:[%s1 + $0x28] sm:$0xff]
  %v26 = vld [vmem:[%s1 + $0x30] sm:$0xff]
  %v27 = vld [vmem:[%s1 + $0x38] sm:$0xff]
  %v28 = vld [vmem:[%s1 + $0x40] sm:$0xff]
  %v29 = vld [vmem:[%s1 + $0x48] sm:$0xff]
  %v30 = vld [vmem:[%s1 + $0x50] sm:$0xff]
  %v31 = vld [vmem:[%s1 + $0x58] sm:$0xff]
  %v32 = vld [vmem:[%s1 + $0x60] sm:$0xff]
  %v33 = vld [vmem:[%s1 + $0x68] sm:$0xff]
  %v34 = vld [vmem:[%s1 + $0x70] sm:$0xff]
  %v35 = vld [vmem:[%s1 + $0x78] sm:$0xff]
  %v36 = vld [vmem:[%s1 + $0x80] sm:$0xff]
  %v37 = vld [vmem:[%s1 + $0x88] sm:$0xff]
  %v38 = vld [vmem:[%s1 + $0x90] sm:$0xff]
  %v39 = vld [vmem:[%s1 + $0x98] sm:$0xff]
  %v40 = vld [vmem:[%s1 + $0xa0] sm:$0xff]
  %v41 = vld [vmem:[%s1 + $0xa8] sm:$0xff]
  %v42 = vld [vmem:[%s1 + $0xb0] sm:$0xff]
  %v43 = vld [vmem:[%s1 + $0xb8] sm:$0xff]
  %v44 = vld [vmem:[%s1 + $0xc0] sm:$0xff]
  %v45 = vld [vmem:[%s1 + $0xc8] sm:$0xff]
  %v46 = vld [vmem:[%s1 + $0xd0] sm:$0xff]
  %v47 = vld [vmem:[%s1 + $0xd8] sm:$0xff]
  %v48 = vld [vmem:[%s1 + $0xe0] sm:$0xff]
  %v49 = vld [vmem:[%s1 + $0xe8] sm:$0xff]
  %v50 = vld [vmem:[%s1 + $0xf0] sm:$0xff]
  %v51 = vld [vmem:[%s1 + $0xf8] sm:$0xff]
  %v52 = vld [vmem:[%s2] sm:$0x1]
  %v54 = vlaneseq
  %v55 = vshrl.u32 %v54, 7
  %v56 = vsub.s32 0, %v55
  %v57 = vrot.slane %v52, %v56
  %59 = vmatprep.subr.mxu0 0.0
  %60 = vmatpush1.msra.mxu0 %v20
  %61 = vmatprep.subr.mxu0 0.0
  %62 = vmatpush1.msra.mxu0 %v21
  %63 = vmatprep.subr.mxu0 0.0
  %64 = vmatpush1.msra.mxu0 %v22
  %65 = vmatprep.subr.mxu0 0.0
  %66 = vmatpush1.msra.mxu0 %v23
  %67 = vmatprep.subr.mxu0 0.0
  %68 = vmatpush1.msra.mxu0 %v24
  %69 = vmatprep.subr.mxu0 0.0
  %70 = vmatpush1.msra.mxu0 %v25
  %71 = vmatprep.subr.mxu0 0.0
  %72 = vmatpush1.msra.mxu0 %v26
  %73 = vmatprep.subr.mxu0 0.0
  %74 = vmatpush1.msra.mxu0 %v27
  %75 = vmatprep.subr.mxu0 0.0
  %76 = vmatpush1.msra.mxu0 %v28
  %77 = vmatprep.subr.mxu0 0.0
  %78 = vmatpush1.msra.mxu0 %v29
  %79 = vmatprep.subr.mxu0 0.0
  %80 = vmatpush1.msra.mxu0 %v30
  %81 = vmatprep.subr.mxu0 0.0
  %82 = vmatpush1.msra.mxu0 %v31
  %83 = vmatprep.subr.mxu0 0.0
  %84 = vmatpush1.msra.mxu0 %v32
  %85 = vmatprep.subr.mxu0 0.0
  %86 = vmatpush1.msra.mxu0 %v33
  %87 = vmatprep.subr.mxu0 0.0
  %88 = vmatpush1.msra.mxu0 %v34
  %89 = vmatprep.subr.mxu0 0.0
  %90 = vmatpush1.msra.mxu0 %v35
  %91 = vmatprep.subr.mxu0 0.0
  %92 = vmatpush1.msra.mxu0 %v36
  %93 = vmatprep.subr.mxu0 0.0
  %94 = vmatpush1.msra.mxu0 %v37
  %95 = vmatprep.subr.mxu0 0.0
  %96 = vmatpush1.msra.mxu0 %v38
  %97 = vmatprep.subr.mxu0 0.0
  %98 = vmatpush1.msra.mxu0 %v39
  %99 = vmatprep.subr.mxu0 0.0
  %100 = vmatpush1.msra.mxu0 %v40
  %101 = vmatprep.subr.mxu0 0.0
  %102 = vmatpush1.msra.mxu0 %v41
  %103 = vmatprep.subr.mxu0 0.0
  %104 = vmatpush1.msra.mxu0 %v42
  %105 = vmatprep.subr.mxu0 0.0
  %106 = vmatpush1.msra.mxu0 %v43
  %107 = vmatprep.subr.mxu0 0.0
  %108 = vmatpush1.msra.mxu0 %v44
  %109 = vmatprep.subr.mxu0 0.0
  %110 = vmatpush1.msra.mxu0 %v45
  %111 = vmatprep.subr.mxu0 0.0
  %112 = vmatpush1.msra.mxu0 %v46
  %113 = vmatprep.subr.mxu0 0.0
  %114 = vmatpush1.msra.mxu0 %v47
  %115 = vmatprep.subr.mxu0 0.0
  %116 = vmatpush1.msra.mxu0 %v48
  %117 = vmatprep.subr.mxu0 0.0
  %118 = vmatpush1.msra.mxu0 %v49
  %119 = vmatprep.subr.mxu0 0.0
  %120 = vmatpush1.msra.mxu0 %v50
  %121 = vmatprep.subr.mxu0 0.0
  %122 = vmatpush1.msra.mxu0 %v51
  %123 = vmatprep.mubr.f32.mxu0 %v15
  %124 = vmatmul.mubr.f32.gmra.mrb[0].mxu0 %v14
  %v125 = vpop.f32.mrb[0].mxu0
  %v126 = vadd.f32 %v57, %v125
  %v127 = vpop.f32.mrb[0].mxu0
  %128 = vmatprep.mubr.f32.mxu0 %v17
  %129 = vmatmul.mubr.f32.gmra.mrb[0].mxu0 %v16
  %v130 = vpop.f32.mrb[0].mxu0
  %v131 = vadd.f32 %v57, %v130
  %v132 = vpop.f32.mrb[0].mxu0
  %133 = vmatprep.mubr.f32.mxu0 %v19
  %134 = vmatmul.mubr.f32.gmra.mrb[0].mxu0 %v18
  %v135 = vpop.f32.mrb[0].mxu0
  %v136 = vadd.f32 %v57, %v135
  %v137 = vpop.f32.mrb[0].mxu0
  %138 = vdwg.mxu0
  %v139 = vmax.f32 %v126, 0.0
  %v140 = vmax.f32 %v131, 0.0
  %v141 = vmax.f32 %v136, 0.0
  %142 = vst [vmem:[%s3] sm:$0xff] %v139
  %143 = vst [vmem:[%s3 + $0x8] sm:$0xff] %v140
  %144 = vst [vmem:[%s3 + $0x10] sm:$0x3] %v141
  // Predicated region
  $region14: #{_lambda_.6} parent=0 // pred_check
    _
  $region15: #{_lambda_.6} parent=0 // pred_check_branch
    %146 = sbr.rel (0) target = $region17
  $region16: #{_lambda_.6} parent=0 // pred_region
    _
  $region17: #{_lambda_.6} parent=0 // pred_fallthru
    _
  // Predicated region
  $region18: #{_lambda_.6} parent=0 // pred_check
    _
  $region19: #{_lambda_.6} parent=0 // pred_check_branch
    %148 = sbr.rel (0) target = $region21
  $region20: #{_lambda_.6} parent=0 // pred_region
    _
  $region21: #{_lambda_.6} parent=0 // pred_fallthru
    _

// kernel: _lambda_.7
$region0: #{_lambda_.7}
  #allocation0 [shape = 'u32[]', space=smem, size = 0x4, offset = 0x4, fixed_abs, tag = 'smem constant byte address 0x4 - core index']
  #allocation1 [shape = 'u32[144,128]{1,0:T(1,128)}', space=vmem, size = 0x12000, scoped, tag = 'internal scratch']
  #allocation2 [shape = 'f32[2,256]{1,0:T(2,128)}', space=vmem, size = 0x800, scoped, tag = 'scratch operand']
  %s0 = inlined_call_operand.vmem [shape: f32[2,1152], index: 0, kind: input, shape index: {}]
  %s1 = inlined_call_operand.vmem [shape: bf16[1152,1024], index: 1, kind: input, shape index: {}]
  %s2 = inlined_call_operand.vmem [shape: f32[1,1024], index: 2, kind: input, shape index: {}]
  %s3 = inlined_call_operand.vmem [shape: bf16[1024,256], index: 3, kind: input, shape index: {}]
  %s4 = inlined_call_operand.vmem [shape: f32[1,256], index: 4, kind: input, shape index: {}]
  %s5 = inlined_call_operand.vmem [shape: f32[256,128], index: 5, kind: input, shape index: {}]
  %s6 = inlined_call_operand.vmem [shape: f32[1,128], index: 6, kind: input, shape index: {}]
  %s7 = inlined_call_operand.hbm [shape: f32[2,128], index: 7, kind: output, shape index: {}]
  %s8 = sld [smem:[#allocation0]]
  $region92: #{_lambda_.7} parent=0
    _
  %s10 = ssub.s32 1, %s8
  %s11 = scalar_select 0, %s10, %s8
  $region1: #{_lambda_.7} parent=0
    #allocation3 [shape = 'u8[2359296]{0}', space=vmem, size = 0x240000, scoped, tag = 'input window, operand 1']
    #allocation4 [shape = 'u8[1024]{0}', space=vmem, size = 0x400, scoped, tag = 'output window, operand 0, single buffered']
    #allocation5 [shape = 's32[2]{0}', space=sflag, size = 0x8, scoped, tag = 'scoped memory for _lambda_.7']
    %12 = vsyncpa [#allocation5], 0
    loop: start=0, step=1, limit=4
    $region2: #{_lambda_.7} parent=1 // loop_pre_header
      _
    $region3: #{_lambda_.7} parent=1 // loop_header
      %s14 = sphi 0, %s18
      %p15 = scmp.ge.s32.totalorder %s14, 4
      %s22 = sphi 0, %s22
      %s24 = sphi 0, %s22
      %s25 = sphi 0, %s24
      %s39 = sphi 0, %s25
      %s45 = sphi 0, %s47
      %s48 = sphi 0, %s45
      %s49 = sphi 0, %s48
      %s65 = sphi 0, %s49
      %s71 = sphi 0, %s73
      %s74 = sphi 0, %s71
      %s75 = sphi 0, %s74
      %s91 = sphi 0, %s75
      %s97 = sphi 0, %s99
      %s100 = sphi 0, %s97
      %s101 = sphi 0, %s100
      %s117 = sphi 0, %s101
      %s121 = sphi 0, %s121
      %s123 = sphi 0, %s121
      %s124 = sphi 0, %s123
      %s138 = sphi 0, %s124
      %s142 = sphi 0, %s142
      %s144 = sphi 0, %s142
      %s145 = sphi 0, %s144
      %s159 = sphi 0, %s145
      %s163 = sphi 0, %s163
      %s165 = sphi 0, %s163
      %s166 = sphi 0, %s165
      %s180 = sphi 0, %s166
      %s184 = sphi 0, %s184
      %s186 = sphi 0, %s184
      %s187 = sphi 0, %s186
      %s201 = sphi 0, %s187
    $region4: #{_lambda_.7} parent=1 // loop_header_branch
      %17 = sbr.rel (%p15) target = $region8
    $region5: #{_lambda_.7} parent=1 // loop_body
      %s19 = ssub.s32 %s14, 1
      %s20 = ssub.s32 %s14, 2
      %s21 = sadd.s32 %s14, 1
      %s23 = sadd.s32 %s22, 1
      %p26 = scmp.eq.s32.totalorder %s14, 1
      %p27 = scmp.ne.s32.totalorder %s22, %s24
      %p28 = scmp.eq.s32.totalorder %s14, 0
      %p29 = por %p27, %p28
      %p30 = scmp.ne.s32.totalorder %s22, %s24
      %p31 = scmp.eq.s32.totalorder %s19, 1
      %p32 = por %p30, %p31
      %p33 = scmp.ne.s32.totalorder %s24, %s25
      %p34 = scmp.eq.s32.totalorder %s19, 0
      %p35 = por %p33, %p34
      %p36 = scmp.ne.s32.totalorder %s24, %s25
      %p37 = scmp.eq.s32.totalorder %s20, 1
      %p38 = por %p36, %p37
      %p40 = scmp.ne.s32.totalorder %s25, %s39
      %p41 = scmp.eq.s32.totalorder %s20, 0
      %p42 = por %p40, %p41
      %s43 = ssub.s32 %s14, %s21
      %p44 = scmp.eq.s32.totalorder %s43, 0
      %s46 = sadd.s32 %s45, 1
      %s47 = scalar_select %p44, %s45, %s46
      %p50 = pneg %p44
      %p51 = scmp.eq.s32.totalorder %s14, 1
      %p52 = por %p50, %p51
      %p53 = scmp.ne.s32.totalorder %s45, %s48
      %p54 = scmp.eq.s32.totalorder %s14, 0
      %p55 = por %p53, %p54
      %p56 = scmp.ne.s32.totalorder %s45, %s48
      %p57 = scmp.eq.s32.totalorder %s19, 1
      %p58 = por %p56, %p57
      %p59 = scmp.ne.s32.totalorder %s48, %s49
      %p60 = scmp.eq.s32.totalorder %s19, 0
      %p61 = por %p59, %p60
      %p62 = scmp.ne.s32.totalorder %s48, %s49
      %p63 = scmp.eq.s32.totalorder %s20, 1
      %p64 = por %p62, %p63
      %p66 = scmp.ne.s32.totalorder %s49, %s65
      %p67 = scmp.eq.s32.totalorder %s20, 0
      %p68 = por %p66, %p67
      %s69 = ssub.s32 %s14, %s21
      %p70 = scmp.eq.s32.totalorder %s69, 0
      %s72 = sadd.s32 %s71, 1
      %s73 = scalar_select %p70, %s71, %s72
      %p76 = pneg %p70
      %p77 = scmp.eq.s32.totalorder %s14, 1
      %p78 = por %p76, %p77
      %p79 = scmp.ne.s32.totalorder %s71, %s74
      %p80 = scmp.eq.s32.totalorder %s14, 0
      %p81 = por %p79, %p80
      %p82 = scmp.ne.s32.totalorder %s71, %s74
      %p83 = scmp.eq.s32.totalorder %s19, 1
      %p84 = por %p82, %p83
      %p85 = scmp.ne.s32.totalorder %s74, %s75
      %p86 = scmp.eq.s32.totalorder %s19, 0
      %p87 = por %p85, %p86
      %p88 = scmp.ne.s32.totalorder %s74, %s75
      %p89 = scmp.eq.s32.totalorder %s20, 1
      %p90 = por %p88, %p89
      %p92 = scmp.ne.s32.totalorder %s75, %s91
      %p93 = scmp.eq.s32.totalorder %s20, 0
      %p94 = por %p92, %p93
      %s95 = ssub.s32 %s14, %s21
      %p96 = scmp.eq.s32.totalorder %s95, 0
      %s98 = sadd.s32 %s97, 1
      %s99 = scalar_select %p96, %s97, %s98
      %p102 = pneg %p96
      %p103 = scmp.eq.s32.totalorder %s14, 1
      %p104 = por %p102, %p103
      %p105 = scmp.ne.s32.totalorder %s97, %s100
      %p106 = scmp.eq.s32.totalorder %s14, 0
      %p107 = por %p105, %p106
      %p108 = scmp.ne.s32.totalorder %s97, %s100
      %p109 = scmp.eq.s32.totalorder %s19, 1
      %p110 = por %p108, %p109
      %p111 = scmp.ne.s32.totalorder %s100, %s101
      %p112 = scmp.eq.s32.totalorder %s19, 0
      %p113 = por %p111, %p112
      %p114 = scmp.ne.s32.totalorder %s100, %s101
      %p115 = scmp.eq.s32.totalorder %s20, 1
      %p116 = por %p114, %p115
      %p118 = scmp.ne.s32.totalorder %s101, %s117
      %p119 = scmp.eq.s32.totalorder %s20, 0
      %p120 = por %p118, %p119
      %s122 = sadd.s32 %s121, 1
      %p125 = scmp.eq.s32.totalorder %s14, 1
      %p126 = scmp.ne.s32.totalorder %s121, %s123
      %p127 = scmp.eq.s32.totalorder %s14, 0
      %p128 = por %p126, %p127
      %p129 = scmp.ne.s32.totalorder %s121, %s123
      %p130 = scmp.eq.s32.totalorder %s19, 1
      %p131 = por %p129, %p130
      %p132 = scmp.ne.s32.totalorder %s123, %s124
      %p133 = scmp.eq.s32.totalorder %s19, 0
      %p134 = por %p132, %p133
      %p135 = scmp.ne.s32.totalorder %s123, %s124
      %p136 = scmp.eq.s32.totalorder %s20, 1
      %p137 = por %p135, %p136
      %p139 = scmp.ne.s32.totalorder %s124, %s138
      %p140 = scmp.eq.s32.totalorder %s20, 0
      %p141 = por %p139, %p140
      %s143 = sadd.s32 %s142, 1
      %p146 = scmp.eq.s32.totalorder %s14, 1
      %p147 = scmp.ne.s32.totalorder %s142, %s144
      %p148 = scmp.eq.s32.totalorder %s14, 0
      %p149 = por %p147, %p148
      %p150 = scmp.ne.s32.totalorder %s142, %s144
      %p151 = scmp.eq.s32.totalorder %s19, 1
      %p152 = por %p150, %p151
      %p153 = scmp.ne.s32.totalorder %s144, %s145
      %p154 = scmp.eq.s32.totalorder %s19, 0
      %p155 = por %p153, %p154
      %p156 = scmp.ne.s32.totalorder %s144, %s145
      %p157 = scmp.eq.s32.totalorder %s20, 1
      %p158 = por %p156, %p157
      %p160 = scmp.ne.s32.totalorder %s145, %s159
      %p161 = scmp.eq.s32.totalorder %s20, 0
      %p162 = por %p160, %p161
      %s164 = sadd.s32 %s163, 1
      %p167 = scmp.eq.s32.totalorder %s14, 1
      %p168 = scmp.ne.s32.totalorder %s163, %s165
      %p169 = scmp.eq.s32.totalorder %s14, 0
      %p170 = por %p168, %p169
      %p171 = scmp.ne.s32.totalorder %s163, %s165
      %p172 = scmp.eq.s32.totalorder %s19, 1
      %p173 = por %p171, %p172
      %p174 = scmp.ne.s32.totalorder %s165, %s166
      %p175 = scmp.eq.s32.totalorder %s19, 0
      %p176 = por %p174, %p175
      %p177 = scmp.ne.s32.totalorder %s165, %s166
      %p178 = scmp.eq.s32.totalorder %s20, 1
      %p179 = por %p177, %p178
      %p181 = scmp.ne.s32.totalorder %s166, %s180
      %p182 = scmp.eq.s32.totalorder %s20, 0
      %p183 = por %p181, %p182
      %s185 = sadd.s32 %s184, 1
      %p188 = scmp.eq.s32.totalorder %s14, 1
      %p189 = scmp.ne.s32.totalorder %s184, %s186
      %p190 = scmp.eq.s32.totalorder %s14, 0
      %p191 = por %p189, %p190
      %p192 = scmp.ne.s32.totalorder %s184, %s186
      %p193 = scmp.eq.s32.totalorder %s19, 1
      %p194 = por %p192, %p193
      %p195 = scmp.ne.s32.totalorder %s186, %s187
      %p196 = scmp.eq.s32.totalorder %s19, 0
      %p197 = por %p195, %p196
      %p198 = scmp.ne.s32.totalorder %s186, %s187
      %p199 = scmp.eq.s32.totalorder %s20, 1
      %p200 = por %p198, %p199
      %p202 = scmp.ne.s32.totalorder %s187, %s201
      %p203 = scmp.eq.s32.totalorder %s20, 0
      %p204 = por %p202, %p203
      %p205 = scmp.le.s32.totalorder 1, %s14
      %p206 = scmp.lt.s32.totalorder %s14, 3
      %p207 = pnand %p205, %p206
      %p208 = pneg %p207
      // Predicated region
      $region9: #{_lambda_.7} parent=5 // pred_check
        _
      $region10: #{_lambda_.7} parent=5 // pred_check_branch
        %210 = sbr.rel (%p207) target = $region12
      $region11: #{_lambda_.7} parent=5 // pred_region
        %s211 = ssub.s32 %s14, 1
        // Predicated region
        $region13: #{_lambda_.7} parent=11 // pred_check
          %p212 = pneg %p35
        $region14: #{_lambda_.7} parent=11 // pred_check_branch
          %214 = sbr.rel (%p212) target = $region16
        $region15: #{_lambda_.7} parent=11 // pred_region
          _
        $region16: #{_lambda_.7} parent=11 // pred_fallthru
          _
        // Predicated region
        $region17: #{_lambda_.7} parent=11 // pred_check
          %p215 = pneg %p134
        $region18: #{_lambda_.7} parent=11 // pred_check_branch
          %217 = sbr.rel (%p215) target = $region20
        $region19: #{_lambda_.7} parent=11 // pred_region
          _
        $region20: #{_lambda_.7} parent=11 // pred_fallthru
          _
        // Predicated region
        $region21: #{_lambda_.7} parent=11 // pred_check
          %p218 = pneg %p155
        $region22: #{_lambda_.7} parent=11 // pred_check_branch
          %220 = sbr.rel (%p218) target = $region24
        $region23: #{_lambda_.7} parent=11 // pred_region
          _
        $region24: #{_lambda_.7} parent=11 // pred_fallthru
          _
        // Predicated region
        $region25: #{_lambda_.7} parent=11 // pred_check
          %p221 = pneg %p176
        $region26: #{_lambda_.7} parent=11 // pred_check_branch
          %223 = sbr.rel (%p221) target = $region28
        $region27: #{_lambda_.7} parent=11 // pred_region
          _
        $region28: #{_lambda_.7} parent=11 // pred_fallthru
          _
      $region12: #{_lambda_.7} parent=5 // pred_fallthru
        _
      %p224 = scmp.lt.s32.totalorder %s14, 2
      // Predicated region
      $region29: #{_lambda_.7} parent=5 // pred_check
        %p225 = pneg %p224
      $region30: #{_lambda_.7} parent=5 // pred_check_branch
        %227 = sbr.rel (%p225) target = $region32
      $region31: #{_lambda_.7} parent=5 // pred_region
        // Predicated region
        $region33: #{_lambda_.7} parent=31 // pred_check
          %p228 = pneg %p55
        $region34: #{_lambda_.7} parent=31 // pred_check_branch
          %230 = sbr.rel (%p228) target = $region36
        $region35: #{_lambda_.7} parent=31 // pred_region
          %s231 = sand.u32 %s45, 1
          %s232 = sand.u32 %s45, 1
          %s233 = smul.addr %s232, 2304
          %s234 = scalar_lea.vmem [#allocation3], %s233
          %s235 = smul.u32 4, %s14
          %s236 = smul.addr %s235, 4
          %s237 = scalar_lea.vmem %s1, %s236
          // Predicated region
          $region37: #{_lambda_.7} parent=35 // pred_check
            _
          $region38: #{_lambda_.7} parent=35 // pred_check_branch
            %239 = sbr.rel (0) target = $region40
          $region39: #{_lambda_.7} parent=35 // pred_region
            // Predicated region
            $region41: #{_lambda_.7} parent=39 // pred_check
              _
            $region42: #{_lambda_.7} parent=39 // pred_check_branch
              %241 = sbr.rel (0) target = $region44
            $region43: #{_lambda_.7} parent=39 // pred_region
              loop: start=0, step=1, limit=1
              $region45: #{_lambda_.7} parent=43 // loop_pre_header
                _
              $region46: #{_lambda_.7} parent=43 // loop_header
                %s243 = sphi 0, %s247
                %p244 = scmp.ge.s32.totalorder %s243, 1
                %s248 = sphi %s237, %s237
                %s249 = sphi %s234, %s234
              $region47: #{_lambda_.7} parent=43 // loop_header_branch
                %246 = sbr.rel (%p244) target = $region51
              $region48: #{_lambda_.7} parent=43 // loop_body
                %v250 = vld [vmem:[%s248] sm:$0xff]
                %251 = vst [vmem:[%s249] sm:$0xff] %v250
                %v252 = vld [vmem:[%s248 + $0x8] sm:$0xff]
                %253 = vst [vmem:[%s249 + $0x8] sm:$0xff] %v252
                %v254 = vld [vmem:[%s248 + $0x20] sm:$0xff]
                %255 = vst [vmem:[%s249 + $0x10] sm:$0xff] %v254
                %v256 = vld [vmem:[%s248 + $0x28] sm:$0xff]
                %257 = vst [vmem:[%s249 + $0x18] sm:$0xff] %v256
                %v258 = vld [vmem:[%s248 + $0x40] sm:$0xff]
                %259 = vst [vmem:[%s249 + $0x20] sm:$0xff] %v258
                %v260 = vld [vmem:[%s248 + $0x48] sm:$0xff]
                %261 = vst [vmem:[%s249 + $0x28] sm:$0xff] %v260
                %v262 = vld [vmem:[%s248 + $0x60] sm:$0xff]
                %263 = vst [vmem:[%s249 + $0x30] sm:$0xff] %v262
                %v264 = vld [vmem:[%s248 + $0x68] sm:$0xff]
                %265 = vst [vmem:[%s249 + $0x38] sm:$0xff] %v264
                %v266 = vld [vmem:[%s248 + $0x80] sm:$0xff]
                %267 = vst [vmem:[%s249 + $0x40] sm:$0xff] %v266
                %v268 = vld [vmem:[%s248 + $0x88] sm:$0xff]
                %269 = vst [vmem:[%s249 + $0x48] sm:$0xff] %v268
                %v270 = vld [vmem:[%s248 + $0xa0] sm:$0xff]
                %271 = vst [vmem:[%s249 + $0x50] sm:$0xff] %v270
                %v272 = vld [vmem:[%s248 + $0xa8] sm:$0xff]
                %273 = vst [vmem:[%s249 + $0x58] sm:$0xff] %v272
                %v274 = vld [vmem:[%s248 + $0xc0] sm:$0xff]
                %275 = vst [vmem:[%s249 + $0x60] sm:$0xff] %v274
                %v276 = vld [vmem:[%s248 + $0xc8] sm:$0xff]
                %277 = vst [vmem:[%s249 + $0x68] sm:$0xff] %v276
                %v278 = vld [vmem:[%s248 + $0xe0] sm:$0xff]
                %279 = vst [vmem:[%s249 + $0x70] sm:$0xff] %v278
                %v280 = vld [vmem:[%s248 + $0xe8] sm:$0xff]
                %281 = vst [vmem:[%s249 + $0x78] sm:$0xff] %v280
                %v282 = vld [vmem:[%s248 + $0x100] sm:$0xff]
                %283 = vst [vmem:[%s249 + $0x80] sm:$0xff] %v282
                %v284 = vld [vmem:[%s248 + $0x108] sm:$0xff]
                %285 = vst [vmem:[%s249 + $0x88] sm:$0xff] %v284
                %v286 = vld [vmem:[%s248 + $0x120] sm:$0xff]
                %287 = vst [vmem:[%s249 + $0x90] sm:$0xff] %v286
                %v288 = vld [vmem:[%s248 + $0x128] sm:$0xff]
                %289 = vst [vmem:[%s249 + $0x98] sm:$0xff] %v288
                %v290 = vld [vmem:[%s248 + $0x140] sm:$0xff]
                %291 = vst [vmem:[%s249 + $0xa0] sm:$0xff] %v290
                %v292 = vld [vmem:[%s248 + $0x148] sm:$0xff]
                %293 = vst [vmem:[%s249 + $0xa8] sm:$0xff] %v292
                %v294 = vld [vmem:[%s248 + $0x160] sm:$0xff]
                %295 = vst [vmem:[%s249 + $0xb0] sm:$0xff] %v294
                %v296 = vld [vmem:[%s248 + $0x168] sm:$0xff]
                %297 = vst [vmem:[%s249 + $0xb8] sm:$0xff] %v296
                %v298 = vld [vmem:[%s248 + $0x180] sm:$0xff]
                %299 = vst [vmem:[%s249 + $0xc0] sm:$0xff] %v298
                %v300 = vld [vmem:[%s248 + $0x188] sm:$0xff]
                %301 = vst [vmem:[%s249 + $0xc8] sm:$0xff] %v300
                %v302 = vld [vmem:[%s248 + $0x1a0] sm:$0xff]
                %303 = vst [vmem:[%s249 + $0xd0] sm:$0xff] %v302
                %v304 = vld [vmem:[%s248 + $0x1a8] sm:$0xff]
                %305 = vst [vmem:[%s249 + $0xd8] sm:$0xff] %v304
                %v306 = vld [vmem:[%s248 + $0x1c0] sm:$0xff]
                %307 = vst [vmem:[%s249 + $0xe0] sm:$0xff] %v306
                %v308 = vld [vmem:[%s248 + $0x1c8] sm:$0xff]
                %309 = vst [vmem:[%s249 + $0xe8] sm:$0xff] %v308
                %v310 = vld [vmem:[%s248 + $0x1e0] sm:$0xff]
                %311 = vst [vmem:[%s249 + $0xf0] sm:$0xff] %v310
                %v312 = vld [vmem:[%s248 + $0x1e8] sm:$0xff]
                %313 = vst [vmem:[%s249 + $0xf8] sm:$0xff] %v312
                %v314 = vld [vmem:[%s248 + $0x200] sm:$0xff]
                %315 = vst [vmem:[%s249 + $0x100] sm:$0xff] %v314
                %v316 = vld [vmem:[%s248 + $0x208] sm:$0xff]
                %317 = vst [vmem:[%s249 + $0x108] sm:$0xff] %v316
                %v318 = vld [vmem:[%s248 + $0x220] sm:$0xff]
                %319 = vst [vmem:[%s249 + $0x110] sm:$0xff] %v318
                %v320 = vld [vmem:[%s248 + $0x228] sm:$0xff]
                %321 = vst [vmem:[%s249 + $0x118] sm:$0xff] %v320
                %v322 = vld [vmem:[%s248 + $0x240] sm:$0xff]
                %323 = vst [vmem:[%s249 + $0x120] sm:$0xff] %v322
                %v324 = vld [vmem:[%s248 + $0x248] sm:$0xff]
                %325 = vst [vmem:[%s249 + $0x128] sm:$0xff] %v324
                %v326 = vld [vmem:[%s248 + $0x260] sm:$0xff]
                %327 = vst [vmem:[%s249 + $0x130] sm:$0xff] %v326
                %v328 = vld [vmem:[%s248 + $0x268] sm:$0xff]
                %329 = vst [vmem:[%s249 + $0x138] sm:$0xff] %v328
                %v330 = vld [vmem:[%s248 + $0x280] sm:$0xff]
                %331 = vst [vmem:[%s249 + $0x140] sm:$0xff] %v330
                %v332 = vld [vmem:[%s248 + $0x288] sm:$0xff]
                %333 = vst [vmem:[%s249 + $0x148] sm:$0xff] %v332
                %v334 = vld [vmem:[%s248 + $0x2a0] sm:$0xff]
                %335 = vst [vmem:[%s249 + $0x150] sm:$0xff] %v334
                %v336 = vld [vmem:[%s248 + $0x2a8] sm:$0xff]
                %337 = vst [vmem:[%s249 + $0x158] sm:$0xff] %v336
                %v338 = vld [vmem:[%s248 + $0x2c0] sm:$0xff]
                %339 = vst [vmem:[%s249 + $0x160] sm:$0xff] %v338
                %v340 = vld [vmem:[%s248 + $0x2c8] sm:$0xff]
                %341 = vst [vmem:[%s249 + $0x168] sm:$0xff] %v340
                %v342 = vld [vmem:[%s248 + $0x2e0] sm:$0xff]
                %343 = vst [vmem:[%s249 + $0x170] sm:$0xff] %v342
                %v344 = vld [vmem:[%s248 + $0x2e8] sm:$0xff]
                %345 = vst [vmem:[%s249 + $0x178] sm:$0xff] %v344
                %v346 = vld [vmem:[%s248 + $0x300] sm:$0xff]
                %347 = vst [vmem:[%s249 + $0x180] sm:$0xff] %v346
                %v348 = vld [vmem:[%s248 + $0x308] sm:$0xff]
                %349 = vst [vmem:[%s249 + $0x188] sm:$0xff] %v348
                %v350 = vld [vmem:[%s248 + $0x320] sm:$0xff]
                %351 = vst [vmem:[%s249 + $0x190] sm:$0xff] %v350
                %v352 = vld [vmem:[%s248 + $0x328] sm:$0xff]
                %353 = vst [vmem:[%s249 + $0x198] sm:$0xff] %v352
                %v354 = vld [vmem:[%s248 + $0x340] sm:$0xff]
                %355 = vst [vmem:[%s249 + $0x1a0] sm:$0xff] %v354
                %v356 = vld [vmem:[%s248 + $0x348] sm:$0xff]
                %357 = vst [vmem:[%s249 + $0x1a8] sm:$0xff] %v356
                %v358 = vld [vmem:[%s248 + $0x360] sm:$0xff]
                %359 = vst [vmem:[%s249 + $0x1b0] sm:$0xff] %v358
                %v360 = vld [vmem:[%s248 + $0x368] sm:$0xff]
                %361 = vst [vmem:[%s249 + $0x1b8] sm:$0xff] %v360
                %v362 = vld [vmem:[%s248 + $0x380] sm:$0xff]
                %363 = vst [vmem:[%s249 + $0x1c0] sm:$0xff] %v362
                %v364 = vld [vmem:[%s248 + $0x388] sm:$0xff]
                %365 = vst [vmem:[%s249 + $0x1c8] sm:$0xff] %v364
                %v366 = vld [vmem:[%s248 + $0x3a0] sm:$0xff]
                %367 = vst [vmem:[%s249 + $0x1d0] sm:$0xff] %v366
                %v368 = vld [vmem:[%s248 + $0x3a8] sm:$0xff]
                %369 = vst [vmem:[%s249 + $0x1d8] sm:$0xff] %v368
                %v370 = vld [vmem:[%s248 + $0x3c0] sm:$0xff]
                %371 = vst [vmem:[%s249 + $0x1e0] sm:$0xff] %v370
                %v372 = vld [vmem:[%s248 + $0x3c8] sm:$0xff]
                %373 = vst [vmem:[%s249 + $0x1e8] sm:$0xff] %v372
                %v374 = vld [vmem:[%s248 + $0x3e0] sm:$0xff]
                %375 = vst [vmem:[%s249 + $0x1f0] sm:$0xff] %v374
                %v376 = vld [vmem:[%s248 + $0x3e8] sm:$0xff]
                %377 = vst [vmem:[%s249 + $0x1f8] sm:$0xff] %v376
                %v378 = vld [vmem:[%s248 + $0x400] sm:$0xff]
                %379 = vst [vmem:[%s249 + $0x200] sm:$0xff] %v378
                %v380 = vld [vmem:[%s248 + $0x408] sm:$0xff]
                %381 = vst [vmem:[%s249 + $0x208] sm:$0xff] %v380
                %v382 = vld [vmem:[%s248 + $0x420] sm:$0xff]
                %383 = vst [vmem:[%s249 + $0x210] sm:$0xff] %v382
                %v384 = vld [vmem:[%s248 + $0x428] sm:$0xff]
                %385 = vst [vmem:[%s249 + $0x218] sm:$0xff] %v384
                %v386 = vld [vmem:[%s248 + $0x440] sm:$0xff]
                %387 = vst [vmem:[%s249 + $0x220] sm:$0xff] %v386
                %v388 = vld [vmem:[%s248 + $0x448] sm:$0xff]
                %389 = vst [vmem:[%s249 + $0x228] sm:$0xff] %v388
                %v390 = vld [vmem:[%s248 + $0x460] sm:$0xff]
                %391 = vst [vmem:[%s249 + $0x230] sm:$0xff] %v390
                %v392 = vld [vmem:[%s248 + $0x468] sm:$0xff]
                %393 = vst [vmem:[%s249 + $0x238] sm:$0xff] %v392
                %v394 = vld [vmem:[%s248 + $0x480] sm:$0xff]
                %395 = vst [vmem:[%s249 + $0x240] sm:$0xff] %v394
                %v396 = vld [vmem:[%s248 + $0x488] sm:$0xff]
                %397 = vst [vmem:[%s249 + $0x248] sm:$0xff] %v396
                %v398 = vld [vmem:[%s248 + $0x4a0] sm:$0xff]
                %399 = vst [vmem:[%s249 + $0x250] sm:$0xff] %v398
                %v400 = vld [vmem:[%s248 + $0x4a8] sm:$0xff]
                %401 = vst [vmem:[%s249 + $0x258] sm:$0xff] %v400
                %v402 = vld [vmem:[%s248 + $0x4c0] sm:$0xff]
                %403 = vst [vmem:[%s249 + $0x260] sm:$0xff] %v402
                %v404 = vld [vmem:[%s248 + $0x4c8] sm:$0xff]
                %405 = vst [vmem:[%s249 + $0x268] sm:$0xff] %v404
                %v406 = vld [vmem:[%s248 + $0x4e0] sm:$0xff]
                %407 = vst [vmem:[%s249 + $0x270] sm:$0xff] %v406
                %v408 = vld [vmem:[%s248 + $0x4e8] sm:$0xff]
                %409 = vst [vmem:[%s249 + $0x278] sm:$0xff] %v408
                %v410 = vld [vmem:[%s248 + $0x500] sm:$0xff]
                %411 = vst [vmem:[%s249 + $0x280] sm:$0xff] %v410
                %v412 = vld [vmem:[%s248 + $0x508] sm:$0xff]
                %413 = vst [vmem:[%s249 + $0x288] sm:$0xff] %v412
                %v414 = vld [vmem:[%s248 + $0x520] sm:$0xff]
                %415 = vst [vmem:[%s249 + $0x290] sm:$0xff] %v414
                %v416 = vld [vmem:[%s248 + $0x528] sm:$0xff]
                %417 = vst [vmem:[%s249 + $0x298] sm:$0xff] %v416
                %v418 = vld [vmem:[%s248 + $0x540] sm:$0xff]
                %419 = vst [vmem:[%s249 + $0x2a0] sm:$0xff] %v418
                %v420 = vld [vmem:[%s248 + $0x548] sm:$0xff]
                %421 = vst [vmem:[%s249 + $0x2a8] sm:$0xff] %v420
                %v422 = vld [vmem:[%s248 + $0x560] sm:$0xff]
                %423 = vst [vmem:[%s249 + $0x2b0] sm:$0xff] %v422
                %v424 = vld [vmem:[%s248 + $0x568] sm:$0xff]
                %425 = vst [vmem:[%s249 + $0x2b8] sm:$0xff] %v424
                %v426 = vld [vmem:[%s248 + $0x580] sm:$0xff]
                %427 = vst [vmem:[%s249 + $0x2c0] sm:$0xff] %v426
                %v428 = vld [vmem:[%s248 + $0x588] sm:$0xff]
                %429 = vst [vmem:[%s249 + $0x2c8] sm:$0xff] %v428
                %v430 = vld [vmem:[%s248 + $0x5a0] sm:$0xff]
                %431 = vst [vmem:[%s249 + $0x2d0] sm:$0xff] %v430
                %v432 = vld [vmem:[%s248 + $0x5a8] sm:$0xff]
                %433 = vst [vmem:[%s249 + $0x2d8] sm:$0xff] %v432
                %v434 = vld [vmem:[%s248 + $0x5c0] sm:$0xff]
                %435 = vst [vmem:[%s249 + $0x2e0] sm:$0xff] %v434
                %v436 = vld [vmem:[%s248 + $0x5c8] sm:$0xff]
                %437 = vst [vmem:[%s249 + $0x2e8] sm:$0xff] %v436
                %v438 = vld [vmem:[%s248 + $0x5e0] sm:$0xff]
                %439 = vst [vmem:[%s249 + $0x2f0] sm:$0xff] %v438
                %v440 = vld [vmem:[%s248 + $0x5e8] sm:$0xff]
                %441 = vst [vmem:[%s249 + $0x2f8] sm:$0xff] %v440
                %v442 = vld [vmem:[%s248 + $0x600] sm:$0xff]
                %443 = vst [vmem:[%s249 + $0x300] sm:$0xff] %v442
                %v444 = vld [vmem:[%s248 + $0x608] sm:$0xff]
                %445 = vst [vmem:[%s249 + $0x308] sm:$0xff] %v444
                %v446 = vld [vmem:[%s248 + $0x620] sm:$0xff]
                %447 = vst [vmem:[%s249 + $0x310] sm:$0xff] %v446
                %v448 = vld [vmem:[%s248 + $0x628] sm:$0xff]
                %449 = vst [vmem:[%s249 + $0x318] sm:$0xff] %v448
                %v450 = vld [vmem:[%s248 + $0x640] sm:$0xff]
                %451 = vst [vmem:[%s249 + $0x320] sm:$0xff] %v450
                %v452 = vld [vmem:[%s248 + $0x648] sm:$0xff]
                %453 = vst [vmem:[%s249 + $0x328] sm:$0xff] %v452
                %v454 = vld [vmem:[%s248 + $0x660] sm:$0xff]
                %455 = vst [vmem:[%s249 + $0x330] sm:$0xff] %v454
                %v456 = vld [vmem:[%s248 + $0x668] sm:$0xff]
                %457 = vst [vmem:[%s249 + $0x338] sm:$0xff] %v456
                %v458 = vld [vmem:[%s248 + $0x680] sm:$0xff]
                %459 = vst [vmem:[%s249 + $0x340] sm:$0xff] %v458
                %v460 = vld [vmem:[%s248 + $0x688] sm:$0xff]
                %461 = vst [vmem:[%s249 + $0x348] sm:$0xff] %v460
                %v462 = vld [vmem:[%s248 + $0x6a0] sm:$0xff]
                %463 = vst [vmem:[%s249 + $0x350] sm:$0xff] %v462
                %v464 = vld [vmem:[%s248 + $0x6a8] sm:$0xff]
                %465 = vst [vmem:[%s249 + $0x358] sm:$0xff] %v464
                %v466 = vld [vmem:[%s248 + $0x6c0] sm:$0xff]
                %467 = vst [vmem:[%s249 + $0x360] sm:$0xff] %v466
                %v468 = vld [vmem:[%s248 + $0x6c8] sm:$0xff]
                %469 = vst [vmem:[%s249 + $0x368] sm:$0xff] %v468
                %v470 = vld [vmem:[%s248 + $0x6e0] sm:$0xff]
                %471 = vst [vmem:[%s249 + $0x370] sm:$0xff] %v470
                %v472 = vld [vmem:[%s248 + $0x6e8] sm:$0xff]
                %473 = vst [vmem:[%s249 + $0x378] sm:$0xff] %v472
                %v474 = vld [vmem:[%s248 + $0x700] sm:$0xff]
                %475 = vst [vmem:[%s249 + $0x380] sm:$0xff] %v474
                %v476 = vld [vmem:[%s248 + $0x708] sm:$0xff]
                %477 = vst [vmem:[%s249 + $0x388] sm:$0xff] %v476
                %v478 = vld [vmem:[%s248 + $0x720] sm:$0xff]
                %479 = vst [vmem:[%s249 + $0x390] sm:$0xff] %v478
                %v480 = vld [vmem:[%s248 + $0x728] sm:$0xff]
                %481 = vst [vmem:[%s249 + $0x398] sm:$0xff] %v480
                %v482 = vld [vmem:[%s248 + $0x740] sm:$0xff]
                %483 = vst [vmem:[%s249 + $0x3a0] sm:$0xff] %v482
                %v484 = vld [vmem:[%s248 + $0x748] sm:$0xff]
                %485 = vst [vmem:[%s249 + $0x3a8] sm:$0xff] %v484
                %v486 = vld [vmem:[%s248 + $0x760] sm:$0xff]
                %487 = vst [vmem:[%s249 + $0x3b0] sm:$0xff] %v486
                %v488 = vld [vmem:[%s248 + $0x768] sm:$0xff]
                %489 = vst [vmem:[%s249 + $0x3b8] sm:$0xff] %v488
                %v490 = vld [vmem:[%s248 + $0x780] sm:$0xff]
                %491 = vst [vmem:[%s249 + $0x3c0] sm:$0xff] %v490
                %v492 = vld [vmem:[%s248 + $0x788] sm:$0xff]
                %493 = vst [vmem:[%s249 + $0x3c8] sm:$0xff] %v492
                %v494 = vld [vmem:[%s248 + $0x7a0] sm:$0xff]
                %495 = vst [vmem:[%s249 + $0x3d0] sm:$0xff] %v494
                %v496 = vld [vmem:[%s248 + $0x7a8] sm:$0xff]
                %497 = vst [vmem:[%s249 + $0x3d8] sm:$0xff] %v496
                %v498 = vld [vmem:[%s248 + $0x7c0] sm:$0xff]
                %499 = vst [vmem:[%s249 + $0x3e0] sm:$0xff] %v498
                %v500 = vld [vmem:[%s248 + $0x7c8] sm:$0xff]
                %501 = vst [vmem:[%s249 + $0x3e8] sm:$0xff] %v500
                %v502 = vld [vmem:[%s248 + $0x7e0] sm:$0xff]
                %503 = vst [vmem:[%s249 + $0x3f0] sm:$0xff] %v502
                %v504 = vld [vmem:[%s248 + $0x7e8] sm:$0xff]
                %505 = vst [vmem:[%s249 + $0x3f8] sm:$0xff] %v504
                %v506 = vld [vmem:[%s248 + $0x800] sm:$0xff]
                %507 = vst [vmem:[%s249 + $0x400] sm:$0xff] %v506
                %v508 = vld [vmem:[%s248 + $0x808] sm:$0xff]
                %509 = vst [vmem:[%s249 + $0x408] sm:$0xff] %v508
                %v510 = vld [vmem:[%s248 + $0x820] sm:$0xff]
                %511 = vst [vmem:[%s249 + $0x410] sm:$0xff] %v510
                %v512 = vld [vmem:[%s248 + $0x828] sm:$0xff]
                %513 = vst [vmem:[%s249 + $0x418] sm:$0xff] %v512
                %v514 = vld [vmem:[%s248 + $0x840] sm:$0xff]
                %515 = vst [vmem:[%s249 + $0x420] sm:$0xff] %v514
                %v516 = vld [vmem:[%s248 + $0x848] sm:$0xff]
                %517 = vst [vmem:[%s249 + $0x428] sm:$0xff] %v516
                %v518 = vld [vmem:[%s248 + $0x860] sm:$0xff]
                %519 = vst [vmem:[%s249 + $0x430] sm:$0xff] %v518
                %v520 = vld [vmem:[%s248 + $0x868] sm:$0xff]
                %521 = vst [vmem:[%s249 + $0x438] sm:$0xff] %v520
                %v522 = vld [vmem:[%s248 + $0x880] sm:$0xff]
                %523 = vst [vmem:[%s249 + $0x440] sm:$0xff] %v522
                %v524 = vld [vmem:[%s248 + $0x888] sm:$0xff]
                %525 = vst [vmem:[%s249 + $0x448] sm:$0xff] %v524
                %v526 = vld [vmem:[%s248 + $0x8a0] sm:$0xff]
                %527 = vst [vmem:[%s249 + $0x450] sm:$0xff] %v526
                %v528 = vld [vmem:[%s248 + $0x8a8] sm:$0xff]
                %529 = vst [vmem:[%s249 + $0x458] sm:$0xff] %v528
                %v530 = vld [vmem:[%s248 + $0x8c0] sm:$0xff]
                %531 = vst [vmem:[%s249 + $0x460] sm:$0xff] %v530
                %v532 = vld [vmem:[%s248 + $0x8c8] sm:$0xff]
                %533 = vst [vmem:[%s249 + $0x468] sm:$0xff] %v532
                %v534 = vld [vmem:[%s248 + $0x8e0] sm:$0xff]
                %535 = vst [vmem:[%s249 + $0x470] sm:$0xff] %v534
                %v536 = vld [vmem:[%s248 + $0x8e8] sm:$0xff]
                %537 = vst [vmem:[%s249 + $0x478] sm:$0xff] %v536
                %v538 = vld [vmem:[%s248 + $0x900] sm:$0xff]
                %539 = vst [vmem:[%s249 + $0x480] sm:$0xff] %v538
                %v540 = vld [vmem:[%s248 + $0x908] sm:$0xff]
                %541 = vst [vmem:[%s249 + $0x488] sm:$0xff] %v540
                %v542 = vld [vmem:[%s248 + $0x920] sm:$0xff]
                %543 = vst [vmem:[%s249 + $0x490] sm:$0xff] %v542
                %v544 = vld [vmem:[%s248 + $0x928] sm:$0xff]
                %545 = vst [vmem:[%s249 + $0x498] sm:$0xff] %v544
                %v546 = vld [vmem:[%s248 + $0x940] sm:$0xff]
                %547 = vst [vmem:[%s249 + $0x4a0] sm:$0xff] %v546
                %v548 = vld [vmem:[%s248 + $0x948] sm:$0xff]
                %549 = vst [vmem:[%s249 + $0x4a8] sm:$0xff] %v548
                %v550 = vld [vmem:[%s248 + $0x960] sm:$0xff]
                %551 = vst [vmem:[%s249 + $0x4b0] sm:$0xff] %v550
                %v552 = vld [vmem:[%s248 + $0x968] sm:$0xff]
                %553 = vst [vmem:[%s249 + $0x4b8] sm:$0xff] %v552
                %v554 = vld [vmem:[%s248 + $0x980] sm:$0xff]
                %555 = vst [vmem:[%s249 + $0x4c0] sm:$0xff] %v554
                %v556 = vld [vmem:[%s248 + $0x988] sm:$0xff]
                %557 = vst [vmem:[%s249 + $0x4c8] sm:$0xff] %v556
                %v558 = vld [vmem:[%s248 + $0x9a0] sm:$0xff]
                %559 = vst [vmem:[%s249 + $0x4d0] sm:$0xff] %v558
                %v560 = vld [vmem:[%s248 + $0x9a8] sm:$0xff]
                %561 = vst [vmem:[%s249 + $0x4d8] sm:$0xff] %v560
                %v562 = vld [vmem:[%s248 + $0x9c0] sm:$0xff]
                %563 = vst [vmem:[%s249 + $0x4e0] sm:$0xff] %v562
                %v564 = vld [vmem:[%s248 + $0x9c8] sm:$0xff]
                %565 = vst [vmem:[%s249 + $0x4e8] sm:$0xff] %v564
                %v566 = vld [vmem:[%s248 + $0x9e0] sm:$0xff]
                %567 = vst [vmem:[%s249 + $0x4f0] sm:$0xff] %v566
                %v568 = vld [vmem:[%s248 + $0x9e8] sm:$0xff]
                %569 = vst [vmem:[%s249 + $0x4f8] sm:$0xff] %v568
                %v570 = vld [vmem:[%s248 + $0xa00] sm:$0xff]
                %571 = vst [vmem:[%s249 + $0x500] sm:$0xff] %v570
                %v572 = vld [vmem:[%s248 + $0xa08] sm:$0xff]
                %573 = vst [vmem:[%s249 + $0x508] sm:$0xff] %v572
                %v574 = vld [vmem:[%s248 + $0xa20] sm:$0xff]
                %575 = vst [vmem:[%s249 + $0x510] sm:$0xff] %v574
                %v576 = vld [vmem:[%s248 + $0xa28] sm:$0xff]
                %577 = vst [vmem:[%s249 + $0x518] sm:$0xff] %v576
                %v578 = vld [vmem:[%s248 + $0xa40] sm:$0xff]
                %579 = vst [vmem:[%s249 + $0x520] sm:$0xff] %v578
                %v580 = vld [vmem:[%s248 + $0xa48] sm:$0xff]
                %581 = vst [vmem:[%s249 + $0x528] sm:$0xff] %v580
                %v582 = vld [vmem:[%s248 + $0xa60] sm:$0xff]
                %583 = vst [vmem:[%s249 + $0x530] sm:$0xff] %v582
                %v584 = vld [vmem:[%s248 + $0xa68] sm:$0xff]
                %585 = vst [vmem:[%s249 + $0x538] sm:$0xff] %v584
                %v586 = vld [vmem:[%s248 + $0xa80] sm:$0xff]
                %587 = vst [vmem:[%s249 + $0x540] sm:$0xff] %v586
                %v588 = vld [vmem:[%s248 + $0xa88] sm:$0xff]
                %589 = vst [vmem:[%s249 + $0x548] sm:$0xff] %v588
                %v590 = vld [vmem:[%s248 + $0xaa0] sm:$0xff]
                %591 = vst [vmem:[%s249 + $0x550] sm:$0xff] %v590
                %v592 = vld [vmem:[%s248 + $0xaa8] sm:$0xff]
                %593 = vst [vmem:[%s249 + $0x558] sm:$0xff] %v592
                %v594 = vld [vmem:[%s248 + $0xac0] sm:$0xff]
                %595 = vst [vmem:[%s249 + $0x560] sm:$0xff] %v594
                %v596 = vld [vmem:[%s248 + $0xac8] sm:$0xff]
                %597 = vst [vmem:[%s249 + $0x568] sm:$0xff] %v596
                %v598 = vld [vmem:[%s248 + $0xae0] sm:$0xff]
                %599 = vst [vmem:[%s249 + $0x570] sm:$0xff] %v598
                %v600 = vld [vmem:[%s248 + $0xae8] sm:$0xff]
                %601 = vst [vmem:[%s249 + $0x578] sm:$0xff] %v600
                %v602 = vld [vmem:[%s248 + $0xb00] sm:$0xff]
                %603 = vst [vmem:[%s249 + $0x580] sm:$0xff] %v602
                %v604 = vld [vmem:[%s248 + $0xb08] sm:$0xff]
                %605 = vst [vmem:[%s249 + $0x588] sm:$0xff] %v604
                %v606 = vld [vmem:[%s248 + $0xb20] sm:$0xff]
                %607 = vst [vmem:[%s249 + $0x590] sm:$0xff] %v606
                %v608 = vld [vmem:[%s248 + $0xb28] sm:$0xff]
                %609 = vst [vmem:[%s249 + $0x598] sm:$0xff] %v608
                %v610 = vld [vmem:[%s248 + $0xb40] sm:$0xff]
                %611 = vst [vmem:[%s249 + $0x5a0] sm:$0xff] %v610
                %v612 = vld [vmem:[%s248 + $0xb48] sm:$0xff]
                %613 = vst [vmem:[%s249 + $0x5a8] sm:$0xff] %v612
                %v614 = vld [vmem:[%s248 + $0xb60] sm:$0xff]
                %615 = vst [vmem:[%s249 + $0x5b0] sm:$0xff] %v614
                %v616 = vld [vmem:[%s248 + $0xb68] sm:$0xff]
                %617 = vst [vmem:[%s249 + $0x5b8] sm:$0xff] %v616
                %v618 = vld [vmem:[%s248 + $0xb80] sm:$0xff]
                %619 = vst [vmem:[%s249 + $0x5c0] sm:$0xff] %v618
                %v620 = vld [vmem:[%s248 + $0xb88] sm:$0xff]
                %621 = vst [vmem:[%s249 + $0x5c8] sm:$0xff] %v620
                %v622 = vld [vmem:[%s248 + $0xba0] sm:$0xff]
                %623 = vst [vmem:[%s249 + $0x5d0] sm:$0xff] %v622
                %v624 = vld [vmem:[%s248 + $0xba8] sm:$0xff]
                %625 = vst [vmem:[%s249 + $0x5d8] sm:$0xff] %v624
                %v626 = vld [vmem:[%s248 + $0xbc0] sm:$0xff]
                %627 = vst [vmem:[%s249 + $0x5e0] sm:$0xff] %v626
                %v628 = vld [vmem:[%s248 + $0xbc8] sm:$0xff]
                %629 = vst [vmem:[%s249 + $0x5e8] sm:$0xff] %v628
                %v630 = vld [vmem:[%s248 + $0xbe0] sm:$0xff]
                %631 = vst [vmem:[%s249 + $0x5f0] sm:$0xff] %v630
                %v632 = vld [vmem:[%s248 + $0xbe8] sm:$0xff]
                %633 = vst [vmem:[%s249 + $0x5f8] sm:$0xff] %v632
                %v634 = vld [vmem:[%s248 + $0xc00] sm:$0xff]
                %635 = vst [vmem:[%s249 + $0x600] sm:$0xff] %v634
                %v636 = vld [vmem:[%s248 + $0xc08] sm:$0xff]
                %637 = vst [vmem:[%s249 + $0x608] sm:$0xff] %v636
                %v638 = vld [vmem:[%s248 + $0xc20] sm:$0xff]
                %639 = vst [vmem:[%s249 + $0x610] sm:$0xff] %v638
                %v640 = vld [vmem:[%s248 + $0xc28] sm:$0xff]
                %641 = vst [vmem:[%s249 + $0x618] sm:$0xff] %v640
                %v642 = vld [vmem:[%s248 + $0xc40] sm:$0xff]
                %643 = vst [vmem:[%s249 + $0x620] sm:$0xff] %v642
                %v644 = vld [vmem:[%s248 + $0xc48] sm:$0xff]
                %645 = vst [vmem:[%s249 + $0x628] sm:$0xff] %v644
                %v646 = vld [vmem:[%s248 + $0xc60] sm:$0xff]
                %647 = vst [vmem:[%s249 + $0x630] sm:$0xff] %v646
                %v648 = vld [vmem:[%s248 + $0xc68] sm:$0xff]
                %649 = vst [vmem:[%s249 + $0x638] sm:$0xff] %v648
                %v650 = vld [vmem:[%s248 + $0xc80] sm:$0xff]
                %651 = vst [vmem:[%s249 + $0x640] sm:$0xff] %v650
                %v652 = vld [vmem:[%s248 + $0xc88] sm:$0xff]
                %653 = vst [vmem:[%s249 + $0x648] sm:$0xff] %v652
                %v654 = vld [vmem:[%s248 + $0xca0] sm:$0xff]
                %655 = vst [vmem:[%s249 + $0x650] sm:$0xff] %v654
                %v656 = vld [vmem:[%s248 + $0xca8] sm:$0xff]
                %657 = vst [vmem:[%s249 + $0x658] sm:$0xff] %v656
                %v658 = vld [vmem:[%s248 + $0xcc0] sm:$0xff]
                %659 = vst [vmem:[%s249 + $0x660] sm:$0xff] %v658
                %v660 = vld [vmem:[%s248 + $0xcc8] sm:$0xff]
                %661 = vst [vmem:[%s249 + $0x668] sm:$0xff] %v660
                %v662 = vld [vmem:[%s248 + $0xce0] sm:$0xff]
                %663 = vst [vmem:[%s249 + $0x670] sm:$0xff] %v662
                %v664 = vld [vmem:[%s248 + $0xce8] sm:$0xff]
                %665 = vst [vmem:[%s249 + $0x678] sm:$0xff] %v664
                %v666 = vld [vmem:[%s248 + $0xd00] sm:$0xff]
                %667 = vst [vmem:[%s249 + $0x680] sm:$0xff] %v666
                %v668 = vld [vmem:[%s248 + $0xd08] sm:$0xff]
                %669 = vst [vmem:[%s249 + $0x688] sm:$0xff] %v668
                %v670 = vld [vmem:[%s248 + $0xd20] sm:$0xff]
                %671 = vst [vmem:[%s249 + $0x690] sm:$0xff] %v670
                %v672 = vld [vmem:[%s248 + $0xd28] sm:$0xff]
                %673 = vst [vmem:[%s249 + $0x698] sm:$0xff] %v672
                %v674 = vld [vmem:[%s248 + $0xd40] sm:$0xff]
                %675 = vst [vmem:[%s249 + $0x6a0] sm:$0xff] %v674
                %v676 = vld [vmem:[%s248 + $0xd48] sm:$0xff]
                %677 = vst [vmem:[%s249 + $0x6a8] sm:$0xff] %v676
                %v678 = vld [vmem:[%s248 + $0xd60] sm:$0xff]
                %679 = vst [vmem:[%s249 + $0x6b0] sm:$0xff] %v678
                %v680 = vld [vmem:[%s248 + $0xd68] sm:$0xff]
                %681 = vst [vmem:[%s249 + $0x6b8] sm:$0xff] %v680
                %v682 = vld [vmem:[%s248 + $0xd80] sm:$0xff]
                %683 = vst [vmem:[%s249 + $0x6c0] sm:$0xff] %v682
                %v684 = vld [vmem:[%s248 + $0xd88] sm:$0xff]
                %685 = vst [vmem:[%s249 + $0x6c8] sm:$0xff] %v684
                %v686 = vld [vmem:[%s248 + $0xda0] sm:$0xff]
                %687 = vst [vmem:[%s249 + $0x6d0] sm:$0xff] %v686
                %v688 = vld [vmem:[%s248 + $0xda8] sm:$0xff]
                %689 = vst [vmem:[%s249 + $0x6d8] sm:$0xff] %v688
                %v690 = vld [vmem:[%s248 + $0xdc0] sm:$0xff]
                %691 = vst [vmem:[%s249 + $0x6e0] sm:$0xff] %v690
                %v692 = vld [vmem:[%s248 + $0xdc8] sm:$0xff]
                %693 = vst [vmem:[%s249 + $0x6e8] sm:$0xff] %v692
                %v694 = vld [vmem:[%s248 + $0xde0] sm:$0xff]
                %695 = vst [vmem:[%s249 + $0x6f0] sm:$0xff] %v694
                %v696 = vld [vmem:[%s248 + $0xde8] sm:$0xff]
                %697 = vst [vmem:[%s249 + $0x6f8] sm:$0xff] %v696
                %v698 = vld [vmem:[%s248 + $0xe00] sm:$0xff]
                %699 = vst [vmem:[%s249 + $0x700] sm:$0xff] %v698
                %v700 = vld [vmem:[%s248 + $0xe08] sm:$0xff]
                %701 = vst [vmem:[%s249 + $0x708] sm:$0xff] %v700
                %v702 = vld [vmem:[%s248 + $0xe20] sm:$0xff]
                %703 = vst [vmem:[%s249 + $0x710] sm:$0xff] %v702
                %v704 = vld [vmem:[%s248 + $0xe28] sm:$0xff]
                %705 = vst [vmem:[%s249 + $0x718] sm:$0xff] %v704
                %v706 = vld [vmem:[%s248 + $0xe40] sm:$0xff]
                %707 = vst [vmem:[%s249 + $0x720] sm:$0xff] %v706
                %v708 = vld [vmem:[%s248 + $0xe48] sm:$0xff]
                %709 = vst [vmem:[%s249 + $0x728] sm:$0xff] %v708
                %v710 = vld [vmem:[%s248 + $0xe60] sm:$0xff]
                %711 = vst [vmem:[%s249 + $0x730] sm:$0xff] %v710
                %v712 = vld [vmem:[%s248 + $0xe68] sm:$0xff]
                %713 = vst [vmem:[%s249 + $0x738] sm:$0xff] %v712
                %v714 = vld [vmem:[%s248 + $0xe80] sm:$0xff]
                %715 = vst [vmem:[%s249 + $0x740] sm:$0xff] %v714
                %v716 = vld [vmem:[%s248 + $0xe88] sm:$0xff]
                %717 = vst [vmem:[%s249 + $0x748] sm:$0xff] %v716
                %v718 = vld [vmem:[%s248 + $0xea0] sm:$0xff]
                %719 = vst [vmem:[%s249 + $0x750] sm:$0xff] %v718
                %v720 = vld [vmem:[%s248 + $0xea8] sm:$0xff]
                %721 = vst [vmem:[%s249 + $0x758] sm:$0xff] %v720
                %v722 = vld [vmem:[%s248 + $0xec0] sm:$0xff]
                %723 = vst [vmem:[%s249 + $0x760] sm:$0xff] %v722
                %v724 = vld [vmem:[%s248 + $0xec8] sm:$0xff]
                %725 = vst [vmem:[%s249 + $0x768] sm:$0xff] %v724
                %v726 = vld [vmem:[%s248 + $0xee0] sm:$0xff]
                %727 = vst [vmem:[%s249 + $0x770] sm:$0xff] %v726
                %v728 = vld [vmem:[%s248 + $0xee8] sm:$0xff]
                %729 = vst [vmem:[%s249 + $0x778] sm:$0xff] %v728
                %v730 = vld [vmem:[%s248 + $0xf00] sm:$0xff]
                %731 = vst [vmem:[%s249 + $0x780] sm:$0xff] %v730
                %v732 = vld [vmem:[%s248 + $0xf08] sm:$0xff]
                %733 = vst [vmem:[%s249 + $0x788] sm:$0xff] %v732
                %v734 = vld [vmem:[%s248 + $0xf20] sm:$0xff]
                %735 = vst [vmem:[%s249 + $0x790] sm:$0xff] %v734
                %v736 = vld [vmem:[%s248 + $0xf28] sm:$0xff]
                %737 = vst [vmem:[%s249 + $0x798] sm:$0xff] %v736
                %v738 = vld [vmem:[%s248 + $0xf40] sm:$0xff]
                %739 = vst [vmem:[%s249 + $0x7a0] sm:$0xff] %v738
                %v740 = vld [vmem:[%s248 + $0xf48] sm:$0xff]
                %741 = vst [vmem:[%s249 + $0x7a8] sm:$0xff] %v740
                %v742 = vld [vmem:[%s248 + $0xf60] sm:$0xff]
                %743 = vst [vmem:[%s249 + $0x7b0] sm:$0xff] %v742
                %v744 = vld [vmem:[%s248 + $0xf68] sm:$0xff]
                %745 = vst [vmem:[%s249 + $0x7b8] sm:$0xff] %v744
                %v746 = vld [vmem:[%s248 + $0xf80] sm:$0xff]
                %747 = vst [vmem:[%s249 + $0x7c0] sm:$0xff] %v746
                %v748 = vld [vmem:[%s248 + $0xf88] sm:$0xff]
                %749 = vst [vmem:[%s249 + $0x7c8] sm:$0xff] %v748
                %v750 = vld [vmem:[%s248 + $0xfa0] sm:$0xff]
                %751 = vst [vmem:[%s249 + $0x7d0] sm:$0xff] %v750
                %v752 = vld [vmem:[%s248 + $0xfa8] sm:$0xff]
                %753 = vst [vmem:[%s249 + $0x7d8] sm:$0xff] %v752
                %v754 = vld [vmem:[%s248 + $0xfc0] sm:$0xff]
                %755 = vst [vmem:[%s249 + $0x7e0] sm:$0xff] %v754
                %v756 = vld [vmem:[%s248 + $0xfc8] sm:$0xff]
                %757 = vst [vmem:[%s249 + $0x7e8] sm:$0xff] %v756
                %v758 = vld [vmem:[%s248 + $0xfe0] sm:$0xff]
                %759 = vst [vmem:[%s249 + $0x7f0] sm:$0xff] %v758
                %v760 = vld [vmem:[%s248 + $0xfe8] sm:$0xff]
                %761 = vst [vmem:[%s249 + $0x7f8] sm:$0xff] %v760
                %v762 = vld [vmem:[%s248 + $0x1000] sm:$0xff]
                %763 = vst [vmem:[%s249 + $0x800] sm:$0xff] %v762
                %v764 = vld [vmem:[%s248 + $0x1008] sm:$0xff]
                %765 = vst [vmem:[%s249 + $0x808] sm:$0xff] %v764
                %v766 = vld [vmem:[%s248 + $0x1020] sm:$0xff]
                %767 = vst [vmem:[%s249 + $0x810] sm:$0xff] %v766
                %v768 = vld [vmem:[%s248 + $0x1028] sm:$0xff]
                %769 = vst [vmem:[%s249 + $0x818] sm:$0xff] %v768
                %v770 = vld [vmem:[%s248 + $0x1040] sm:$0xff]
                %771 = vst [vmem:[%s249 + $0x820] sm:$0xff] %v770
                %v772 = vld [vmem:[%s248 + $0x1048] sm:$0xff]
                %773 = vst [vmem:[%s249 + $0x828] sm:$0xff] %v772
                %v774 = vld [vmem:[%s248 + $0x1060] sm:$0xff]
                %775 = vst [vmem:[%s249 + $0x830] sm:$0xff] %v774
                %v776 = vld [vmem:[%s248 + $0x1068] sm:$0xff]
                %777 = vst [vmem:[%s249 + $0x838] sm:$0xff] %v776
                %v778 = vld [vmem:[%s248 + $0x1080] sm:$0xff]
                %779 = vst [vmem:[%s249 + $0x840] sm:$0xff] %v778
                %v780 = vld [vmem:[%s248 + $0x1088] sm:$0xff]
                %781 = vst [vmem:[%s249 + $0x848] sm:$0xff] %v780
                %v782 = vld [vmem:[%s248 + $0x10a0] sm:$0xff]
                %783 = vst [vmem:[%s249 + $0x850] sm:$0xff] %v782
                %v784 = vld [vmem:[%s248 + $0x10a8] sm:$0xff]
                %785 = vst [vmem:[%s249 + $0x858] sm:$0xff] %v784
                %v786 = vld [vmem:[%s248 + $0x10c0] sm:$0xff]
                %787 = vst [vmem:[%s249 + $0x860] sm:$0xff] %v786
                %v788 = vld [vmem:[%s248 + $0x10c8] sm:$0xff]
                %789 = vst [vmem:[%s249 + $0x868] sm:$0xff] %v788
                %v790 = vld [vmem:[%s248 + $0x10e0] sm:$0xff]
                %791 = vst [vmem:[%s249 + $0x870] sm:$0xff] %v790
                %v792 = vld [vmem:[%s248 + $0x10e8] sm:$0xff]
                %793 = vst [vmem:[%s249 + $0x878] sm:$0xff] %v792
                %v794 = vld [vmem:[%s248 + $0x1100] sm:$0xff]
                %795 = vst [vmem:[%s249 + $0x880] sm:$0xff] %v794
                %v796 = vld [vmem:[%s248 + $0x1108] sm:$0xff]
                %797 = vst [vmem:[%s249 + $0x888] sm:$0xff] %v796
                %v798 = vld [vmem:[%s248 + $0x1120] sm:$0xff]
                %799 = vst [vmem:[%s249 + $0x890] sm:$0xff] %v798
                %v800 = vld [vmem:[%s248 + $0x1128] sm:$0xff]
                %801 = vst [vmem:[%s249 + $0x898] sm:$0xff] %v800
                %v802 = vld [vmem:[%s248 + $0x1140] sm:$0xff]
                %803 = vst [vmem:[%s249 + $0x8a0] sm:$0xff] %v802
                %v804 = vld [vmem:[%s248 + $0x1148] sm:$0xff]
                %805 = vst [vmem:[%s249 + $0x8a8] sm:$0xff] %v804
                %v806 = vld [vmem:[%s248 + $0x1160] sm:$0xff]
                %807 = vst [vmem:[%s249 + $0x8b0] sm:$0xff] %v806
                %v808 = vld [vmem:[%s248 + $0x1168] sm:$0xff]
                %809 = vst [vmem:[%s249 + $0x8b8] sm:$0xff] %v808
                %v810 = vld [vmem:[%s248 + $0x1180] sm:$0xff]
                %811 = vst [vmem:[%s249 + $0x8c0] sm:$0xff] %v810
                %v812 = vld [vmem:[%s248 + $0x1188] sm:$0xff]
                %813 = vst [vmem:[%s249 + $0x8c8] sm:$0xff] %v812
                %v814 = vld [vmem:[%s248 + $0x11a0] sm:$0xff]
                %815 = vst [vmem:[%s249 + $0x8d0] sm:$0xff] %v814
                %v816 = vld [vmem:[%s248 + $0x11a8] sm:$0xff]
                %817 = vst [vmem:[%s249 + $0x8d8] sm:$0xff] %v816
                %v818 = vld [vmem:[%s248 + $0x11c0] sm:$0xff]
                %819 = vst [vmem:[%s249 + $0x8e0] sm:$0xff] %v818
                %v820 = vld [vmem:[%s248 + $0x11c8] sm:$0xff]
                %821 = vst [vmem:[%s249 + $0x8e8] sm:$0xff] %v820
                %v822 = vld [vmem:[%s248 + $0x11e0] sm:$0xff]
                %823 = vst [vmem:[%s249 + $0x8f0] sm:$0xff] %v822
                %v824 = vld [vmem:[%s248 + $0x11e8] sm:$0xff]
                %825 = vst [vmem:[%s249 + $0x8f8] sm:$0xff] %v824
              $region49: #{_lambda_.7} parent=43 // loop_footer
                %s247 = sadd.s32 1, %s243
              $region50: #{_lambda_.7} parent=43 // loop_footer_branch
                %242 = sbr.rel target = $region46
              $region51: #{_lambda_.7} parent=43 // loop_exit
                _
            $region44: #{_lambda_.7} parent=39 // pred_fallthru
              _
            // Predicated region
            $region52: #{_lambda_.7} parent=39 // pred_check
              _
            $region53: #{_lambda_.7} parent=39 // pred_check_branch
              %827 = sbr.rel target = $region55
            $region54: #{_lambda_.7} parent=39 // pred_region
              _
            $region55: #{_lambda_.7} parent=39 // pred_fallthru
              _
          $region40: #{_lambda_.7} parent=35 // pred_fallthru
            _
          %828 = vnop
        $region36: #{_lambda_.7} parent=31 // pred_fallthru
          _
        // Predicated region
        $region56: #{_lambda_.7} parent=31 // pred_check
          %p829 = pneg %p81
        $region57: #{_lambda_.7} parent=31 // pred_check_branch
          %831 = sbr.rel (%p829) target = $region59
        $region58: #{_lambda_.7} parent=31 // pred_region
          %s832 = smul.u32 4, %s14
          %p833 = scmp.lt.s32.totalorder %s832, 7
          %s834 = scalar_select %p833, %s832, 7
          %s835 = scalar_lea.vmem %s2, %s834
          %s836 = smul.u32 4, %s14
        $region59: #{_lambda_.7} parent=31 // pred_fallthru
          _
        // Predicated region
        $region60: #{_lambda_.7} parent=31 // pred_check
          %p837 = pneg %p107
        $region61: #{_lambda_.7} parent=31 // pred_check_branch
          %839 = sbr.rel (%p837) target = $region63
        $region62: #{_lambda_.7} parent=31 // pred_region
          %s840 = smul.u32 64, %s14
          %p841 = scmp.lt.s32.totalorder %s840, 127
          %s842 = scalar_select %p841, %s840, 127
          %s843 = smul.addr %s842, 2
          %s844 = smul.addr %s843, 4
          %s845 = scalar_lea.vmem %s3, %s844
          %s846 = smul.u32 64, %s14
        $region63: #{_lambda_.7} parent=31 // pred_fallthru
          _
      $region32: #{_lambda_.7} parent=5 // pred_fallthru
        _
      %p847 = scmp.le.s32.totalorder 1, %s14
      %p848 = scmp.lt.s32.totalorder %s14, 3
      %p849 = pnand %p847, %p848
      %p850 = pneg %p849
      // Predicated region
      $region64: #{_lambda_.7} parent=5 // pred_check
        _
      $region65: #{_lambda_.7} parent=5 // pred_check_branch
        %852 = sbr.rel (%p849) target = $region67
      $region66: #{_lambda_.7} parent=5 // pred_region
        %s853 = ssub.s32 %s14, 1
        %s854 = sand.u32 %s48, 1
        %s855 = sand.u32 %s48, 1
        %s856 = smul.addr %s855, 2304
        %s857 = scalar_lea.vmem [#allocation3], %s856
        // Predicated region
        $region68: #{_lambda_.7} parent=66 // pred_check
          %p858 = pneg %p61
        $region69: #{_lambda_.7} parent=66 // pred_check_branch
          %860 = sbr.rel (%p858) target = $region71
        $region70: #{_lambda_.7} parent=66 // pred_region
          _
        $region71: #{_lambda_.7} parent=66 // pred_fallthru
          _
        %p861 = pneg %p35
        %p862 = pneg %p32
        %s863 = sand.u32 %s48, 1
        %s864 = sand.u32 %s48, 1
        %s865 = smul.addr %s864, 2304
        %s866 = scalar_lea.vmem [#allocation3], %s865
        %p867 = pneg %p61
        %p868 = pneg %p58
        %s869 = smul.u32 4, %s19
        %p870 = scmp.lt.s32.totalorder %s869, 7
        %s871 = scalar_select %p870, %s869, 7
        %s872 = scalar_lea.vmem %s2, %s871
        %p873 = pneg %p87
        %p874 = pneg %p84
        %s875 = smul.u32 64, %s19
        %p876 = scmp.lt.s32.totalorder %s875, 127
        %s877 = scalar_select %p876, %s875, 127
        %s878 = smul.addr %s877, 2
        %s879 = smul.addr %s878, 4
        %s880 = scalar_lea.vmem %s3, %s879
        %p881 = pneg %p113
        %p882 = pneg %p110
        %p883 = pneg %p134
        %p884 = pneg %p131
        %p885 = pneg %p155
        %p886 = pneg %p152
        %p887 = pneg %p176
        %p888 = pneg %p173
        %p889 = pneg %p197
        %p890 = pneg %p194
        %s891 = smul.u32 4, %s19
        %s892 = smul.u32 4, %s19
        %p893 = scmp.lt.s32.totalorder %s892, 7
        %s894 = scalar_select %p893, %s892, 7
        %s895 = scalar_lea.vmem %s2, %s894
        %s896 = smul.u32 4, %s19
        %s897 = smul.u32 64, %s19
        %p898 = scmp.lt.s32.totalorder %s897, 127
        %s899 = scalar_select %p898, %s897, 127
        %s900 = smul.addr %s899, 2
        %s901 = smul.addr %s900, 4
        %s902 = scalar_lea.vmem %s3, %s901
        %s903 = smul.u32 64, %s19
        %p905 = scmp.eq.s32.totalorder %s19, 0
        // Predicated region
        $region72: #{_lambda_.7} parent=66 // pred_check
          %p906 = pneg %p905
        $region73: #{_lambda_.7} parent=66 // pred_check_branch
          %908 = sbr.rel (%p906) target = $region75
        $region74: #{_lambda_.7} parent=66 // pred_region
          %909 = vst [vmem:[#allocation2] sm:$0xf] 0.0
        $region75: #{_lambda_.7} parent=66 // pred_fallthru
          _
        %v910 = vld [vmem:[%s0] sm:$0xff]
        %v911 = vld [vmem:[%s0 + $0x8] sm:$0xff]
        %v912 = vld [vmem:[%s0 + $0x10] sm:$0x3]
        %v916 = vcombine.high %v910, %v910
        %v918 = vunpack.c.l.s4 1983009808
        %v919 = vunpack.c.0.s8 %v918
        %v920 = vlaneseq
        %v921 = vshrl.u32 %v920, 7
        %v922 = vsub.s32 %v919, %v921
        %v923 = vrot.slane %v910, %v922
        %v925 = vunpack.c.l.s4 1983009808
        %v926 = vunpack.c.0.s8 %v925
        %v927 = vlaneseq
        %v928 = vshrl.u32 %v927, 7
        %v929 = vsub.s32 %v926, %v928
        %v930 = vrot.slane %v916, %v929
        %v931 = vcombine.high %v923, %v923
        %v932 = vcombine.high %v930, %v930
        %v933 = vcombine.high %v911, %v911
        %v935 = vunpack.c.l.s4 1983009808
        %v936 = vunpack.c.0.s8 %v935
        %v937 = vlaneseq
        %v938 = vshrl.u32 %v937, 7
        %v939 = vsub.s32 %v936, %v938
        %v940 = vrot.slane %v911, %v939
        %v942 = vunpack.c.l.s4 1983009808
        %v943 = vunpack.c.0.s8 %v942
        %v944 = vlaneseq
        %v945 = vshrl.u32 %v944, 7
        %v946 = vsub.s32 %v943, %v945
        %v947 = vrot.slane %v933, %v946
        %v948 = vcombine.high %v940, %v940
        %v949 = vcombine.high %v947, %v947
        %v951 = vunpack.c.l.s4 1983009808
        %v952 = vunpack.c.0.s8 %v951
        %v953 = vlaneseq
        %v954 = vshrl.u32 %v953, 7
        %v955 = vsub.s32 %v952, %v954
        %v956 = vrot.slane %v912, %v955
        %v966 = vpack.c.bf16 %v923, %v923
        %v967 = vpack.c.bf16 %v931, %v931
        %v968 = vpack.c.bf16 %v930, %v930
        %v969 = vpack.c.bf16 %v932, %v932
        %v970 = vpack.c.bf16 %v940, %v940
        %v971 = vpack.c.bf16 %v948, %v948
        %v972 = vpack.c.bf16 %v947, %v947
        %v973 = vpack.c.bf16 %v949, %v949
        %v974 = vpack.c.bf16 %v956, %v956
        %v975 = vld [vmem:[%s857] sm:$0xff]
        %v976 = vld [vmem:[%s857 + $0x8] sm:$0xff]
        %v977 = vld [vmem:[%s857 + $0x10] sm:$0xff]
        %v978 = vld [vmem:[%s857 + $0x18] sm:$0xff]
        %v979 = vld [vmem:[%s857 + $0x20] sm:$0xff]
        %v980 = vld [vmem:[%s857 + $0x28] sm:$0xff]
        %v981 = vld [vmem:[%s857 + $0x30] sm:$0xff]
        %v982 = vld [vmem:[%s857 + $0x38] sm:$0xff]
        %v983 = vld [vmem:[%s857 + $0x40] sm:$0xff]
        %v984 = vld [vmem:[%s857 + $0x48] sm:$0xff]
        %v985 = vld [vmem:[%s857 + $0x50] sm:$0xff]
        %v986 = vld [vmem:[%s857 + $0x58] sm:$0xff]
        %v987 = vld [vmem:[%s857 + $0x60] sm:$0xff]
        %v988 = vld [vmem:[%s857 + $0x68] sm:$0xff]
        %v989 = vld [vmem:[%s857 + $0x70] sm:$0xff]
        %v990 = vld [vmem:[%s857 + $0x78] sm:$0xff]
        %v991 = vld [vmem:[%s857 + $0x80] sm:$0xff]
        %v992 = vld [vmem:[%s857 + $0x88] sm:$0xff]
        %v993 = vld [vmem:[%s857 + $0x90] sm:$0xff]
        %v994 = vld [vmem:[%s857 + $0x98] sm:$0xff]
        %v995 = vld [vmem:[%s857 + $0xa0] sm:$0xff]
        %v996 = vld [vmem:[%s857 + $0xa8] sm:$0xff]
        %v997 = vld [vmem:[%s857 + $0xb0] sm:$0xff]
        %v998 = vld [vmem:[%s857 + $0xb8] sm:$0xff]
        %v999 = vld [vmem:[%s857 + $0xc0] sm:$0xff]
        %v1000 = vld [vmem:[%s857 + $0xc8] sm:$0xff]
        %v1001 = vld [vmem:[%s857 + $0xd0] sm:$0xff]
        %v1002 = vld [vmem:[%s857 + $0xd8] sm:$0xff]
        %v1003 = vld [vmem:[%s857 + $0xe0] sm:$0xff]
        %v1004 = vld [vmem:[%s857 + $0xe8] sm:$0xff]
        %v1005 = vld [vmem:[%s857 + $0xf0] sm:$0xff]
        %v1006 = vld [vmem:[%s857 + $0xf8] sm:$0xff]
        %v1007 = vld [vmem:[%s857 + $0x100] sm:$0xff]
        %v1008 = vld [vmem:[%s857 + $0x108] sm:$0xff]
        %v1009 = vld [vmem:[%s857 + $0x110] sm:$0xff]
        %v1010 = vld [vmem:[%s857 + $0x118] sm:$0xff]
        %v1011 = vld [vmem:[%s857 + $0x120] sm:$0xff]
        %v1012 = vld [vmem:[%s857 + $0x128] sm:$0xff]
        %v1013 = vld [vmem:[%s857 + $0x130] sm:$0xff]
        %v1014 = vld [vmem:[%s857 + $0x138] sm:$0xff]
        %v1015 = vld [vmem:[%s857 + $0x140] sm:$0xff]
        %v1016 = vld [vmem:[%s857 + $0x148] sm:$0xff]
        %v1017 = vld [vmem:[%s857 + $0x150] sm:$0xff]
        %v1018 = vld [vmem:[%s857 + $0x158] sm:$0xff]
        %v1019 = vld [vmem:[%s857 + $0x160] sm:$0xff]
        %v1020 = vld [vmem:[%s857 + $0x168] sm:$0xff]
        %v1021 = vld [vmem:[%s857 + $0x170] sm:$0xff]
        %v1022 = vld [vmem:[%s857 + $0x178] sm:$0xff]
        %v1023 = vld [vmem:[%s857 + $0x180] sm:$0xff]
        %v1024 = vld [vmem:[%s857 + $0x188] sm:$0xff]
        %v1025 = vld [vmem:[%s857 + $0x190] sm:$0xff]
        %v1026 = vld [vmem:[%s857 + $0x198] sm:$0xff]
        %v1027 = vld [vmem:[%s857 + $0x1a0] sm:$0xff]
        %v1028 = vld [vmem:[%s857 + $0x1a8] sm:$0xff]
        %v1029 = vld [vmem:[%s857 + $0x1b0] sm:$0xff]
        %v1030 = vld [vmem:[%s857 + $0x1b8] sm:$0xff]
        %v1031 = vld [vmem:[%s857 + $0x1c0] sm:$0xff]
        %v1032 = vld [vmem:[%s857 + $0x1c8] sm:$0xff]
        %v1033 = vld [vmem:[%s857 + $0x1d0] sm:$0xff]
        %v1034 = vld [vmem:[%s857 + $0x1d8] sm:$0xff]
        %v1035 = vld [vmem:[%s857 + $0x1e0] sm:$0xff]
        %v1036 = vld [vmem:[%s857 + $0x1e8] sm:$0xff]
        %v1037 = vld [vmem:[%s857 + $0x1f0] sm:$0xff]
        %v1038 = vld [vmem:[%s857 + $0x1f8] sm:$0xff]
        %v1039 = vld [vmem:[%s857 + $0x200] sm:$0xff]
        %v1040 = vld [vmem:[%s857 + $0x208] sm:$0xff]
        %v1041 = vld [vmem:[%s857 + $0x210] sm:$0xff]
        %v1042 = vld [vmem:[%s857 + $0x218] sm:$0xff]
        %v1043 = vld [vmem:[%s857 + $0x220] sm:$0xff]
        %v1044 = vld [vmem:[%s857 + $0x228] sm:$0xff]
        %v1045 = vld [vmem:[%s857 + $0x230] sm:$0xff]
        %v1046 = vld [vmem:[%s857 + $0x238] sm:$0xff]
        %v1047 = vld [vmem:[%s857 + $0x240] sm:$0xff]
        %v1048 = vld [vmem:[%s857 + $0x248] sm:$0xff]
        %v1049 = vld [vmem:[%s857 + $0x250] sm:$0xff]
        %v1050 = vld [vmem:[%s857 + $0x258] sm:$0xff]
        %v1051 = vld [vmem:[%s857 + $0x260] sm:$0xff]
        %v1052 = vld [vmem:[%s857 + $0x268] sm:$0xff]
        %v1053 = vld [vmem:[%s857 + $0x270] sm:$0xff]
        %v1054 = vld [vmem:[%s857 + $0x278] sm:$0xff]
        %v1055 = vld [vmem:[%s857 + $0x280] sm:$0xff]
        %v1056 = vld [vmem:[%s857 + $0x288] sm:$0xff]
        %v1057 = vld [vmem:[%s857 + $0x290] sm:$0xff]
        %v1058 = vld [vmem:[%s857 + $0x298] sm:$0xff]
        %v1059 = vld [vmem:[%s857 + $0x2a0] sm:$0xff]
        %v1060 = vld [vmem:[%s857 + $0x2a8] sm:$0xff]
        %v1061 = vld [vmem:[%s857 + $0x2b0] sm:$0xff]
        %v1062 = vld [vmem:[%s857 + $0x2b8] sm:$0xff]
        %v1063 = vld [vmem:[%s857 + $0x2c0] sm:$0xff]
        %v1064 = vld [vmem:[%s857 + $0x2c8] sm:$0xff]
        %v1065 = vld [vmem:[%s857 + $0x2d0] sm:$0xff]
        %v1066 = vld [vmem:[%s857 + $0x2d8] sm:$0xff]
        %v1067 = vld [vmem:[%s857 + $0x2e0] sm:$0xff]
        %v1068 = vld [vmem:[%s857 + $0x2e8] sm:$0xff]
        %v1069 = vld [vmem:[%s857 + $0x2f0] sm:$0xff]
        %v1070 = vld [vmem:[%s857 + $0x2f8] sm:$0xff]
        %v1071 = vld [vmem:[%s857 + $0x300] sm:$0xff]
        %v1072 = vld [vmem:[%s857 + $0x308] sm:$0xff]
        %v1073 = vld [vmem:[%s857 + $0x310] sm:$0xff]
        %v1074 = vld [vmem:[%s857 + $0x318] sm:$0xff]
        %v1075 = vld [vmem:[%s857 + $0x320] sm:$0xff]
        %v1076 = vld [vmem:[%s857 + $0x328] sm:$0xff]
        %v1077 = vld [vmem:[%s857 + $0x330] sm:$0xff]
        %v1078 = vld [vmem:[%s857 + $0x338] sm:$0xff]
        %v1079 = vld [vmem:[%s857 + $0x340] sm:$0xff]
        %v1080 = vld [vmem:[%s857 + $0x348] sm:$0xff]
        %v1081 = vld [vmem:[%s857 + $0x350] sm:$0xff]
        %v1082 = vld [vmem:[%s857 + $0x358] sm:$0xff]
        %v1083 = vld [vmem:[%s857 + $0x360] sm:$0xff]
        %v1084 = vld [vmem:[%s857 + $0x368] sm:$0xff]
        %v1085 = vld [vmem:[%s857 + $0x370] sm:$0xff]
        %v1086 = vld [vmem:[%s857 + $0x378] sm:$0xff]
        %v1087 = vld [vmem:[%s857 + $0x380] sm:$0xff]
        %v1088 = vld [vmem:[%s857 + $0x388] sm:$0xff]
        %v1089 = vld [vmem:[%s857 + $0x390] sm:$0xff]
        %v1090 = vld [vmem:[%s857 + $0x398] sm:$0xff]
        %v1091 = vld [vmem:[%s857 + $0x3a0] sm:$0xff]
        %v1092 = vld [vmem:[%s857 + $0x3a8] sm:$0xff]
        %v1093 = vld [vmem:[%s857 + $0x3b0] sm:$0xff]
        %v1094 = vld [vmem:[%s857 + $0x3b8] sm:$0xff]
        %v1095 = vld [vmem:[%s857 + $0x3c0] sm:$0xff]
        %v1096 = vld [vmem:[%s857 + $0x3c8] sm:$0xff]
        %v1097 = vld [vmem:[%s857 + $0x3d0] sm:$0xff]
        %v1098 = vld [vmem:[%s857 + $0x3d8] sm:$0xff]
        %v1099 = vld [vmem:[%s857 + $0x3e0] sm:$0xff]
        %v1100 = vld [vmem:[%s857 + $0x3e8] sm:$0xff]
        %v1101 = vld [vmem:[%s857 + $0x3f0] sm:$0xff]
        %v1102 = vld [vmem:[%s857 + $0x3f8] sm:$0xff]
        %v1103 = vld [vmem:[%s857 + $0x400] sm:$0xff]
        %v1104 = vld [vmem:[%s857 + $0x408] sm:$0xff]
        %v1105 = vld [vmem:[%s857 + $0x410] sm:$0xff]
        %v1106 = vld [vmem:[%s857 + $0x418] sm:$0xff]
        %v1107 = vld [vmem:[%s857 + $0x420] sm:$0xff]
        %v1108 = vld [vmem:[%s857 + $0x428] sm:$0xff]
        %v1109 = vld [vmem:[%s857 + $0x430] sm:$0xff]
        %v1110 = vld [vmem:[%s857 + $0x438] sm:$0xff]
        %v1111 = vld [vmem:[%s857 + $0x440] sm:$0xff]
        %v1112 = vld [vmem:[%s857 + $0x448] sm:$0xff]
        %v1113 = vld [vmem:[%s857 + $0x450] sm:$0xff]
        %v1114 = vld [vmem:[%s857 + $0x458] sm:$0xff]
        %v1115 = vld [vmem:[%s857 + $0x460] sm:$0xff]
        %v1116 = vld [vmem:[%s857 + $0x468] sm:$0xff]
        %v1117 = vld [vmem:[%s857 + $0x470] sm:$0xff]
        %v1118 = vld [vmem:[%s857 + $0x478] sm:$0xff]
        %v1119 = vld [vmem:[%s857 + $0x480] sm:$0xff]
        %v1120 = vld [vmem:[%s857 + $0x488] sm:$0xff]
        %v1121 = vld [vmem:[%s857 + $0x490] sm:$0xff]
        %v1122 = vld [vmem:[%s857 + $0x498] sm:$0xff]
        %v1123 = vld [vmem:[%s857 + $0x4a0] sm:$0xff]
        %v1124 = vld [vmem:[%s857 + $0x4a8] sm:$0xff]
        %v1125 = vld [vmem:[%s857 + $0x4b0] sm:$0xff]
        %v1126 = vld [vmem:[%s857 + $0x4b8] sm:$0xff]
        %v1127 = vld [vmem:[%s857 + $0x4c0] sm:$0xff]
        %v1128 = vld [vmem:[%s857 + $0x4c8] sm:$0xff]
        %v1129 = vld [vmem:[%s857 + $0x4d0] sm:$0xff]
        %v1130 = vld [vmem:[%s857 + $0x4d8] sm:$0xff]
        %v1131 = vld [vmem:[%s857 + $0x4e0] sm:$0xff]
        %v1132 = vld [vmem:[%s857 + $0x4e8] sm:$0xff]
        %v1133 = vld [vmem:[%s857 + $0x4f0] sm:$0xff]
        %v1134 = vld [vmem:[%s857 + $0x4f8] sm:$0xff]
        %v1135 = vld [vmem:[%s857 + $0x500] sm:$0xff]
        %v1136 = vld [vmem:[%s857 + $0x508] sm:$0xff]
        %v1137 = vld [vmem:[%s857 + $0x510] sm:$0xff]
        %v1138 = vld [vmem:[%s857 + $0x518] sm:$0xff]
        %v1139 = vld [vmem:[%s857 + $0x520] sm:$0xff]
        %v1140 = vld [vmem:[%s857 + $0x528] sm:$0xff]
        %v1141 = vld [vmem:[%s857 + $0x530] sm:$0xff]
        %v1142 = vld [vmem:[%s857 + $0x538] sm:$0xff]
        %v1143 = vld [vmem:[%s857 + $0x540] sm:$0xff]
        %v1144 = vld [vmem:[%s857 + $0x548] sm:$0xff]
        %v1145 = vld [vmem:[%s857 + $0x550] sm:$0xff]
        %v1146 = vld [vmem:[%s857 + $0x558] sm:$0xff]
        %v1147 = vld [vmem:[%s857 + $0x560] sm:$0xff]
        %v1148 = vld [vmem:[%s857 + $0x568] sm:$0xff]
        %v1149 = vld [vmem:[%s857 + $0x570] sm:$0xff]
        %v1150 = vld [vmem:[%s857 + $0x578] sm:$0xff]
        %v1151 = vld [vmem:[%s857 + $0x580] sm:$0xff]
        %v1152 = vld [vmem:[%s857 + $0x588] sm:$0xff]
        %v1153 = vld [vmem:[%s857 + $0x590] sm:$0xff]
        %v1154 = vld [vmem:[%s857 + $0x598] sm:$0xff]
        %v1155 = vld [vmem:[%s857 + $0x5a0] sm:$0xff]
        %v1156 = vld [vmem:[%s857 + $0x5a8] sm:$0xff]
        %v1157 = vld [vmem:[%s857 + $0x5b0] sm:$0xff]
        %v1158 = vld [vmem:[%s857 + $0x5b8] sm:$0xff]
        %v1159 = vld [vmem:[%s857 + $0x5c0] sm:$0xff]
        %v1160 = vld [vmem:[%s857 + $0x5c8] sm:$0xff]
        %v1161 = vld [vmem:[%s857 + $0x5d0] sm:$0xff]
        %v1162 = vld [vmem:[%s857 + $0x5d8] sm:$0xff]
        %v1163 = vld [vmem:[%s857 + $0x5e0] sm:$0xff]
        %v1164 = vld [vmem:[%s857 + $0x5e8] sm:$0xff]
        %v1165 = vld [vmem:[%s857 + $0x5f0] sm:$0xff]
        %v1166 = vld [vmem:[%s857 + $0x5f8] sm:$0xff]
        %v1167 = vld [vmem:[%s857 + $0x600] sm:$0xff]
        %v1168 = vld [vmem:[%s857 + $0x608] sm:$0xff]
        %v1169 = vld [vmem:[%s857 + $0x610] sm:$0xff]
        %v1170 = vld [vmem:[%s857 + $0x618] sm:$0xff]
        %v1171 = vld [vmem:[%s857 + $0x620] sm:$0xff]
        %v1172 = vld [vmem:[%s857 + $0x628] sm:$0xff]
        %v1173 = vld [vmem:[%s857 + $0x630] sm:$0xff]
        %v1174 = vld [vmem:[%s857 + $0x638] sm:$0xff]
        %v1175 = vld [vmem:[%s857 + $0x640] sm:$0xff]
        %v1176 = vld [vmem:[%s857 + $0x648] sm:$0xff]
        %v1177 = vld [vmem:[%s857 + $0x650] sm:$0xff]
        %v1178 = vld [vmem:[%s857 + $0x658] sm:$0xff]
        %v1179 = vld [vmem:[%s857 + $0x660] sm:$0xff]
        %v1180 = vld [vmem:[%s857 + $0x668] sm:$0xff]
        %v1181 = vld [vmem:[%s857 + $0x670] sm:$0xff]
        %v1182 = vld [vmem:[%s857 + $0x678] sm:$0xff]
        %v1183 = vld [vmem:[%s857 + $0x680] sm:$0xff]
        %v1184 = vld [vmem:[%s857 + $0x688] sm:$0xff]
        %v1185 = vld [vmem:[%s857 + $0x690] sm:$0xff]
        %v1186 = vld [vmem:[%s857 + $0x698] sm:$0xff]
        %v1187 = vld [vmem:[%s857 + $0x6a0] sm:$0xff]
        %v1188 = vld [vmem:[%s857 + $0x6a8] sm:$0xff]
        %v1189 = vld [vmem:[%s857 + $0x6b0] sm:$0xff]
        %v1190 = vld [vmem:[%s857 + $0x6b8] sm:$0xff]
        %v1191 = vld [vmem:[%s857 + $0x6c0] sm:$0xff]
        %v1192 = vld [vmem:[%s857 + $0x6c8] sm:$0xff]
        %v1193 = vld [vmem:[%s857 + $0x6d0] sm:$0xff]
        %v1194 = vld [vmem:[%s857 + $0x6d8] sm:$0xff]
        %v1195 = vld [vmem:[%s857 + $0x6e0] sm:$0xff]
        %v1196 = vld [vmem:[%s857 + $0x6e8] sm:$0xff]
        %v1197 = vld [vmem:[%s857 + $0x6f0] sm:$0xff]
        %v1198 = vld [vmem:[%s857 + $0x6f8] sm:$0xff]
        %v1199 = vld [vmem:[%s857 + $0x700] sm:$0xff]
        %v1200 = vld [vmem:[%s857 + $0x708] sm:$0xff]
        %v1201 = vld [vmem:[%s857 + $0x710] sm:$0xff]
        %v1202 = vld [vmem:[%s857 + $0x718] sm:$0xff]
        %v1203 = vld [vmem:[%s857 + $0x720] sm:$0xff]
        %v1204 = vld [vmem:[%s857 + $0x728] sm:$0xff]
        %v1205 = vld [vmem:[%s857 + $0x730] sm:$0xff]
        %v1206 = vld [vmem:[%s857 + $0x738] sm:$0xff]
        %v1207 = vld [vmem:[%s857 + $0x740] sm:$0xff]
        %v1208 = vld [vmem:[%s857 + $0x748] sm:$0xff]
        %v1209 = vld [vmem:[%s857 + $0x750] sm:$0xff]
        %v1210 = vld [vmem:[%s857 + $0x758] sm:$0xff]
        %v1211 = vld [vmem:[%s857 + $0x760] sm:$0xff]
        %v1212 = vld [vmem:[%s857 + $0x768] sm:$0xff]
        %v1213 = vld [vmem:[%s857 + $0x770] sm:$0xff]
        %v1214 = vld [vmem:[%s857 + $0x778] sm:$0xff]
        %v1215 = vld [vmem:[%s857 + $0x780] sm:$0xff]
        %v1216 = vld [vmem:[%s857 + $0x788] sm:$0xff]
        %v1217 = vld [vmem:[%s857 + $0x790] sm:$0xff]
        %v1218 = vld [vmem:[%s857 + $0x798] sm:$0xff]
        %v1219 = vld [vmem:[%s857 + $0x7a0] sm:$0xff]
        %v1220 = vld [vmem:[%s857 + $0x7a8] sm:$0xff]
        %v1221 = vld [vmem:[%s857 + $0x7b0] sm:$0xff]
        %v1222 = vld [vmem:[%s857 + $0x7b8] sm:$0xff]
        %v1223 = vld [vmem:[%s857 + $0x7c0] sm:$0xff]
        %v1224 = vld [vmem:[%s857 + $0x7c8] sm:$0xff]
        %v1225 = vld [vmem:[%s857 + $0x7d0] sm:$0xff]
        %v1226 = vld [vmem:[%s857 + $0x7d8] sm:$0xff]
        %v1227 = vld [vmem:[%s857 + $0x7e0] sm:$0xff]
        %v1228 = vld [vmem:[%s857 + $0x7e8] sm:$0xff]
        %v1229 = vld [vmem:[%s857 + $0x7f0] sm:$0xff]
        %v1230 = vld [vmem:[%s857 + $0x7f8] sm:$0xff]
        %v1231 = vld [vmem:[%s857 + $0x800] sm:$0xff]
        %v1232 = vld [vmem:[%s857 + $0x808] sm:$0xff]
        %v1233 = vld [vmem:[%s857 + $0x810] sm:$0xff]
        %v1234 = vld [vmem:[%s857 + $0x818] sm:$0xff]
        %v1235 = vld [vmem:[%s857 + $0x820] sm:$0xff]
        %v1236 = vld [vmem:[%s857 + $0x828] sm:$0xff]
        %v1237 = vld [vmem:[%s857 + $0x830] sm:$0xff]
        %v1238 = vld [vmem:[%s857 + $0x838] sm:$0xff]
        %v1239 = vld [vmem:[%s857 + $0x840] sm:$0xff]
        %v1240 = vld [vmem:[%s857 + $0x848] sm:$0xff]
        %v1241 = vld [vmem:[%s857 + $0x850] sm:$0xff]
        %v1242 = vld [vmem:[%s857 + $0x858] sm:$0xff]
        %v1243 = vld [vmem:[%s857 + $0x860] sm:$0xff]
        %v1244 = vld [vmem:[%s857 + $0x868] sm:$0xff]
        %v1245 = vld [vmem:[%s857 + $0x870] sm:$0xff]
        %v1246 = vld [vmem:[%s857 + $0x878] sm:$0xff]
        %v1247 = vld [vmem:[%s857 + $0x880] sm:$0xff]
        %v1248 = vld [vmem:[%s857 + $0x888] sm:$0xff]
        %v1249 = vld [vmem:[%s857 + $0x890] sm:$0xff]
        %v1250 = vld [vmem:[%s857 + $0x898] sm:$0xff]
        %v1251 = vld [vmem:[%s857 + $0x8a0] sm:$0xff]
        %v1252 = vld [vmem:[%s857 + $0x8a8] sm:$0xff]
        %v1253 = vld [vmem:[%s857 + $0x8b0] sm:$0xff]
        %v1254 = vld [vmem:[%s857 + $0x8b8] sm:$0xff]
        %v1255 = vld [vmem:[%s857 + $0x8c0] sm:$0xff]
        %v1256 = vld [vmem:[%s857 + $0x8c8] sm:$0xff]
        %v1257 = vld [vmem:[%s857 + $0x8d0] sm:$0xff]
        %v1258 = vld [vmem:[%s857 + $0x8d8] sm:$0xff]
        %v1259 = vld [vmem:[%s857 + $0x8e0] sm:$0xff]
        %v1260 = vld [vmem:[%s857 + $0x8e8] sm:$0xff]
        %v1261 = vld [vmem:[%s857 + $0x8f0] sm:$0xff]
        %v1262 = vld [vmem:[%s857 + $0x8f8] sm:$0xff]
        %v1263 = vld [vmem:[%s895] sm:$0xf]
        %v1265 = vlaneseq
        %v1266 = vshrl.u32 %v1265, 7
        %v1267 = vsub.s32 0, %v1266
        %v1268 = vrot.slane %v1263, %v1267
        %v1269 = vlaneseq
        %v1270 = vshrl.u32 %v1269, 7
        %v1271 = vsub.s32 1, %v1270
        %v1272 = vrot.slane %v1263, %v1271
        %v1273 = vlaneseq
        %v1274 = vshrl.u32 %v1273, 7
        %v1275 = vsub.s32 2, %v1274
        %v1276 = vrot.slane %v1263, %v1275
        %v1277 = vlaneseq
        %v1278 = vshrl.u32 %v1277, 7
        %v1279 = vsub.s32 3, %v1278
        %v1280 = vrot.slane %v1263, %v1279
        %v1573 = vunpack.c.l.b16 %v975
        %v1574 = vunpack.c.h.b16 %v975
        %v1575 = vunpack.c.l.b16 %v976
        %v1576 = vunpack.c.h.b16 %v976
        %v1577 = vunpack.c.l.b16 %v977
        %v1578 = vunpack.c.h.b16 %v977
        %v1579 = vunpack.c.l.b16 %v978
        %v1580 = vunpack.c.h.b16 %v978
        %v1581 = vunpack.c.l.b16 %v979
        %v1582 = vunpack.c.h.b16 %v979
        %v1583 = vunpack.c.l.b16 %v980
        %v1584 = vunpack.c.h.b16 %v980
        %v1585 = vunpack.c.l.b16 %v981
        %v1586 = vunpack.c.h.b16 %v981
        %v1587 = vunpack.c.l.b16 %v982
        %v1588 = vunpack.c.h.b16 %v982
        %v1589 = vunpack.c.l.b16 %v983
        %v1590 = vunpack.c.h.b16 %v983
        %v1591 = vunpack.c.l.b16 %v984
        %v1592 = vunpack.c.h.b16 %v984
        %v1593 = vunpack.c.l.b16 %v985
        %v1594 = vunpack.c.h.b16 %v985
        %v1595 = vunpack.c.l.b16 %v986
        %v1596 = vunpack.c.h.b16 %v986
        %v1597 = vunpack.c.l.b16 %v987
        %v1598 = vunpack.c.h.b16 %v987
        %v1599 = vunpack.c.l.b16 %v988
        %v1600 = vunpack.c.h.b16 %v988
        %v1601 = vunpack.c.l.b16 %v989
        %v1602 = vunpack.c.h.b16 %v989
        %v1603 = vunpack.c.l.b16 %v990
        %v1604 = vunpack.c.h.b16 %v990
        %v1605 = vunpack.c.l.b16 %v991
        %v1606 = vunpack.c.h.b16 %v991
        %v1607 = vunpack.c.l.b16 %v992
        %v1608 = vunpack.c.h.b16 %v992
        %v1609 = vunpack.c.l.b16 %v993
        %v1610 = vunpack.c.h.b16 %v993
        %v1611 = vunpack.c.l.b16 %v994
        %v1612 = vunpack.c.h.b16 %v994
        %v1613 = vunpack.c.l.b16 %v995
        %v1614 = vunpack.c.h.b16 %v995
        %v1615 = vunpack.c.l.b16 %v996
        %v1616 = vunpack.c.h.b16 %v996
        %v1617 = vunpack.c.l.b16 %v997
        %v1618 = vunpack.c.h.b16 %v997
        %v1619 = vunpack.c.l.b16 %v998
        %v1620 = vunpack.c.h.b16 %v998
        %v1621 = vunpack.c.l.b16 %v999
        %v1622 = vunpack.c.h.b16 %v999
        %v1623 = vunpack.c.l.b16 %v1000
        %v1624 = vunpack.c.h.b16 %v1000
        %v1625 = vunpack.c.l.b16 %v1001
        %v1626 = vunpack.c.h.b16 %v1001
        %v1627 = vunpack.c.l.b16 %v1002
        %v1628 = vunpack.c.h.b16 %v1002
        %v1629 = vunpack.c.l.b16 %v1003
        %v1630 = vunpack.c.h.b16 %v1003
        %v1631 = vunpack.c.l.b16 %v1004
        %v1632 = vunpack.c.h.b16 %v1004
        %v1633 = vunpack.c.l.b16 %v1005
        %v1634 = vunpack.c.h.b16 %v1005
        %v1635 = vunpack.c.l.b16 %v1006
        %v1636 = vunpack.c.h.b16 %v1006
        %v1637 = vunpack.c.l.b16 %v1007
        %v1638 = vunpack.c.h.b16 %v1007
        %v1639 = vunpack.c.l.b16 %v1008
        %v1640 = vunpack.c.h.b16 %v1008
        %v1641 = vunpack.c.l.b16 %v1009
        %v1642 = vunpack.c.h.b16 %v1009
        %v1643 = vunpack.c.l.b16 %v1010
        %v1644 = vunpack.c.h.b16 %v1010
        %v1645 = vunpack.c.l.b16 %v1011
        %v1646 = vunpack.c.h.b16 %v1011
        %v1647 = vunpack.c.l.b16 %v1012
        %v1648 = vunpack.c.h.b16 %v1012
        %v1649 = vunpack.c.l.b16 %v1013
        %v1650 = vunpack.c.h.b16 %v1013
        %v1651 = vunpack.c.l.b16 %v1014
        %v1652 = vunpack.c.h.b16 %v1014
        %v1653 = vunpack.c.l.b16 %v1015
        %v1654 = vunpack.c.h.b16 %v1015
        %v1655 = vunpack.c.l.b16 %v1016
        %v1656 = vunpack.c.h.b16 %v1016
        %v1657 = vunpack.c.l.b16 %v1017
        %v1658 = vunpack.c.h.b16 %v1017
        %v1659 = vunpack.c.l.b16 %v1018
        %v1660 = vunpack.c.h.b16 %v1018
        %v1661 = vunpack.c.l.b16 %v1019
        %v1662 = vunpack.c.h.b16 %v1019
        %v1663 = vunpack.c.l.b16 %v1020
        %v1664 = vunpack.c.h.b16 %v1020
        %v1665 = vunpack.c.l.b16 %v1021
        %v1666 = vunpack.c.h.b16 %v1021
        %v1667 = vunpack.c.l.b16 %v1022
        %v1668 = vunpack.c.h.b16 %v1022
        %v1669 = vunpack.c.l.b16 %v1023
        %v1670 = vunpack.c.h.b16 %v1023
        %v1671 = vunpack.c.l.b16 %v1024
        %v1672 = vunpack.c.h.b16 %v1024
        %v1673 = vunpack.c.l.b16 %v1025
        %v1674 = vunpack.c.h.b16 %v1025
        %v1675 = vunpack.c.l.b16 %v1026
        %v1676 = vunpack.c.h.b16 %v1026
        %v1677 = vunpack.c.l.b16 %v1027
        %v1678 = vunpack.c.h.b16 %v1027
        %v1679 = vunpack.c.l.b16 %v1028
        %v1680 = vunpack.c.h.b16 %v1028
        %v1681 = vunpack.c.l.b16 %v1029
        %v1682 = vunpack.c.h.b16 %v1029
        %v1683 = vunpack.c.l.b16 %v1030
        %v1684 = vunpack.c.h.b16 %v1030
        %v1685 = vunpack.c.l.b16 %v1031
        %v1686 = vunpack.c.h.b16 %v1031
        %v1687 = vunpack.c.l.b16 %v1032
        %v1688 = vunpack.c.h.b16 %v1032
        %v1689 = vunpack.c.l.b16 %v1033
        %v1690 = vunpack.c.h.b16 %v1033
        %v1691 = vunpack.c.l.b16 %v1034
        %v1692 = vunpack.c.h.b16 %v1034
        %v1693 = vunpack.c.l.b16 %v1035
        %v1694 = vunpack.c.h.b16 %v1035
        %v1695 = vunpack.c.l.b16 %v1036
        %v1696 = vunpack.c.h.b16 %v1036
        %v1697 = vunpack.c.l.b16 %v1037
        %v1698 = vunpack.c.h.b16 %v1037
        %v1699 = vunpack.c.l.b16 %v1038
        %v1700 = vunpack.c.h.b16 %v1038
        %v1701 = vunpack.c.l.b16 %v1039
        %v1702 = vunpack.c.h.b16 %v1039
        %v1703 = vunpack.c.l.b16 %v1040
        %v1704 = vunpack.c.h.b16 %v1040
        %v1705 = vunpack.c.l.b16 %v1041
        %v1706 = vunpack.c.h.b16 %v1041
        %v1707 = vunpack.c.l.b16 %v1042
        %v1708 = vunpack.c.h.b16 %v1042
        %v1709 = vunpack.c.l.b16 %v1043
        %v1710 = vunpack.c.h.b16 %v1043
        %v1711 = vunpack.c.l.b16 %v1044
        %v1712 = vunpack.c.h.b16 %v1044
        %v1713 = vunpack.c.l.b16 %v1045
        %v1714 = vunpack.c.h.b16 %v1045
        %v1715 = vunpack.c.l.b16 %v1046
        %v1716 = vunpack.c.h.b16 %v1046
        %v1717 = vunpack.c.l.b16 %v1047
        %v1718 = vunpack.c.h.b16 %v1047
        %v1719 = vunpack.c.l.b16 %v1048
        %v1720 = vunpack.c.h.b16 %v1048
        %v1721 = vunpack.c.l.b16 %v1049
        %v1722 = vunpack.c.h.b16 %v1049
        %v1723 = vunpack.c.l.b16 %v1050
        %v1724 = vunpack.c.h.b16 %v1050
        %v1725 = vunpack.c.l.b16 %v1051
        %v1726 = vunpack.c.h.b16 %v1051
        %v1727 = vunpack.c.l.b16 %v1052
        %v1728 = vunpack.c.h.b16 %v1052
        %v1729 = vunpack.c.l.b16 %v1053
        %v1730 = vunpack.c.h.b16 %v1053
        %v1731 = vunpack.c.l.b16 %v1054
        %v1732 = vunpack.c.h.b16 %v1054
        %v1733 = vunpack.c.l.b16 %v1055
        %v1734 = vunpack.c.h.b16 %v1055
        %v1735 = vunpack.c.l.b16 %v1056
        %v1736 = vunpack.c.h.b16 %v1056
        %v1737 = vunpack.c.l.b16 %v1057
        %v1738 = vunpack.c.h.b16 %v1057
        %v1739 = vunpack.c.l.b16 %v1058
        %v1740 = vunpack.c.h.b16 %v1058
        %v1741 = vunpack.c.l.b16 %v1059
        %v1742 = vunpack.c.h.b16 %v1059
        %v1743 = vunpack.c.l.b16 %v1060
        %v1744 = vunpack.c.h.b16 %v1060
        %v1745 = vunpack.c.l.b16 %v1061
        %v1746 = vunpack.c.h.b16 %v1061
        %v1747 = vunpack.c.l.b16 %v1062
        %v1748 = vunpack.c.h.b16 %v1062
        %v1749 = vunpack.c.l.b16 %v1063
        %v1750 = vunpack.c.h.b16 %v1063
        %v1751 = vunpack.c.l.b16 %v1064
        %v1752 = vunpack.c.h.b16 %v1064
        %v1753 = vunpack.c.l.b16 %v1065
        %v1754 = vunpack.c.h.b16 %v1065
        %v1755 = vunpack.c.l.b16 %v1066
        %v1756 = vunpack.c.h.b16 %v1066
        %v1757 = vunpack.c.l.b16 %v1067
        %v1758 = vunpack.c.h.b16 %v1067
        %v1759 = vunpack.c.l.b16 %v1068
        %v1760 = vunpack.c.h.b16 %v1068
        %v1761 = vunpack.c.l.b16 %v1069
        %v1762 = vunpack.c.h.b16 %v1069
        %v1763 = vunpack.c.l.b16 %v1070
        %v1764 = vunpack.c.h.b16 %v1070
        %v1765 = vunpack.c.l.b16 %v1071
        %v1766 = vunpack.c.h.b16 %v1071
        %v1767 = vunpack.c.l.b16 %v1072
        %v1768 = vunpack.c.h.b16 %v1072
        %v1769 = vunpack.c.l.b16 %v1073
        %v1770 = vunpack.c.h.b16 %v1073
        %v1771 = vunpack.c.l.b16 %v1074
        %v1772 = vunpack.c.h.b16 %v1074
        %v1773 = vunpack.c.l.b16 %v1075
        %v1774 = vunpack.c.h.b16 %v1075
        %v1775 = vunpack.c.l.b16 %v1076
        %v1776 = vunpack.c.h.b16 %v1076
        %v1777 = vunpack.c.l.b16 %v1077
        %v1778 = vunpack.c.h.b16 %v1077
        %v1779 = vunpack.c.l.b16 %v1078
        %v1780 = vunpack.c.h.b16 %v1078
        %v1781 = vunpack.c.l.b16 %v1079
        %v1782 = vunpack.c.h.b16 %v1079
        %v1783 = vunpack.c.l.b16 %v1080
        %v1784 = vunpack.c.h.b16 %v1080
        %v1785 = vunpack.c.l.b16 %v1081
        %v1786 = vunpack.c.h.b16 %v1081
        %v1787 = vunpack.c.l.b16 %v1082
        %v1788 = vunpack.c.h.b16 %v1082
        %v1789 = vunpack.c.l.b16 %v1083
        %v1790 = vunpack.c.h.b16 %v1083
        %v1791 = vunpack.c.l.b16 %v1084
        %v1792 = vunpack.c.h.b16 %v1084
        %v1793 = vunpack.c.l.b16 %v1085
        %v1794 = vunpack.c.h.b16 %v1085
        %v1795 = vunpack.c.l.b16 %v1086
        %v1796 = vunpack.c.h.b16 %v1086
        %v1797 = vunpack.c.l.b16 %v1087
        %v1798 = vunpack.c.h.b16 %v1087
        %v1799 = vunpack.c.l.b16 %v1088
        %v1800 = vunpack.c.h.b16 %v1088
        %v1801 = vunpack.c.l.b16 %v1089
        %v1802 = vunpack.c.h.b16 %v1089
        %v1803 = vunpack.c.l.b16 %v1090
        %v1804 = vunpack.c.h.b16 %v1090
        %v1805 = vunpack.c.l.b16 %v1091
        %v1806 = vunpack.c.h.b16 %v1091
        %v1807 = vunpack.c.l.b16 %v1092
        %v1808 = vunpack.c.h.b16 %v1092
        %v1809 = vunpack.c.l.b16 %v1093
        %v1810 = vunpack.c.h.b16 %v1093
        %v1811 = vunpack.c.l.b16 %v1094
        %v1812 = vunpack.c.h.b16 %v1094
        %v1813 = vunpack.c.l.b16 %v1095
        %v1814 = vunpack.c.h.b16 %v1095
        %v1815 = vunpack.c.l.b16 %v1096
        %v1816 = vunpack.c.h.b16 %v1096
        %v1817 = vunpack.c.l.b16 %v1097
        %v1818 = vunpack.c.h.b16 %v1097
        %v1819 = vunpack.c.l.b16 %v1098
        %v1820 = vunpack.c.h.b16 %v1098
        %v1821 = vunpack.c.l.b16 %v1099
        %v1822 = vunpack.c.h.b16 %v1099
        %v1823 = vunpack.c.l.b16 %v1100
        %v1824 = vunpack.c.h.b16 %v1100
        %v1825 = vunpack.c.l.b16 %v1101
        %v1826 = vunpack.c.h.b16 %v1101
        %v1827 = vunpack.c.l.b16 %v1102
        %v1828 = vunpack.c.h.b16 %v1102
        %v1829 = vunpack.c.l.b16 %v1103
        %v1830 = vunpack.c.h.b16 %v1103
        %v1831 = vunpack.c.l.b16 %v1104
        %v1832 = vunpack.c.h.b16 %v1104
        %v1833 = vunpack.c.l.b16 %v1105
        %v1834 = vunpack.c.h.b16 %v1105
        %v1835 = vunpack.c.l.b16 %v1106
        %v1836 = vunpack.c.h.b16 %v1106
        %v1837 = vunpack.c.l.b16 %v1107
        %v1838 = vunpack.c.h.b16 %v1107
        %v1839 = vunpack.c.l.b16 %v1108
        %v1840 = vunpack.c.h.b16 %v1108
        %v1841 = vunpack.c.l.b16 %v1109
        %v1842 = vunpack.c.h.b16 %v1109
        %v1843 = vunpack.c.l.b16 %v1110
        %v1844 = vunpack.c.h.b16 %v1110
        %v1845 = vunpack.c.l.b16 %v1111
        %v1846 = vunpack.c.h.b16 %v1111
        %v1847 = vunpack.c.l.b16 %v1112
        %v1848 = vunpack.c.h.b16 %v1112
        %v1849 = vunpack.c.l.b16 %v1113
        %v1850 = vunpack.c.h.b16 %v1113
        %v1851 = vunpack.c.l.b16 %v1114
        %v1852 = vunpack.c.h.b16 %v1114
        %v1853 = vunpack.c.l.b16 %v1115
        %v1854 = vunpack.c.h.b16 %v1115
        %v1855 = vunpack.c.l.b16 %v1116
        %v1856 = vunpack.c.h.b16 %v1116
        %v1857 = vunpack.c.l.b16 %v1117
        %v1858 = vunpack.c.h.b16 %v1117
        %v1859 = vunpack.c.l.b16 %v1118
        %v1860 = vunpack.c.h.b16 %v1118
        %v1861 = vunpack.c.l.b16 %v1119
        %v1862 = vunpack.c.h.b16 %v1119
        %v1863 = vunpack.c.l.b16 %v1120
        %v1864 = vunpack.c.h.b16 %v1120
        %v1865 = vunpack.c.l.b16 %v1121
        %v1866 = vunpack.c.h.b16 %v1121
        %v1867 = vunpack.c.l.b16 %v1122
        %v1868 = vunpack.c.h.b16 %v1122
        %v1869 = vunpack.c.l.b16 %v1123
        %v1870 = vunpack.c.h.b16 %v1123
        %v1871 = vunpack.c.l.b16 %v1124
        %v1872 = vunpack.c.h.b16 %v1124
        %v1873 = vunpack.c.l.b16 %v1125
        %v1874 = vunpack.c.h.b16 %v1125
        %v1875 = vunpack.c.l.b16 %v1126
        %v1876 = vunpack.c.h.b16 %v1126
        %v1877 = vunpack.c.l.b16 %v1127
        %v1878 = vunpack.c.h.b16 %v1127
        %v1879 = vunpack.c.l.b16 %v1128
        %v1880 = vunpack.c.h.b16 %v1128
        %v1881 = vunpack.c.l.b16 %v1129
        %v1882 = vunpack.c.h.b16 %v1129
        %v1883 = vunpack.c.l.b16 %v1130
        %v1884 = vunpack.c.h.b16 %v1130
        %v1885 = vunpack.c.l.b16 %v1131
        %v1886 = vunpack.c.h.b16 %v1131
        %v1887 = vunpack.c.l.b16 %v1132
        %v1888 = vunpack.c.h.b16 %v1132
        %v1889 = vunpack.c.l.b16 %v1133
        %v1890 = vunpack.c.h.b16 %v1133
        %v1891 = vunpack.c.l.b16 %v1134
        %v1892 = vunpack.c.h.b16 %v1134
        %v1893 = vunpack.c.l.b16 %v1135
        %v1894 = vunpack.c.h.b16 %v1135
        %v1895 = vunpack.c.l.b16 %v1136
        %v1896 = vunpack.c.h.b16 %v1136
        %v1897 = vunpack.c.l.b16 %v1137
        %v1898 = vunpack.c.h.b16 %v1137
        %v1899 = vunpack.c.l.b16 %v1138
        %v1900 = vunpack.c.h.b16 %v1138
        %v1901 = vunpack.c.l.b16 %v1139
        %v1902 = vunpack.c.h.b16 %v1139
        %v1903 = vunpack.c.l.b16 %v1140
        %v1904 = vunpack.c.h.b16 %v1140
        %v1905 = vunpack.c.l.b16 %v1141
        %v1906 = vunpack.c.h.b16 %v1141
        %v1907 = vunpack.c.l.b16 %v1142
        %v1908 = vunpack.c.h.b16 %v1142
        %v1909 = vunpack.c.l.b16 %v1143
        %v1910 = vunpack.c.h.b16 %v1143
        %v1911 = vunpack.c.l.b16 %v1144
        %v1912 = vunpack.c.h.b16 %v1144
        %v1913 = vunpack.c.l.b16 %v1145
        %v1914 = vunpack.c.h.b16 %v1145
        %v1915 = vunpack.c.l.b16 %v1146
        %v1916 = vunpack.c.h.b16 %v1146
        %v1917 = vunpack.c.l.b16 %v1147
        %v1918 = vunpack.c.h.b16 %v1147
        %v1919 = vunpack.c.l.b16 %v1148
        %v1920 = vunpack.c.h.b16 %v1148
        %v1921 = vunpack.c.l.b16 %v1149
        %v1922 = vunpack.c.h.b16 %v1149
        %v1923 = vunpack.c.l.b16 %v1150
        %v1924 = vunpack.c.h.b16 %v1150
        %v1925 = vunpack.c.l.b16 %v1151
        %v1926 = vunpack.c.h.b16 %v1151
        %v1927 = vunpack.c.l.b16 %v1152
        %v1928 = vunpack.c.h.b16 %v1152
        %v1929 = vunpack.c.l.b16 %v1153
        %v1930 = vunpack.c.h.b16 %v1153
        %v1931 = vunpack.c.l.b16 %v1154
        %v1932 = vunpack.c.h.b16 %v1154
        %v1933 = vunpack.c.l.b16 %v1155
        %v1934 = vunpack.c.h.b16 %v1155
        %v1935 = vunpack.c.l.b16 %v1156
        %v1936 = vunpack.c.h.b16 %v1156
        %v1937 = vunpack.c.l.b16 %v1157
        %v1938 = vunpack.c.h.b16 %v1157
        %v1939 = vunpack.c.l.b16 %v1158
        %v1940 = vunpack.c.h.b16 %v1158
        %v1941 = vunpack.c.l.b16 %v1159
        %v1942 = vunpack.c.h.b16 %v1159
        %v1943 = vunpack.c.l.b16 %v1160
        %v1944 = vunpack.c.h.b16 %v1160
        %v1945 = vunpack.c.l.b16 %v1161
        %v1946 = vunpack.c.h.b16 %v1161
        %v1947 = vunpack.c.l.b16 %v1162
        %v1948 = vunpack.c.h.b16 %v1162
        %v1949 = vunpack.c.l.b16 %v1163
        %v1950 = vunpack.c.h.b16 %v1163
        %v1951 = vunpack.c.l.b16 %v1164
        %v1952 = vunpack.c.h.b16 %v1164
        %v1953 = vunpack.c.l.b16 %v1165
        %v1954 = vunpack.c.h.b16 %v1165
        %v1955 = vunpack.c.l.b16 %v1166
        %v1956 = vunpack.c.h.b16 %v1166
        %v1957 = vunpack.c.l.b16 %v1167
        %v1958 = vunpack.c.h.b16 %v1167
        %v1959 = vunpack.c.l.b16 %v1168
        %v1960 = vunpack.c.h.b16 %v1168
        %v1961 = vunpack.c.l.b16 %v1169
        %v1962 = vunpack.c.h.b16 %v1169
        %v1963 = vunpack.c.l.b16 %v1170
        %v1964 = vunpack.c.h.b16 %v1170
        %v1965 = vunpack.c.l.b16 %v1171
        %v1966 = vunpack.c.h.b16 %v1171
        %v1967 = vunpack.c.l.b16 %v1172
        %v1968 = vunpack.c.h.b16 %v1172
        %v1969 = vunpack.c.l.b16 %v1173
        %v1970 = vunpack.c.h.b16 %v1173
        %v1971 = vunpack.c.l.b16 %v1174
        %v1972 = vunpack.c.h.b16 %v1174
        %v1973 = vunpack.c.l.b16 %v1175
        %v1974 = vunpack.c.h.b16 %v1175
        %v1975 = vunpack.c.l.b16 %v1176
        %v1976 = vunpack.c.h.b16 %v1176
        %v1977 = vunpack.c.l.b16 %v1177
        %v1978 = vunpack.c.h.b16 %v1177
        %v1979 = vunpack.c.l.b16 %v1178
        %v1980 = vunpack.c.h.b16 %v1178
        %v1981 = vunpack.c.l.b16 %v1179
        %v1982 = vunpack.c.h.b16 %v1179
        %v1983 = vunpack.c.l.b16 %v1180
        %v1984 = vunpack.c.h.b16 %v1180
        %v1985 = vunpack.c.l.b16 %v1181
        %v1986 = vunpack.c.h.b16 %v1181
        %v1987 = vunpack.c.l.b16 %v1182
        %v1988 = vunpack.c.h.b16 %v1182
        %v1989 = vunpack.c.l.b16 %v1183
        %v1990 = vunpack.c.h.b16 %v1183
        %v1991 = vunpack.c.l.b16 %v1184
        %v1992 = vunpack.c.h.b16 %v1184
        %v1993 = vunpack.c.l.b16 %v1185
        %v1994 = vunpack.c.h.b16 %v1185
        %v1995 = vunpack.c.l.b16 %v1186
        %v1996 = vunpack.c.h.b16 %v1186
        %v1997 = vunpack.c.l.b16 %v1187
        %v1998 = vunpack.c.h.b16 %v1187
        %v1999 = vunpack.c.l.b16 %v1188
        %v2000 = vunpack.c.h.b16 %v1188
        %v2001 = vunpack.c.l.b16 %v1189
        %v2002 = vunpack.c.h.b16 %v1189
        %v2003 = vunpack.c.l.b16 %v1190
        %v2004 = vunpack.c.h.b16 %v1190
        %v2005 = vunpack.c.l.b16 %v1191
        %v2006 = vunpack.c.h.b16 %v1191
        %v2007 = vunpack.c.l.b16 %v1192
        %v2008 = vunpack.c.h.b16 %v1192
        %v2009 = vunpack.c.l.b16 %v1193
        %v2010 = vunpack.c.h.b16 %v1193
        %v2011 = vunpack.c.l.b16 %v1194
        %v2012 = vunpack.c.h.b16 %v1194
        %v2013 = vunpack.c.l.b16 %v1195
        %v2014 = vunpack.c.h.b16 %v1195
        %v2015 = vunpack.c.l.b16 %v1196
        %v2016 = vunpack.c.h.b16 %v1196
        %v2017 = vunpack.c.l.b16 %v1197
        %v2018 = vunpack.c.h.b16 %v1197
        %v2019 = vunpack.c.l.b16 %v1198
        %v2020 = vunpack.c.h.b16 %v1198
        %v2021 = vunpack.c.l.b16 %v1199
        %v2022 = vunpack.c.h.b16 %v1199
        %v2023 = vunpack.c.l.b16 %v1200
        %v2024 = vunpack.c.h.b16 %v1200
        %v2025 = vunpack.c.l.b16 %v1201
        %v2026 = vunpack.c.h.b16 %v1201
        %v2027 = vunpack.c.l.b16 %v1202
        %v2028 = vunpack.c.h.b16 %v1202
        %v2029 = vunpack.c.l.b16 %v1203
        %v2030 = vunpack.c.h.b16 %v1203
        %v2031 = vunpack.c.l.b16 %v1204
        %v2032 = vunpack.c.h.b16 %v1204
        %v2033 = vunpack.c.l.b16 %v1205
        %v2034 = vunpack.c.h.b16 %v1205
        %v2035 = vunpack.c.l.b16 %v1206
        %v2036 = vunpack.c.h.b16 %v1206
        %v2037 = vunpack.c.l.b16 %v1207
        %v2038 = vunpack.c.h.b16 %v1207
        %v2039 = vunpack.c.l.b16 %v1208
        %v2040 = vunpack.c.h.b16 %v1208
        %v2041 = vunpack.c.l.b16 %v1209
        %v2042 = vunpack.c.h.b16 %v1209
        %v2043 = vunpack.c.l.b16 %v1210
        %v2044 = vunpack.c.h.b16 %v1210
        %v2045 = vunpack.c.l.b16 %v1211
        %v2046 = vunpack.c.h.b16 %v1211
        %v2047 = vunpack.c.l.b16 %v1212
        %v2048 = vunpack.c.h.b16 %v1212
        %v2049 = vunpack.c.l.b16 %v1213
        %v2050 = vunpack.c.h.b16 %v1213
        %v2051 = vunpack.c.l.b16 %v1214
        %v2052 = vunpack.c.h.b16 %v1214
        %v2053 = vunpack.c.l.b16 %v1215
        %v2054 = vunpack.c.h.b16 %v1215
        %v2055 = vunpack.c.l.b16 %v1216
        %v2056 = vunpack.c.h.b16 %v1216
        %v2057 = vunpack.c.l.b16 %v1217
        %v2058 = vunpack.c.h.b16 %v1217
        %v2059 = vunpack.c.l.b16 %v1218
        %v2060 = vunpack.c.h.b16 %v1218
        %v2061 = vunpack.c.l.b16 %v1219
        %v2062 = vunpack.c.h.b16 %v1219
        %v2063 = vunpack.c.l.b16 %v1220
        %v2064 = vunpack.c.h.b16 %v1220
        %v2065 = vunpack.c.l.b16 %v1221
        %v2066 = vunpack.c.h.b16 %v1221
        %v2067 = vunpack.c.l.b16 %v1222
        %v2068 = vunpack.c.h.b16 %v1222
        %v2069 = vunpack.c.l.b16 %v1223
        %v2070 = vunpack.c.h.b16 %v1223
        %v2071 = vunpack.c.l.b16 %v1224
        %v2072 = vunpack.c.h.b16 %v1224
        %v2073 = vunpack.c.l.b16 %v1225
        %v2074 = vunpack.c.h.b16 %v1225
        %v2075 = vunpack.c.l.b16 %v1226
        %v2076 = vunpack.c.h.b16 %v1226
        %v2077 = vunpack.c.l.b16 %v1227
        %v2078 = vunpack.c.h.b16 %v1227
        %v2079 = vunpack.c.l.b16 %v1228
        %v2080 = vunpack.c.h.b16 %v1228
        %v2081 = vunpack.c.l.b16 %v1229
        %v2082 = vunpack.c.h.b16 %v1229
        %v2083 = vunpack.c.l.b16 %v1230
        %v2084 = vunpack.c.h.b16 %v1230
        %v2085 = vunpack.c.l.b16 %v1231
        %v2086 = vunpack.c.h.b16 %v1231
        %v2087 = vunpack.c.l.b16 %v1232
        %v2088 = vunpack.c.h.b16 %v1232
        %v2089 = vunpack.c.l.b16 %v1233
        %v2090 = vunpack.c.h.b16 %v1233
        %v2091 = vunpack.c.l.b16 %v1234
        %v2092 = vunpack.c.h.b16 %v1234
        %v2093 = vunpack.c.l.b16 %v1235
        %v2094 = vunpack.c.h.b16 %v1235
        %v2095 = vunpack.c.l.b16 %v1236
        %v2096 = vunpack.c.h.b16 %v1236
        %v2097 = vunpack.c.l.b16 %v1237
        %v2098 = vunpack.c.h.b16 %v1237
        %v2099 = vunpack.c.l.b16 %v1238
        %v2100 = vunpack.c.h.b16 %v1238
        %v2101 = vunpack.c.l.b16 %v1239
        %v2102 = vunpack.c.h.b16 %v1239
        %v2103 = vunpack.c.l.b16 %v1240
        %v2104 = vunpack.c.h.b16 %v1240
        %v2105 = vunpack.c.l.b16 %v1241
        %v2106 = vunpack.c.h.b16 %v1241
        %v2107 = vunpack.c.l.b16 %v1242
        %v2108 = vunpack.c.h.b16 %v1242
        %v2109 = vunpack.c.l.b16 %v1243
        %v2110 = vunpack.c.h.b16 %v1243
        %v2111 = vunpack.c.l.b16 %v1244
        %v2112 = vunpack.c.h.b16 %v1244
        %v2113 = vunpack.c.l.b16 %v1245
        %v2114 = vunpack.c.h.b16 %v1245
        %v2115 = vunpack.c.l.b16 %v1246
        %v2116 = vunpack.c.h.b16 %v1246
        %v2117 = vunpack.c.l.b16 %v1247
        %v2118 = vunpack.c.h.b16 %v1247
        %v2119 = vunpack.c.l.b16 %v1248
        %v2120 = vunpack.c.h.b16 %v1248
        %v2121 = vunpack.c.l.b16 %v1249
        %v2122 = vunpack.c.h.b16 %v1249
        %v2123 = vunpack.c.l.b16 %v1250
        %v2124 = vunpack.c.h.b16 %v1250
        %v2125 = vunpack.c.l.b16 %v1251
        %v2126 = vunpack.c.h.b16 %v1251
        %v2127 = vunpack.c.l.b16 %v1252
        %v2128 = vunpack.c.h.b16 %v1252
        %v2129 = vunpack.c.l.b16 %v1253
        %v2130 = vunpack.c.h.b16 %v1253
        %v2131 = vunpack.c.l.b16 %v1254
        %v2132 = vunpack.c.h.b16 %v1254
        %v2133 = vunpack.c.l.b16 %v1255
        %v2134 = vunpack.c.h.b16 %v1255
        %v2135 = vunpack.c.l.b16 %v1256
        %v2136 = vunpack.c.h.b16 %v1256
        %v2137 = vunpack.c.l.b16 %v1257
        %v2138 = vunpack.c.h.b16 %v1257
        %v2139 = vunpack.c.l.b16 %v1258
        %v2140 = vunpack.c.h.b16 %v1258
        %v2141 = vunpack.c.l.b16 %v1259
        %v2142 = vunpack.c.h.b16 %v1259
        %v2143 = vunpack.c.l.b16 %v1260
        %v2144 = vunpack.c.h.b16 %v1260
        %v2145 = vunpack.c.l.b16 %v1261
        %v2146 = vunpack.c.h.b16 %v1261
        %v2147 = vunpack.c.l.b16 %v1262
        %v2148 = vunpack.c.h.b16 %v1262
        %v2149 = vpack.c.b16 %v1577, %v1573
        %v2150 = vpack.c.b16 %v1578, %v1574
        %v2151 = vpack.c.b16 %v1579, %v1575
        %v2152 = vpack.c.b16 %v1580, %v1576
        %v2153 = vpack.c.b16 %v1585, %v1581
        %v2154 = vpack.c.b16 %v1586, %v1582
        %v2155 = vpack.c.b16 %v1587, %v1583
        %v2156 = vpack.c.b16 %v1588, %v1584
        %v2157 = vpack.c.b16 %v1593, %v1589
        %v2158 = vpack.c.b16 %v1594, %v1590
        %v2159 = vpack.c.b16 %v1595, %v1591
        %v2160 = vpack.c.b16 %v1596, %v1592
        %v2161 = vpack.c.b16 %v1601, %v1597
        %v2162 = vpack.c.b16 %v1602, %v1598
        %v2163 = vpack.c.b16 %v1603, %v1599
        %v2164 = vpack.c.b16 %v1604, %v1600
        %v2165 = vpack.c.b16 %v1609, %v1605
        %v2166 = vpack.c.b16 %v1610, %v1606
        %v2167 = vpack.c.b16 %v1611, %v1607
        %v2168 = vpack.c.b16 %v1612, %v1608
        %v2169 = vpack.c.b16 %v1617, %v1613
        %v2170 = vpack.c.b16 %v1618, %v1614
        %v2171 = vpack.c.b16 %v1619, %v1615
        %v2172 = vpack.c.b16 %v1620, %v1616
        %v2173 = vpack.c.b16 %v1625, %v1621
        %v2174 = vpack.c.b16 %v1626, %v1622
        %v2175 = vpack.c.b16 %v1627, %v1623
        %v2176 = vpack.c.b16 %v1628, %v1624
        %v2177 = vpack.c.b16 %v1633, %v1629
        %v2178 = vpack.c.b16 %v1634, %v1630
        %v2179 = vpack.c.b16 %v1635, %v1631
        %v2180 = vpack.c.b16 %v1636, %v1632
        %v2181 = vpack.c.b16 %v1641, %v1637
        %v2182 = vpack.c.b16 %v1642, %v1638
        %v2183 = vpack.c.b16 %v1643, %v1639
        %v2184 = vpack.c.b16 %v1644, %v1640
        %v2185 = vpack.c.b16 %v1649, %v1645
        %v2186 = vpack.c.b16 %v1650, %v1646
        %v2187 = vpack.c.b16 %v1651, %v1647
        %v2188 = vpack.c.b16 %v1652, %v1648
        %v2189 = vpack.c.b16 %v1657, %v1653
        %v2190 = vpack.c.b16 %v1658, %v1654
        %v2191 = vpack.c.b16 %v1659, %v1655
        %v2192 = vpack.c.b16 %v1660, %v1656
        %v2193 = vpack.c.b16 %v1665, %v1661
        %v2194 = vpack.c.b16 %v1666, %v1662
        %v2195 = vpack.c.b16 %v1667, %v1663
        %v2196 = vpack.c.b16 %v1668, %v1664
        %v2197 = vpack.c.b16 %v1673, %v1669
        %v2198 = vpack.c.b16 %v1674, %v1670
        %v2199 = vpack.c.b16 %v1675, %v1671
        %v2200 = vpack.c.b16 %v1676, %v1672
        %v2201 = vpack.c.b16 %v1681, %v1677
        %v2202 = vpack.c.b16 %v1682, %v1678
        %v2203 = vpack.c.b16 %v1683, %v1679
        %v2204 = vpack.c.b16 %v1684, %v1680
        %v2205 = vpack.c.b16 %v1689, %v1685
        %v2206 = vpack.c.b16 %v1690, %v1686
        %v2207 = vpack.c.b16 %v1691, %v1687
        %v2208 = vpack.c.b16 %v1692, %v1688
        %v2209 = vpack.c.b16 %v1697, %v1693
        %v2210 = vpack.c.b16 %v1698, %v1694
        %v2211 = vpack.c.b16 %v1699, %v1695
        %v2212 = vpack.c.b16 %v1700, %v1696
        %v2213 = vpack.c.b16 %v1705, %v1701
        %v2214 = vpack.c.b16 %v1706, %v1702
        %v2215 = vpack.c.b16 %v1707, %v1703
        %v2216 = vpack.c.b16 %v1708, %v1704
        %v2217 = vpack.c.b16 %v1713, %v1709
        %v2218 = vpack.c.b16 %v1714, %v1710
        %v2219 = vpack.c.b16 %v1715, %v1711
        %v2220 = vpack.c.b16 %v1716, %v1712
        %v2221 = vpack.c.b16 %v1721, %v1717
        %v2222 = vpack.c.b16 %v1722, %v1718
        %v2223 = vpack.c.b16 %v1723, %v1719
        %v2224 = vpack.c.b16 %v1724, %v1720
        %v2225 = vpack.c.b16 %v1729, %v1725
        %v2226 = vpack.c.b16 %v1730, %v1726
        %v2227 = vpack.c.b16 %v1731, %v1727
        %v2228 = vpack.c.b16 %v1732, %v1728
        %v2229 = vpack.c.b16 %v1737, %v1733
        %v2230 = vpack.c.b16 %v1738, %v1734
        %v2231 = vpack.c.b16 %v1739, %v1735
        %v2232 = vpack.c.b16 %v1740, %v1736
        %v2233 = vpack.c.b16 %v1745, %v1741
        %v2234 = vpack.c.b16 %v1746, %v1742
        %v2235 = vpack.c.b16 %v1747, %v1743
        %v2236 = vpack.c.b16 %v1748, %v1744
        %v2237 = vpack.c.b16 %v1753, %v1749
        %v2238 = vpack.c.b16 %v1754, %v1750
        %v2239 = vpack.c.b16 %v1755, %v1751
        %v2240 = vpack.c.b16 %v1756, %v1752
        %v2241 = vpack.c.b16 %v1761, %v1757
        %v2242 = vpack.c.b16 %v1762, %v1758
        %v2243 = vpack.c.b16 %v1763, %v1759
        %v2244 = vpack.c.b16 %v1764, %v1760
        %v2245 = vpack.c.b16 %v1769, %v1765
        %v2246 = vpack.c.b16 %v1770, %v1766
        %v2247 = vpack.c.b16 %v1771, %v1767
        %v2248 = vpack.c.b16 %v1772, %v1768
        %v2249 = vpack.c.b16 %v1777, %v1773
        %v2250 = vpack.c.b16 %v1778, %v1774
        %v2251 = vpack.c.b16 %v1779, %v1775
        %v2252 = vpack.c.b16 %v1780, %v1776
        %v2253 = vpack.c.b16 %v1785, %v1781
        %v2254 = vpack.c.b16 %v1786, %v1782
        %v2255 = vpack.c.b16 %v1787, %v1783
        %v2256 = vpack.c.b16 %v1788, %v1784
        %v2257 = vpack.c.b16 %v1793, %v1789
        %v2258 = vpack.c.b16 %v1794, %v1790
        %v2259 = vpack.c.b16 %v1795, %v1791
        %v2260 = vpack.c.b16 %v1796, %v1792
        %v2261 = vpack.c.b16 %v1801, %v1797
        %v2262 = vpack.c.b16 %v1802, %v1798
        %v2263 = vpack.c.b16 %v1803, %v1799
        %v2264 = vpack.c.b16 %v1804, %v1800
        %v2265 = vpack.c.b16 %v1809, %v1805
        %v2266 = vpack.c.b16 %v1810, %v1806
        %v2267 = vpack.c.b16 %v1811, %v1807
        %v2268 = vpack.c.b16 %v1812, %v1808
        %v2269 = vpack.c.b16 %v1817, %v1813
        %v2270 = vpack.c.b16 %v1818, %v1814
        %v2271 = vpack.c.b16 %v1819, %v1815
        %v2272 = vpack.c.b16 %v1820, %v1816
        %v2273 = vpack.c.b16 %v1825, %v1821
        %v2274 = vpack.c.b16 %v1826, %v1822
        %v2275 = vpack.c.b16 %v1827, %v1823
        %v2276 = vpack.c.b16 %v1828, %v1824
        %v2277 = vpack.c.b16 %v1833, %v1829
        %v2278 = vpack.c.b16 %v1834, %v1830
        %v2279 = vpack.c.b16 %v1835, %v1831
        %v2280 = vpack.c.b16 %v1836, %v1832
        %v2281 = vpack.c.b16 %v1841, %v1837
        %v2282 = vpack.c.b16 %v1842, %v1838
        %v2283 = vpack.c.b16 %v1843, %v1839
        %v2284 = vpack.c.b16 %v1844, %v1840
        %v2285 = vpack.c.b16 %v1849, %v1845
        %v2286 = vpack.c.b16 %v1850, %v1846
        %v2287 = vpack.c.b16 %v1851, %v1847
        %v2288 = vpack.c.b16 %v1852, %v1848
        %v2289 = vpack.c.b16 %v1857, %v1853
        %v2290 = vpack.c.b16 %v1858, %v1854
        %v2291 = vpack.c.b16 %v1859, %v1855
        %v2292 = vpack.c.b16 %v1860, %v1856
        %v2293 = vpack.c.b16 %v1865, %v1861
        %v2294 = vpack.c.b16 %v1866, %v1862
        %v2295 = vpack.c.b16 %v1867, %v1863
        %v2296 = vpack.c.b16 %v1868, %v1864
        %v2297 = vpack.c.b16 %v1873, %v1869
        %v2298 = vpack.c.b16 %v1874, %v1870
        %v2299 = vpack.c.b16 %v1875, %v1871
        %v2300 = vpack.c.b16 %v1876, %v1872
        %v2301 = vpack.c.b16 %v1881, %v1877
        %v2302 = vpack.c.b16 %v1882, %v1878
        %v2303 = vpack.c.b16 %v1883, %v1879
        %v2304 = vpack.c.b16 %v1884, %v1880
        %v2305 = vpack.c.b16 %v1889, %v1885
        %v2306 = vpack.c.b16 %v1890, %v1886
        %v2307 = vpack.c.b16 %v1891, %v1887
        %v2308 = vpack.c.b16 %v1892, %v1888
        %v2309 = vpack.c.b16 %v1897, %v1893
        %v2310 = vpack.c.b16 %v1898, %v1894
        %v2311 = vpack.c.b16 %v1899, %v1895
        %v2312 = vpack.c.b16 %v1900, %v1896
        %v2313 = vpack.c.b16 %v1905, %v1901
        %v2314 = vpack.c.b16 %v1906, %v1902
        %v2315 = vpack.c.b16 %v1907, %v1903
        %v2316 = vpack.c.b16 %v1908, %v1904
        %v2317 = vpack.c.b16 %v1913, %v1909
        %v2318 = vpack.c.b16 %v1914, %v1910
        %v2319 = vpack.c.b16 %v1915, %v1911
        %v2320 = vpack.c.b16 %v1916, %v1912
        %v2321 = vpack.c.b16 %v1921, %v1917
        %v2322 = vpack.c.b16 %v1922, %v1918
        %v2323 = vpack.c.b16 %v1923, %v1919
        %v2324 = vpack.c.b16 %v1924, %v1920
        %v2325 = vpack.c.b16 %v1929, %v1925
        %v2326 = vpack.c.b16 %v1930, %v1926
        %v2327 = vpack.c.b16 %v1931, %v1927
        %v2328 = vpack.c.b16 %v1932, %v1928
        %v2329 = vpack.c.b16 %v1937, %v1933
        %v2330 = vpack.c.b16 %v1938, %v1934
        %v2331 = vpack.c.b16 %v1939, %v1935
        %v2332 = vpack.c.b16 %v1940, %v1936
        %v2333 = vpack.c.b16 %v1945, %v1941
        %v2334 = vpack.c.b16 %v1946, %v1942
        %v2335 = vpack.c.b16 %v1947, %v1943
        %v2336 = vpack.c.b16 %v1948, %v1944
        %v2337 = vpack.c.b16 %v1953, %v1949
        %v2338 = vpack.c.b16 %v1954, %v1950
        %v2339 = vpack.c.b16 %v1955, %v1951
        %v2340 = vpack.c.b16 %v1956, %v1952
        %v2341 = vpack.c.b16 %v1961, %v1957
        %v2342 = vpack.c.b16 %v1962, %v1958
        %v2343 = vpack.c.b16 %v1963, %v1959
        %v2344 = vpack.c.b16 %v1964, %v1960
        %v2345 = vpack.c.b16 %v1969, %v1965
        %v2346 = vpack.c.b16 %v1970, %v1966
        %v2347 = vpack.c.b16 %v1971, %v1967
        %v2348 = vpack.c.b16 %v1972, %v1968
        %v2349 = vpack.c.b16 %v1977, %v1973
        %v2350 = vpack.c.b16 %v1978, %v1974
        %v2351 = vpack.c.b16 %v1979, %v1975
        %v2352 = vpack.c.b16 %v1980, %v1976
        %v2353 = vpack.c.b16 %v1985, %v1981
        %v2354 = vpack.c.b16 %v1986, %v1982
        %v2355 = vpack.c.b16 %v1987, %v1983
        %v2356 = vpack.c.b16 %v1988, %v1984
        %v2357 = vpack.c.b16 %v1993, %v1989
        %v2358 = vpack.c.b16 %v1994, %v1990
        %v2359 = vpack.c.b16 %v1995, %v1991
        %v2360 = vpack.c.b16 %v1996, %v1992
        %v2361 = vpack.c.b16 %v2001, %v1997
        %v2362 = vpack.c.b16 %v2002, %v1998
        %v2363 = vpack.c.b16 %v2003, %v1999
        %v2364 = vpack.c.b16 %v2004, %v2000
        %v2365 = vpack.c.b16 %v2009, %v2005
        %v2366 = vpack.c.b16 %v2010, %v2006
        %v2367 = vpack.c.b16 %v2011, %v2007
        %v2368 = vpack.c.b16 %v2012, %v2008
        %v2369 = vpack.c.b16 %v2017, %v2013
        %v2370 = vpack.c.b16 %v2018, %v2014
        %v2371 = vpack.c.b16 %v2019, %v2015
        %v2372 = vpack.c.b16 %v2020, %v2016
        %v2373 = vpack.c.b16 %v2025, %v2021
        %v2374 = vpack.c.b16 %v2026, %v2022
        %v2375 = vpack.c.b16 %v2027, %v2023
        %v2376 = vpack.c.b16 %v2028, %v2024
        %v2377 = vpack.c.b16 %v2033, %v2029
        %v2378 = vpack.c.b16 %v2034, %v2030
        %v2379 = vpack.c.b16 %v2035, %v2031
        %v2380 = vpack.c.b16 %v2036, %v2032
        %v2381 = vpack.c.b16 %v2041, %v2037
        %v2382 = vpack.c.b16 %v2042, %v2038
        %v2383 = vpack.c.b16 %v2043, %v2039
        %v2384 = vpack.c.b16 %v2044, %v2040
        %v2385 = vpack.c.b16 %v2049, %v2045
        %v2386 = vpack.c.b16 %v2050, %v2046
        %v2387 = vpack.c.b16 %v2051, %v2047
        %v2388 = vpack.c.b16 %v2052, %v2048
        %v2389 = vpack.c.b16 %v2057, %v2053
        %v2390 = vpack.c.b16 %v2058, %v2054
        %v2391 = vpack.c.b16 %v2059, %v2055
        %v2392 = vpack.c.b16 %v2060, %v2056
        %v2393 = vpack.c.b16 %v2065, %v2061
        %v2394 = vpack.c.b16 %v2066, %v2062
        %v2395 = vpack.c.b16 %v2067, %v2063
        %v2396 = vpack.c.b16 %v2068, %v2064
        %v2397 = vpack.c.b16 %v2073, %v2069
        %v2398 = vpack.c.b16 %v2074, %v2070
        %v2399 = vpack.c.b16 %v2075, %v2071
        %v2400 = vpack.c.b16 %v2076, %v2072
        %v2401 = vpack.c.b16 %v2081, %v2077
        %v2402 = vpack.c.b16 %v2082, %v2078
        %v2403 = vpack.c.b16 %v2083, %v2079
        %v2404 = vpack.c.b16 %v2084, %v2080
        %v2405 = vpack.c.b16 %v2089, %v2085
        %v2406 = vpack.c.b16 %v2090, %v2086
        %v2407 = vpack.c.b16 %v2091, %v2087
        %v2408 = vpack.c.b16 %v2092, %v2088
        %v2409 = vpack.c.b16 %v2097, %v2093
        %v2410 = vpack.c.b16 %v2098, %v2094
        %v2411 = vpack.c.b16 %v2099, %v2095
        %v2412 = vpack.c.b16 %v2100, %v2096
        %v2413 = vpack.c.b16 %v2105, %v2101
        %v2414 = vpack.c.b16 %v2106, %v2102
        %v2415 = vpack.c.b16 %v2107, %v2103
        %v2416 = vpack.c.b16 %v2108, %v2104
        %v2417 = vpack.c.b16 %v2113, %v2109
        %v2418 = vpack.c.b16 %v2114, %v2110
        %v2419 = vpack.c.b16 %v2115, %v2111
        %v2420 = vpack.c.b16 %v2116, %v2112
        %v2421 = vpack.c.b16 %v2121, %v2117
        %v2422 = vpack.c.b16 %v2122, %v2118
        %v2423 = vpack.c.b16 %v2123, %v2119
        %v2424 = vpack.c.b16 %v2124, %v2120
        %v2425 = vpack.c.b16 %v2129, %v2125
        %v2426 = vpack.c.b16 %v2130, %v2126
        %v2427 = vpack.c.b16 %v2131, %v2127
        %v2428 = vpack.c.b16 %v2132, %v2128
        %v2429 = vpack.c.b16 %v2137, %v2133
        %v2430 = vpack.c.b16 %v2138, %v2134
        %v2431 = vpack.c.b16 %v2139, %v2135
        %v2432 = vpack.c.b16 %v2140, %v2136
        %v2433 = vpack.c.b16 %v2145, %v2141
        %v2434 = vpack.c.b16 %v2146, %v2142
        %v2435 = vpack.c.b16 %v2147, %v2143
        %v2436 = vpack.c.b16 %v2148, %v2144
        %2725 = vmatprep.subr.bf16.mxu0 %v2150
        %2726 = vmatpush1.bf16.msra.mxu0 %v2149
        %2727 = vmatprep.subr.bf16.mxu0 %v2154
        %2728 = vmatpush1.bf16.msra.mxu0 %v2153
        %2729 = vmatprep.subr.bf16.mxu0 %v2158
        %2730 = vmatpush1.bf16.msra.mxu0 %v2157
        %2731 = vmatprep.subr.bf16.mxu0 %v2162
        %2732 = vmatpush1.bf16.msra.mxu0 %v2161
        %2733 = vmatprep.subr.bf16.mxu0 %v2166
        %2734 = vmatpush1.bf16.msra.mxu0 %v2165
        %2735 = vmatprep.subr.bf16.mxu0 %v2170
        %2736 = vmatpush1.bf16.msra.mxu0 %v2169
        %2737 = vmatprep.subr.bf16.mxu0 %v2174
        %2738 = vmatpush1.bf16.msra.mxu0 %v2173
        %2739 = vmatprep.subr.bf16.mxu0 %v2178
        %2740 = vmatpush1.bf16.msra.mxu0 %v2177
        %2741 = vmatprep.subr.bf16.mxu0 %v2182
        %2742 = vmatpush1.bf16.msra.mxu0 %v2181
        %2743 = vmatprep.subr.bf16.mxu0 %v2186
        %2744 = vmatpush1.bf16.msra.mxu0 %v2185
        %2745 = vmatprep.subr.bf16.mxu0 %v2190
        %2746 = vmatpush1.bf16.msra.mxu0 %v2189
        %2747 = vmatprep.subr.bf16.mxu0 %v2194
        %2748 = vmatpush1.bf16.msra.mxu0 %v2193
        %2749 = vmatprep.subr.bf16.mxu0 %v2198
        %2750 = vmatpush1.bf16.msra.mxu0 %v2197
        %2751 = vmatprep.subr.bf16.mxu0 %v2202
        %2752 = vmatpush1.bf16.msra.mxu0 %v2201
        %2753 = vmatprep.subr.bf16.mxu0 %v2206
        %2754 = vmatpush1.bf16.msra.mxu0 %v2205
        %2755 = vmatprep.subr.bf16.mxu0 %v2210
        %2756 = vmatpush1.bf16.msra.mxu0 %v2209
        %2757 = vmatprep.mubr.bf16.mxu0 %v967
        %2758 = vmatmul.mubr.bf16.gmra.mrb[0].mxu0 %v966
        %v2759 = vpop.f32.mrb[0].mxu0
        %v2760 = vadd.f32 %v1268, %v2759
        %v2761 = vpop.f32.mrb[0].mxu0
        %v2762 = vadd.f32 %v1272, %v2761
        %v2763 = vpop.f32.mrb[0].mxu0
        %v2764 = vpop.f32.mrb[0].mxu0
        %2765 = vdwg.mxu0
        %2766 = vmatprep.subr.bf16.mxu0 %v2214
        %2767 = vmatpush1.bf16.msra.mxu0 %v2213
        %2768 = vmatprep.subr.bf16.mxu0 %v2218
        %2769 = vmatpush1.bf16.msra.mxu0 %v2217
        %2770 = vmatprep.subr.bf16.mxu0 %v2222
        %2771 = vmatpush1.bf16.msra.mxu0 %v2221
        %2772 = vmatprep.subr.bf16.mxu0 %v2226
        %2773 = vmatpush1.bf16.msra.mxu0 %v2225
        %2774 = vmatprep.subr.bf16.mxu0 %v2230
        %2775 = vmatpush1.bf16.msra.mxu0 %v2229
        %2776 = vmatprep.subr.bf16.mxu0 %v2234
        %2777 = vmatpush1.bf16.msra.mxu0 %v2233
        %2778 = vmatprep.subr.bf16.mxu0 %v2238
        %2779 = vmatpush1.bf16.msra.mxu0 %v2237
        %2780 = vmatprep.subr.bf16.mxu0 %v2242
        %2781 = vmatpush1.bf16.msra.mxu0 %v2241
        %2782 = vmatprep.subr.bf16.mxu0 %v2246
        %2783 = vmatpush1.bf16.msra.mxu0 %v2245
        %2784 = vmatprep.subr.bf16.mxu0 %v2250
        %2785 = vmatpush1.bf16.msra.mxu0 %v2249
        %2786 = vmatprep.subr.bf16.mxu0 %v2254
        %2787 = vmatpush1.bf16.msra.mxu0 %v2253
        %2788 = vmatprep.subr.bf16.mxu0 %v2258
        %2789 = vmatpush1.bf16.msra.mxu0 %v2257
        %2790 = vmatprep.subr.bf16.mxu0 %v2262
        %2791 = vmatpush1.bf16.msra.mxu0 %v2261
        %2792 = vmatprep.subr.bf16.mxu0 %v2266
        %2793 = vmatpush1.bf16.msra.mxu0 %v2265
        %2794 = vmatprep.subr.bf16.mxu0 %v2270
        %2795 = vmatpush1.bf16.msra.mxu0 %v2269
        %2796 = vmatprep.subr.bf16.mxu0 %v2274
        %2797 = vmatpush1.bf16.msra.mxu0 %v2273
        %2798 = vmatprep.mubr.bf16.mxu0 %v969
        %2799 = vmatmul.mubr.bf16.gmra.mrb[0].mxu0 %v968
        %v2800 = vpop.f32.mrb[0].mxu0
        %v2801 = vadd.f32 %v2760, %v2800
        %v2802 = vpop.f32.mrb[0].mxu0
        %v2803 = vadd.f32 %v2762, %v2802
        %v2804 = vpop.f32.mrb[0].mxu0
        %v2805 = vpop.f32.mrb[0].mxu0
        %2806 = vdwg.mxu0
        %2807 = vmatprep.subr.bf16.mxu0 %v2278
        %2808 = vmatpush1.bf16.msra.mxu0 %v2277
        %2809 = vmatprep.subr.bf16.mxu0 %v2282
        %2810 = vmatpush1.bf16.msra.mxu0 %v2281
        %2811 = vmatprep.subr.bf16.mxu0 %v2286
        %2812 = vmatpush1.bf16.msra.mxu0 %v2285
        %2813 = vmatprep.subr.bf16.mxu0 %v2290
        %2814 = vmatpush1.bf16.msra.mxu0 %v2289
        %2815 = vmatprep.subr.bf16.mxu0 %v2294
        %2816 = vmatpush1.bf16.msra.mxu0 %v2293
        %2817 = vmatprep.subr.bf16.mxu0 %v2298
        %2818 = vmatpush1.bf16.msra.mxu0 %v2297
        %2819 = vmatprep.subr.bf16.mxu0 %v2302
        %2820 = vmatpush1.bf16.msra.mxu0 %v2301
        %2821 = vmatprep.subr.bf16.mxu0 %v2306
        %2822 = vmatpush1.bf16.msra.mxu0 %v2305
        %2823 = vmatprep.subr.bf16.mxu0 %v2310
        %2824 = vmatpush1.bf16.msra.mxu0 %v2309
        %2825 = vmatprep.subr.bf16.mxu0 %v2314
        %2826 = vmatpush1.bf16.msra.mxu0 %v2313
        %2827 = vmatprep.subr.bf16.mxu0 %v2318
        %2828 = vmatpush1.bf16.msra.mxu0 %v2317
        %2829 = vmatprep.subr.bf16.mxu0 %v2322
        %2830 = vmatpush1.bf16.msra.mxu0 %v2321
        %2831 = vmatprep.subr.bf16.mxu0 %v2326
        %2832 = vmatpush1.bf16.msra.mxu0 %v2325
        %2833 = vmatprep.subr.bf16.mxu0 %v2330
        %2834 = vmatpush1.bf16.msra.mxu0 %v2329
        %2835 = vmatprep.subr.bf16.mxu0 %v2334
        %2836 = vmatpush1.bf16.msra.mxu0 %v2333
        %2837 = vmatprep.subr.bf16.mxu0 %v2338
        %2838 = vmatpush1.bf16.msra.mxu0 %v2337
        %2839 = vmatprep.mubr.bf16.mxu0 %v971
        %2840 = vmatmul.mubr.bf16.gmra.mrb[0].mxu0 %v970
        %v2841 = vpop.f32.mrb[0].mxu0
        %v2842 = vadd.f32 %v2801, %v2841
        %v2843 = vpop.f32.mrb[0].mxu0
        %v2844 = vadd.f32 %v2803, %v2843
        %v2845 = vpop.f32.mrb[0].mxu0
        %v2846 = vpop.f32.mrb[0].mxu0
        %2847 = vdwg.mxu0
        %2848 = vmatprep.subr.bf16.mxu0 %v2342
        %2849 = vmatpush1.bf16.msra.mxu0 %v2341
        %2850 = vmatprep.subr.bf16.mxu0 %v2346
        %2851 = vmatpush1.bf16.msra.mxu0 %v2345
        %2852 = vmatprep.subr.bf16.mxu0 %v2350
        %2853 = vmatpush1.bf16.msra.mxu0 %v2349
        %2854 = vmatprep.subr.bf16.mxu0 %v2354
        %2855 = vmatpush1.bf16.msra.mxu0 %v2353
        %2856 = vmatprep.subr.bf16.mxu0 %v2358
        %2857 = vmatpush1.bf16.msra.mxu0 %v2357
        %2858 = vmatprep.subr.bf16.mxu0 %v2362
        %2859 = vmatpush1.bf16.msra.mxu0 %v2361
        %2860 = vmatprep.subr.bf16.mxu0 %v2366
        %2861 = vmatpush1.bf16.msra.mxu0 %v2365
        %2862 = vmatprep.subr.bf16.mxu0 %v2370
        %2863 = vmatpush1.bf16.msra.mxu0 %v2369
        %2864 = vmatprep.subr.bf16.mxu0 %v2374
        %2865 = vmatpush1.bf16.msra.mxu0 %v2373
        %2866 = vmatprep.subr.bf16.mxu0 %v2378
        %2867 = vmatpush1.bf16.msra.mxu0 %v2377
        %2868 = vmatprep.subr.bf16.mxu0 %v2382
        %2869 = vmatpush1.bf16.msra.mxu0 %v2381
        %2870 = vmatprep.subr.bf16.mxu0 %v2386
        %2871 = vmatpush1.bf16.msra.mxu0 %v2385
        %2872 = vmatprep.subr.bf16.mxu0 %v2390
        %2873 = vmatpush1.bf16.msra.mxu0 %v2389
        %2874 = vmatprep.subr.bf16.mxu0 %v2394
        %2875 = vmatpush1.bf16.msra.mxu0 %v2393
        %2876 = vmatprep.subr.bf16.mxu0 %v2398
        %2877 = vmatpush1.bf16.msra.mxu0 %v2397
        %2878 = vmatprep.subr.bf16.mxu0 %v2402
        %2879 = vmatpush1.bf16.msra.mxu0 %v2401
        %2880 = vmatprep.mubr.bf16.mxu0 %v973
        %2881 = vmatmul.mubr.bf16.gmra.mrb[0].mxu0 %v972
        %v2882 = vpop.f32.mrb[0].mxu0
        %v2883 = vadd.f32 %v2842, %v2882
        %v2884 = vpop.f32.mrb[0].mxu0
        %v2885 = vadd.f32 %v2844, %v2884
        %v2886 = vpop.f32.mrb[0].mxu0
        %v2887 = vpop.f32.mrb[0].mxu0
        %2888 = vdwg.mxu0
        %2889 = vmatprep.subr.bf16.mxu0 %v2406
        %2890 = vmatpush1.bf16.msra.mxu0 %v2405
        %2891 = vmatprep.subr.bf16.mxu0 %v2410
        %2892 = vmatpush1.bf16.msra.mxu0 %v2409
        %2893 = vmatprep.subr.bf16.mxu0 %v2414
        %2894 = vmatpush1.bf16.msra.mxu0 %v2413
        %2895 = vmatprep.subr.bf16.mxu0 %v2418
        %2896 = vmatpush1.bf16.msra.mxu0 %v2417
        %2897 = vmatprep.subr.bf16.mxu0 %v2422
        %2898 = vmatpush1.bf16.msra.mxu0 %v2421
        %2899 = vmatprep.subr.bf16.mxu0 %v2426
        %2900 = vmatpush1.bf16.msra.mxu0 %v2425
        %2901 = vmatprep.subr.bf16.mxu0 %v2430
        %2902 = vmatpush1.bf16.msra.mxu0 %v2429
        %2903 = vmatprep.subr.bf16.mxu0 %v2434
        %2904 = vmatpush1.bf16.msra.mxu0 %v2433
        %2905 = vmatprep.subr.bf16.mxu0 0
        %2906 = vmatpush1.bf16.msra.mxu0 0
        %2907 = vmatprep.subr.bf16.mxu0 0
        %2908 = vmatpush1.bf16.msra.mxu0 0
        %2909 = vmatprep.subr.bf16.mxu0 0
        %2910 = vmatpush1.bf16.msra.mxu0 0
        %2911 = vmatprep.subr.bf16.mxu0 0
        %2912 = vmatpush1.bf16.msra.mxu0 0
        %2913 = vmatprep.subr.bf16.mxu0 0
        %2914 = vmatpush1.bf16.msra.mxu0 0
        %2915 = vmatprep.subr.bf16.mxu0 0
        %2916 = vmatpush1.bf16.msra.mxu0 0
        %2917 = vmatprep.subr.bf16.mxu0 0
        %2918 = vmatpush1.bf16.msra.mxu0 0
        %2919 = vmatprep.subr.bf16.mxu0 0
        %2920 = vmatpush1.bf16.msra.mxu0 0
        %2921 = vmatprep.mubr.bf16.mxu0 0
        %2922 = vmatmul.mubr.bf16.gmra.mrb[0].mxu0 %v974
        %v2923 = vpop.f32.mrb[0].mxu0
        %v2924 = vadd.f32 %v2883, %v2923
        %v2925 = vpop.f32.mrb[0].mxu0
        %v2926 = vadd.f32 %v2885, %v2925
        %v2927 = vpop.f32.mrb[0].mxu0
        %v2928 = vpop.f32.mrb[0].mxu0
        %2929 = vdwg.mxu0
        %2930 = vmatprep.subr.bf16.mxu0 %v2152
        %2931 = vmatpush1.bf16.msra.mxu0 %v2151
        %2932 = vmatprep.subr.bf16.mxu0 %v2156
        %2933 = vmatpush1.bf16.msra.mxu0 %v2155
        %2934 = vmatprep.subr.bf16.mxu0 %v2160
        %2935 = vmatpush1.bf16.msra.mxu0 %v2159
        %2936 = vmatprep.subr.bf16.mxu0 %v2164
        %2937 = vmatpush1.bf16.msra.mxu0 %v2163
        %2938 = vmatprep.subr.bf16.mxu0 %v2168
        %2939 = vmatpush1.bf16.msra.mxu0 %v2167
        %2940 = vmatprep.subr.bf16.mxu0 %v2172
        %2941 = vmatpush1.bf16.msra.mxu0 %v2171
        %2942 = vmatprep.subr.bf16.mxu0 %v2176
        %2943 = vmatpush1.bf16.msra.mxu0 %v2175
        %2944 = vmatprep.subr.bf16.mxu0 %v2180
        %2945 = vmatpush1.bf16.msra.mxu0 %v2179
        %2946 = vmatprep.subr.bf16.mxu0 %v2184
        %2947 = vmatpush1.bf16.msra.mxu0 %v2183
        %2948 = vmatprep.subr.bf16.mxu0 %v2188
        %2949 = vmatpush1.bf16.msra.mxu0 %v2187
        %2950 = vmatprep.subr.bf16.mxu0 %v2192
        %2951 = vmatpush1.bf16.msra.mxu0 %v2191
        %2952 = vmatprep.subr.bf16.mxu0 %v2196
        %2953 = vmatpush1.bf16.msra.mxu0 %v2195
        %2954 = vmatprep.subr.bf16.mxu0 %v2200
        %2955 = vmatpush1.bf16.msra.mxu0 %v2199
        %2956 = vmatprep.subr.bf16.mxu0 %v2204
        %2957 = vmatpush1.bf16.msra.mxu0 %v2203
        %2958 = vmatprep.subr.bf16.mxu0 %v2208
        %2959 = vmatpush1.bf16.msra.mxu0 %v2207
        %2960 = vmatprep.subr.bf16.mxu0 %v2212
        %2961 = vmatpush1.bf16.msra.mxu0 %v2211
        %2962 = vmatprep.mubr.bf16.mxu0 %v967
        %2963 = vmatmul.mubr.bf16.gmra.mrb[0].mxu0 %v966
        %v2964 = vpop.f32.mrb[0].mxu0
        %v2965 = vadd.f32 %v1276, %v2964
        %v2966 = vpop.f32.mrb[0].mxu0
        %v2967 = vadd.f32 %v1280, %v2966
        %v2968 = vpop.f32.mrb[0].mxu0
        %v2969 = vpop.f32.mrb[0].mxu0
        %2970 = vdwg.mxu0
        %2971 = vmatprep.subr.bf16.mxu0 %v2216
        %2972 = vmatpush1.bf16.msra.mxu0 %v2215
        %2973 = vmatprep.subr.bf16.mxu0 %v2220
        %2974 = vmatpush1.bf16.msra.mxu0 %v2219
        %2975 = vmatprep.subr.bf16.mxu0 %v2224
        %2976 = vmatpush1.bf16.msra.mxu0 %v2223
        %2977 = vmatprep.subr.bf16.mxu0 %v2228
        %2978 = vmatpush1.bf16.msra.mxu0 %v2227
        %2979 = vmatprep.subr.bf16.mxu0 %v2232
        %2980 = vmatpush1.bf16.msra.mxu0 %v2231
        %2981 = vmatprep.subr.bf16.mxu0 %v2236
        %2982 = vmatpush1.bf16.msra.mxu0 %v2235
        %2983 = vmatprep.subr.bf16.mxu0 %v2240
        %2984 = vmatpush1.bf16.msra.mxu0 %v2239
        %2985 = vmatprep.subr.bf16.mxu0 %v2244
        %2986 = vmatpush1.bf16.msra.mxu0 %v2243
        %2987 = vmatprep.subr.bf16.mxu0 %v2248
        %2988 = vmatpush1.bf16.msra.mxu0 %v2247
        %2989 = vmatprep.subr.bf16.mxu0 %v2252
        %2990 = vmatpush1.bf16.msra.mxu0 %v2251
        %2991 = vmatprep.subr.bf16.mxu0 %v2256
        %2992 = vmatpush1.bf16.msra.mxu0 %v2255
        %2993 = vmatprep.subr.bf16.mxu0 %v2260
        %2994 = vmatpush1.bf16.msra.mxu0 %v2259
        %2995 = vmatprep.subr.bf16.mxu0 %v2264
        %2996 = vmatpush1.bf16.msra.mxu0 %v2263
        %2997 = vmatprep.subr.bf16.mxu0 %v2268
        %2998 = vmatpush1.bf16.msra.mxu0 %v2267
        %2999 = vmatprep.subr.bf16.mxu0 %v2272
        %3000 = vmatpush1.bf16.msra.mxu0 %v2271
        %3001 = vmatprep.subr.bf16.mxu0 %v2276
        %3002 = vmatpush1.bf16.msra.mxu0 %v2275
        %3003 = vmatprep.mubr.bf16.mxu0 %v969
        %3004 = vmatmul.mubr.bf16.gmra.mrb[0].mxu0 %v968
        %v3005 = vpop.f32.mrb[0].mxu0
        %v3006 = vadd.f32 %v2965, %v3005
        %v3007 = vpop.f32.mrb[0].mxu0
        %v3008 = vadd.f32 %v2967, %v3007
        %v3009 = vpop.f32.mrb[0].mxu0
        %v3010 = vpop.f32.mrb[0].mxu0
        %3011 = vdwg.mxu0
        %3012 = vmatprep.subr.bf16.mxu0 %v2280
        %3013 = vmatpush1.bf16.msra.mxu0 %v2279
        %3014 = vmatprep.subr.bf16.mxu0 %v2284
        %3015 = vmatpush1.bf16.msra.mxu0 %v2283
        %3016 = vmatprep.subr.bf16.mxu0 %v2288
        %3017 = vmatpush1.bf16.msra.mxu0 %v2287
        %3018 = vmatprep.subr.bf16.mxu0 %v2292
        %3019 = vmatpush1.bf16.msra.mxu0 %v2291
        %3020 = vmatprep.subr.bf16.mxu0 %v2296
        %3021 = vmatpush1.bf16.msra.mxu0 %v2295
        %3022 = vmatprep.subr.bf16.mxu0 %v2300
        %3023 = vmatpush1.bf16.msra.mxu0 %v2299
        %3024 = vmatprep.subr.bf16.mxu0 %v2304
        %3025 = vmatpush1.bf16.msra.mxu0 %v2303
        %3026 = vmatprep.subr.bf16.mxu0 %v2308
        %3027 = vmatpush1.bf16.msra.mxu0 %v2307
        %3028 = vmatprep.subr.bf16.mxu0 %v2312
        %3029 = vmatpush1.bf16.msra.mxu0 %v2311
        %3030 = vmatprep.subr.bf16.mxu0 %v2316
        %3031 = vmatpush1.bf16.msra.mxu0 %v2315
        %3032 = vmatprep.subr.bf16.mxu0 %v2320
        %3033 = vmatpush1.bf16.msra.mxu0 %v2319
        %3034 = vmatprep.subr.bf16.mxu0 %v2324
        %3035 = vmatpush1.bf16.msra.mxu0 %v2323
        %3036 = vmatprep.subr.bf16.mxu0 %v2328
        %3037 = vmatpush1.bf16.msra.mxu0 %v2327
        %3038 = vmatprep.subr.bf16.mxu0 %v2332
        %3039 = vmatpush1.bf16.msra.mxu0 %v2331
        %3040 = vmatprep.subr.bf16.mxu0 %v2336
        %3041 = vmatpush1.bf16.msra.mxu0 %v2335
        %3042 = vmatprep.subr.bf16.mxu0 %v2340
        %3043 = vmatpush1.bf16.msra.mxu0 %v2339
        %3044 = vmatprep.mubr.bf16.mxu0 %v971
        %3045 = vmatmul.mubr.bf16.gmra.mrb[0].mxu0 %v970
        %v3046 = vpop.f32.mrb[0].mxu0
        %v3047 = vadd.f32 %v3006, %v3046
        %v3048 = vpop.f32.mrb[0].mxu0
        %v3049 = vadd.f32 %v3008, %v3048
        %v3050 = vpop.f32.mrb[0].mxu0
        %v3051 = vpop.f32.mrb[0].mxu0
        %3052 = vdwg.mxu0
        %3053 = vmatprep.subr.bf16.mxu0 %v2344
        %3054 = vmatpush1.bf16.msra.mxu0 %v2343
        %3055 = vmatprep.subr.bf16.mxu0 %v2348
        %3056 = vmatpush1.bf16.msra.mxu0 %v2347
        %3057 = vmatprep.subr.bf16.mxu0 %v2352
        %3058 = vmatpush1.bf16.msra.mxu0 %v2351
        %3059 = vmatprep.subr.bf16.mxu0 %v2356
        %3060 = vmatpush1.bf16.msra.mxu0 %v2355
        %3061 = vmatprep.subr.bf16.mxu0 %v2360
        %3062 = vmatpush1.bf16.msra.mxu0 %v2359
        %3063 = vmatprep.subr.bf16.mxu0 %v2364
        %3064 = vmatpush1.bf16.msra.mxu0 %v2363
        %3065 = vmatprep.subr.bf16.mxu0 %v2368
        %3066 = vmatpush1.bf16.msra.mxu0 %v2367
        %3067 = vmatprep.subr.bf16.mxu0 %v2372
        %3068 = vmatpush1.bf16.msra.mxu0 %v2371
        %3069 = vmatprep.subr.bf16.mxu0 %v2376
        %3070 = vmatpush1.bf16.msra.mxu0 %v2375
        %3071 = vmatprep.subr.bf16.mxu0 %v2380
        %3072 = vmatpush1.bf16.msra.mxu0 %v2379
        %3073 = vmatprep.subr.bf16.mxu0 %v2384
        %3074 = vmatpush1.bf16.msra.mxu0 %v2383
        %3075 = vmatprep.subr.bf16.mxu0 %v2388
        %3076 = vmatpush1.bf16.msra.mxu0 %v2387
        %3077 = vmatprep.subr.bf16.mxu0 %v2392
        %3078 = vmatpush1.bf16.msra.mxu0 %v2391
        %3079 = vmatprep.subr.bf16.mxu0 %v2396
        %3080 = vmatpush1.bf16.msra.mxu0 %v2395
        %3081 = vmatprep.subr.bf16.mxu0 %v2400
        %3082 = vmatpush1.bf16.msra.mxu0 %v2399
        %3083 = vmatprep.subr.bf16.mxu0 %v2404
        %3084 = vmatpush1.bf16.msra.mxu0 %v2403
        %3085 = vmatprep.mubr.bf16.mxu0 %v973
        %3086 = vmatmul.mubr.bf16.gmra.mrb[0].mxu0 %v972
        %v3087 = vpop.f32.mrb[0].mxu0
        %v3088 = vadd.f32 %v3047, %v3087
        %v3089 = vpop.f32.mrb[0].mxu0
        %v3090 = vadd.f32 %v3049, %v3089
        %v3091 = vpop.f32.mrb[0].mxu0
        %v3092 = vpop.f32.mrb[0].mxu0
        %3093 = vdwg.mxu0
        %3094 = vmatprep.subr.bf16.mxu0 %v2408
        %3095 = vmatpush1.bf16.msra.mxu0 %v2407
        %3096 = vmatprep.subr.bf16.mxu0 %v2412
        %3097 = vmatpush1.bf16.msra.mxu0 %v2411
        %3098 = vmatprep.subr.bf16.mxu0 %v2416
        %3099 = vmatpush1.bf16.msra.mxu0 %v2415
        %3100 = vmatprep.subr.bf16.mxu0 %v2420
        %3101 = vmatpush1.bf16.msra.mxu0 %v2419
        %3102 = vmatprep.subr.bf16.mxu0 %v2424
        %3103 = vmatpush1.bf16.msra.mxu0 %v2423
        %3104 = vmatprep.subr.bf16.mxu0 %v2428
        %3105 = vmatpush1.bf16.msra.mxu0 %v2427
        %3106 = vmatprep.subr.bf16.mxu0 %v2432
        %3107 = vmatpush1.bf16.msra.mxu0 %v2431
        %3108 = vmatprep.subr.bf16.mxu0 %v2436
        %3109 = vmatpush1.bf16.msra.mxu0 %v2435
        %3110 = vmatprep.subr.bf16.mxu0 0
        %3111 = vmatpush1.bf16.msra.mxu0 0
        %3112 = vmatprep.subr.bf16.mxu0 0
        %3113 = vmatpush1.bf16.msra.mxu0 0
        %3114 = vmatprep.subr.bf16.mxu0 0
        %3115 = vmatpush1.bf16.msra.mxu0 0
        %3116 = vmatprep.subr.bf16.mxu0 0
        %3117 = vmatpush1.bf16.msra.mxu0 0
        %3118 = vmatprep.subr.bf16.mxu0 0
        %3119 = vmatpush1.bf16.msra.mxu0 0
        %3120 = vmatprep.subr.bf16.mxu0 0
        %3121 = vmatpush1.bf16.msra.mxu0 0
        %3122 = vmatprep.subr.bf16.mxu0 0
        %3123 = vmatpush1.bf16.msra.mxu0 0
        %3124 = vmatprep.subr.bf16.mxu0 0
        %3125 = vmatpush1.bf16.msra.mxu0 0
        %3126 = vmatprep.mubr.bf16.mxu0 0
        %3127 = vmatmul.mubr.bf16.gmra.mrb[0].mxu0 %v974
        %v3128 = vpop.f32.mrb[0].mxu0
        %v3129 = vadd.f32 %v3088, %v3128
        %v3130 = vpop.f32.mrb[0].mxu0
        %v3131 = vadd.f32 %v3090, %v3130
        %v3132 = vpop.f32.mrb[0].mxu0
        %v3133 = vpop.f32.mrb[0].mxu0
        %3134 = vdwg.mxu0
        %v3135 = vmax.f32 %v2924, 0.0
        %v3136 = vmax.f32 %v2926, 0.0
        %v3137 = vmax.f32 %v3129, 0.0
        %v3138 = vmax.f32 %v3131, 0.0
        %v3139 = vld [vmem:[#allocation2] sm:$0xf]
        %v3140 = vpack.c.bf16 %v3135, %v3135
        %v3141 = vpack.c.bf16 %v3136, %v3136
        %v3142 = vpack.c.bf16 %v3137, %v3137
        %v3143 = vpack.c.bf16 %v3138, %v3138
        %v3144 = vld [vmem:[%s902] sm:$0xff]
        %v3145 = vld [vmem:[%s902 + $0x8] sm:$0xff]
        %v3146 = vld [vmem:[%s902 + $0x10] sm:$0xff]
        %v3147 = vld [vmem:[%s902 + $0x18] sm:$0xff]
        %v3148 = vld [vmem:[%s902 + $0x20] sm:$0xff]
        %v3149 = vld [vmem:[%s902 + $0x28] sm:$0xff]
        %v3150 = vld [vmem:[%s902 + $0x30] sm:$0xff]
        %v3151 = vld [vmem:[%s902 + $0x38] sm:$0xff]
        %v3152 = vld [vmem:[%s902 + $0x40] sm:$0xff]
        %v3153 = vld [vmem:[%s902 + $0x48] sm:$0xff]
        %v3154 = vld [vmem:[%s902 + $0x50] sm:$0xff]
        %v3155 = vld [vmem:[%s902 + $0x58] sm:$0xff]
        %v3156 = vld [vmem:[%s902 + $0x60] sm:$0xff]
        %v3157 = vld [vmem:[%s902 + $0x68] sm:$0xff]
        %v3158 = vld [vmem:[%s902 + $0x70] sm:$0xff]
        %v3159 = vld [vmem:[%s902 + $0x78] sm:$0xff]
        %v3160 = vld [vmem:[%s902 + $0x80] sm:$0xff]
        %v3161 = vld [vmem:[%s902 + $0x88] sm:$0xff]
        %v3162 = vld [vmem:[%s902 + $0x90] sm:$0xff]
        %v3163 = vld [vmem:[%s902 + $0x98] sm:$0xff]
        %v3164 = vld [vmem:[%s902 + $0xa0] sm:$0xff]
        %v3165 = vld [vmem:[%s902 + $0xa8] sm:$0xff]
        %v3166 = vld [vmem:[%s902 + $0xb0] sm:$0xff]
        %v3167 = vld [vmem:[%s902 + $0xb8] sm:$0xff]
        %v3168 = vld [vmem:[%s902 + $0xc0] sm:$0xff]
        %v3169 = vld [vmem:[%s902 + $0xc8] sm:$0xff]
        %v3170 = vld [vmem:[%s902 + $0xd0] sm:$0xff]
        %v3171 = vld [vmem:[%s902 + $0xd8] sm:$0xff]
        %v3172 = vld [vmem:[%s902 + $0xe0] sm:$0xff]
        %v3173 = vld [vmem:[%s902 + $0xe8] sm:$0xff]
        %v3174 = vld [vmem:[%s902 + $0xf0] sm:$0xff]
        %v3175 = vld [vmem:[%s902 + $0xf8] sm:$0xff]
        %v3176 = vld [vmem:[%s902 + $0x100] sm:$0xff]
        %v3177 = vld [vmem:[%s902 + $0x108] sm:$0xff]
        %v3178 = vld [vmem:[%s902 + $0x110] sm:$0xff]
        %v3179 = vld [vmem:[%s902 + $0x118] sm:$0xff]
        %v3180 = vld [vmem:[%s902 + $0x120] sm:$0xff]
        %v3181 = vld [vmem:[%s902 + $0x128] sm:$0xff]
        %v3182 = vld [vmem:[%s902 + $0x130] sm:$0xff]
        %v3183 = vld [vmem:[%s902 + $0x138] sm:$0xff]
        %v3184 = vld [vmem:[%s902 + $0x140] sm:$0xff]
        %v3185 = vld [vmem:[%s902 + $0x148] sm:$0xff]
        %v3186 = vld [vmem:[%s902 + $0x150] sm:$0xff]
        %v3187 = vld [vmem:[%s902 + $0x158] sm:$0xff]
        %v3188 = vld [vmem:[%s902 + $0x160] sm:$0xff]
        %v3189 = vld [vmem:[%s902 + $0x168] sm:$0xff]
        %v3190 = vld [vmem:[%s902 + $0x170] sm:$0xff]
        %v3191 = vld [vmem:[%s902 + $0x178] sm:$0xff]
        %v3192 = vld [vmem:[%s902 + $0x180] sm:$0xff]
        %v3193 = vld [vmem:[%s902 + $0x188] sm:$0xff]
        %v3194 = vld [vmem:[%s902 + $0x190] sm:$0xff]
        %v3195 = vld [vmem:[%s902 + $0x198] sm:$0xff]
        %v3196 = vld [vmem:[%s902 + $0x1a0] sm:$0xff]
        %v3197 = vld [vmem:[%s902 + $0x1a8] sm:$0xff]
        %v3198 = vld [vmem:[%s902 + $0x1b0] sm:$0xff]
        %v3199 = vld [vmem:[%s902 + $0x1b8] sm:$0xff]
        %v3200 = vld [vmem:[%s902 + $0x1c0] sm:$0xff]
        %v3201 = vld [vmem:[%s902 + $0x1c8] sm:$0xff]
        %v3202 = vld [vmem:[%s902 + $0x1d0] sm:$0xff]
        %v3203 = vld [vmem:[%s902 + $0x1d8] sm:$0xff]
        %v3204 = vld [vmem:[%s902 + $0x1e0] sm:$0xff]
        %v3205 = vld [vmem:[%s902 + $0x1e8] sm:$0xff]
        %v3206 = vld [vmem:[%s902 + $0x1f0] sm:$0xff]
        %v3207 = vld [vmem:[%s902 + $0x1f8] sm:$0xff]
        %v3272 = vunpack.c.l.b16 %v3144
        %v3273 = vunpack.c.h.b16 %v3144
        %v3274 = vunpack.c.l.b16 %v3145
        %v3275 = vunpack.c.h.b16 %v3145
        %v3276 = vunpack.c.l.b16 %v3146
        %v3277 = vunpack.c.h.b16 %v3146
        %v3278 = vunpack.c.l.b16 %v3147
        %v3279 = vunpack.c.h.b16 %v3147
        %v3280 = vunpack.c.l.b16 %v3148
        %v3281 = vunpack.c.h.b16 %v3148
        %v3282 = vunpack.c.l.b16 %v3149
        %v3283 = vunpack.c.h.b16 %v3149
        %v3284 = vunpack.c.l.b16 %v3150
        %v3285 = vunpack.c.h.b16 %v3150
        %v3286 = vunpack.c.l.b16 %v3151
        %v3287 = vunpack.c.h.b16 %v3151
        %v3288 = vunpack.c.l.b16 %v3152
        %v3289 = vunpack.c.h.b16 %v3152
        %v3290 = vunpack.c.l.b16 %v3153
        %v3291 = vunpack.c.h.b16 %v3153
        %v3292 = vunpack.c.l.b16 %v3154
        %v3293 = vunpack.c.h.b16 %v3154
        %v3294 = vunpack.c.l.b16 %v3155
        %v3295 = vunpack.c.h.b16 %v3155
        %v3296 = vunpack.c.l.b16 %v3156
        %v3297 = vunpack.c.h.b16 %v3156
        %v3298 = vunpack.c.l.b16 %v3157
        %v3299 = vunpack.c.h.b16 %v3157
        %v3300 = vunpack.c.l.b16 %v3158
        %v3301 = vunpack.c.h.b16 %v3158
        %v3302 = vunpack.c.l.b16 %v3159
        %v3303 = vunpack.c.h.b16 %v3159
        %v3304 = vunpack.c.l.b16 %v3160
        %v3305 = vunpack.c.h.b16 %v3160
        %v3306 = vunpack.c.l.b16 %v3161
        %v3307 = vunpack.c.h.b16 %v3161
        %v3308 = vunpack.c.l.b16 %v3162
        %v3309 = vunpack.c.h.b16 %v3162
        %v3310 = vunpack.c.l.b16 %v3163
        %v3311 = vunpack.c.h.b16 %v3163
        %v3312 = vunpack.c.l.b16 %v3164
        %v3313 = vunpack.c.h.b16 %v3164
        %v3314 = vunpack.c.l.b16 %v3165
        %v3315 = vunpack.c.h.b16 %v3165
        %v3316 = vunpack.c.l.b16 %v3166
        %v3317 = vunpack.c.h.b16 %v3166
        %v3318 = vunpack.c.l.b16 %v3167
        %v3319 = vunpack.c.h.b16 %v3167
        %v3320 = vunpack.c.l.b16 %v3168
        %v3321 = vunpack.c.h.b16 %v3168
        %v3322 = vunpack.c.l.b16 %v3169
        %v3323 = vunpack.c.h.b16 %v3169
        %v3324 = vunpack.c.l.b16 %v3170
        %v3325 = vunpack.c.h.b16 %v3170
        %v3326 = vunpack.c.l.b16 %v3171
        %v3327 = vunpack.c.h.b16 %v3171
        %v3328 = vunpack.c.l.b16 %v3172
        %v3329 = vunpack.c.h.b16 %v3172
        %v3330 = vunpack.c.l.b16 %v3173
        %v3331 = vunpack.c.h.b16 %v3173
        %v3332 = vunpack.c.l.b16 %v3174
        %v3333 = vunpack.c.h.b16 %v3174
        %v3334 = vunpack.c.l.b16 %v3175
        %v3335 = vunpack.c.h.b16 %v3175
        %v3336 = vunpack.c.l.b16 %v3176
        %v3337 = vunpack.c.h.b16 %v3176
        %v3338 = vunpack.c.l.b16 %v3177
        %v3339 = vunpack.c.h.b16 %v3177
        %v3340 = vunpack.c.l.b16 %v3178
        %v3341 = vunpack.c.h.b16 %v3178
        %v3342 = vunpack.c.l.b16 %v3179
        %v3343 = vunpack.c.h.b16 %v3179
        %v3344 = vunpack.c.l.b16 %v3180
        %v3345 = vunpack.c.h.b16 %v3180
        %v3346 = vunpack.c.l.b16 %v3181
        %v3347 = vunpack.c.h.b16 %v3181
        %v3348 = vunpack.c.l.b16 %v3182
        %v3349 = vunpack.c.h.b16 %v3182
        %v3350 = vunpack.c.l.b16 %v3183
        %v3351 = vunpack.c.h.b16 %v3183
        %v3352 = vunpack.c.l.b16 %v3184
        %v3353 = vunpack.c.h.b16 %v3184
        %v3354 = vunpack.c.l.b16 %v3185
        %v3355 = vunpack.c.h.b16 %v3185
        %v3356 = vunpack.c.l.b16 %v3186
        %v3357 = vunpack.c.h.b16 %v3186
        %v3358 = vunpack.c.l.b16 %v3187
        %v3359 = vunpack.c.h.b16 %v3187
        %v3360 = vunpack.c.l.b16 %v3188
        %v3361 = vunpack.c.h.b16 %v3188
        %v3362 = vunpack.c.l.b16 %v3189
        %v3363 = vunpack.c.h.b16 %v3189
        %v3364 = vunpack.c.l.b16 %v3190
        %v3365 = vunpack.c.h.b16 %v3190
        %v3366 = vunpack.c.l.b16 %v3191
        %v3367 = vunpack.c.h.b16 %v3191
        %v3368 = vunpack.c.l.b16 %v3192
        %v3369 = vunpack.c.h.b16 %v3192
        %v3370 = vunpack.c.l.b16 %v3193
        %v3371 = vunpack.c.h.b16 %v3193
        %v3372 = vunpack.c.l.b16 %v3194
        %v3373 = vunpack.c.h.b16 %v3194
        %v3374 = vunpack.c.l.b16 %v3195
        %v3375 = vunpack.c.h.b16 %v3195
        %v3376 = vunpack.c.l.b16 %v3196
        %v3377 = vunpack.c.h.b16 %v3196
        %v3378 = vunpack.c.l.b16 %v3197
        %v3379 = vunpack.c.h.b16 %v3197
        %v3380 = vunpack.c.l.b16 %v3198
        %v3381 = vunpack.c.h.b16 %v3198
        %v3382 = vunpack.c.l.b16 %v3199
        %v3383 = vunpack.c.h.b16 %v3199
        %v3384 = vunpack.c.l.b16 %v3200
        %v3385 = vunpack.c.h.b16 %v3200
        %v3386 = vunpack.c.l.b16 %v3201
        %v3387 = vunpack.c.h.b16 %v3201
        %v3388 = vunpack.c.l.b16 %v3202
        %v3389 = vunpack.c.h.b16 %v3202
        %v3390 = vunpack.c.l.b16 %v3203
        %v3391 = vunpack.c.h.b16 %v3203
        %v3392 = vunpack.c.l.b16 %v3204
        %v3393 = vunpack.c.h.b16 %v3204
        %v3394 = vunpack.c.l.b16 %v3205
        %v3395 = vunpack.c.h.b16 %v3205
        %v3396 = vunpack.c.l.b16 %v3206
        %v3397 = vunpack.c.h.b16 %v3206
        %v3398 = vunpack.c.l.b16 %v3207
        %v3399 = vunpack.c.h.b16 %v3207
        %v3400 = vpack.c.b16 %v3274, %v3272
        %v3401 = vpack.c.b16 %v3275, %v3273
        %v3402 = vpack.c.b16 %v3278, %v3276
        %v3403 = vpack.c.b16 %v3279, %v3277
        %v3404 = vpack.c.b16 %v3282, %v3280
        %v3405 = vpack.c.b16 %v3283, %v3281
        %v3406 = vpack.c.b16 %v3286, %v3284
        %v3407 = vpack.c.b16 %v3287, %v3285
        %v3408 = vpack.c.b16 %v3290, %v3288
        %v3409 = vpack.c.b16 %v3291, %v3289
        %v3410 = vpack.c.b16 %v3294, %v3292
        %v3411 = vpack.c.b16 %v3295, %v3293
        %v3412 = vpack.c.b16 %v3298, %v3296
        %v3413 = vpack.c.b16 %v3299, %v3297
        %v3414 = vpack.c.b16 %v3302, %v3300
        %v3415 = vpack.c.b16 %v3303, %v3301
        %v3416 = vpack.c.b16 %v3306, %v3304
        %v3417 = vpack.c.b16 %v3307, %v3305
        %v3418 = vpack.c.b16 %v3310, %v3308
        %v3419 = vpack.c.b16 %v3311, %v3309
        %v3420 = vpack.c.b16 %v3314, %v3312
        %v3421 = vpack.c.b16 %v3315, %v3313
        %v3422 = vpack.c.b16 %v3318, %v3316
        %v3423 = vpack.c.b16 %v3319, %v3317
        %v3424 = vpack.c.b16 %v3322, %v3320
        %v3425 = vpack.c.b16 %v3323, %v3321
        %v3426 = vpack.c.b16 %v3326, %v3324
        %v3427 = vpack.c.b16 %v3327, %v3325
        %v3428 = vpack.c.b16 %v3330, %v3328
        %v3429 = vpack.c.b16 %v3331, %v3329
        %v3430 = vpack.c.b16 %v3334, %v3332
        %v3431 = vpack.c.b16 %v3335, %v3333
        %v3432 = vpack.c.b16 %v3338, %v3336
        %v3433 = vpack.c.b16 %v3339, %v3337
        %v3434 = vpack.c.b16 %v3342, %v3340
        %v3435 = vpack.c.b16 %v3343, %v3341
        %v3436 = vpack.c.b16 %v3346, %v3344
        %v3437 = vpack.c.b16 %v3347, %v3345
        %v3438 = vpack.c.b16 %v3350, %v3348
        %v3439 = vpack.c.b16 %v3351, %v3349
        %v3440 = vpack.c.b16 %v3354, %v3352
        %v3441 = vpack.c.b16 %v3355, %v3353
        %v3442 = vpack.c.b16 %v3358, %v3356
        %v3443 = vpack.c.b16 %v3359, %v3357
        %v3444 = vpack.c.b16 %v3362, %v3360
        %v3445 = vpack.c.b16 %v3363, %v3361
        %v3446 = vpack.c.b16 %v3366, %v3364
        %v3447 = vpack.c.b16 %v3367, %v3365
        %v3448 = vpack.c.b16 %v3370, %v3368
        %v3449 = vpack.c.b16 %v3371, %v3369
        %v3450 = vpack.c.b16 %v3374, %v3372
        %v3451 = vpack.c.b16 %v3375, %v3373
        %v3452 = vpack.c.b16 %v3378, %v3376
        %v3453 = vpack.c.b16 %v3379, %v3377
        %v3454 = vpack.c.b16 %v3382, %v3380
        %v3455 = vpack.c.b16 %v3383, %v3381
        %v3456 = vpack.c.b16 %v3386, %v3384
        %v3457 = vpack.c.b16 %v3387, %v3385
        %v3458 = vpack.c.b16 %v3390, %v3388
        %v3459 = vpack.c.b16 %v3391, %v3389
        %v3460 = vpack.c.b16 %v3394, %v3392
        %v3461 = vpack.c.b16 %v3395, %v3393
        %v3462 = vpack.c.b16 %v3398, %v3396
        %v3463 = vpack.c.b16 %v3399, %v3397
        %3528 = vmatprep.subr.bf16.mxu0 %v3401
        %3529 = vmatpush1.bf16.msra.mxu0 %v3400
        %3530 = vmatprep.subr.bf16.mxu0 %v3403
        %3531 = vmatpush1.bf16.msra.mxu0 %v3402
        %3532 = vmatprep.subr.bf16.mxu0 %v3405
        %3533 = vmatpush1.bf16.msra.mxu0 %v3404
        %3534 = vmatprep.subr.bf16.mxu0 %v3407
        %3535 = vmatpush1.bf16.msra.mxu0 %v3406
        %3536 = vmatprep.subr.bf16.mxu0 %v3409
        %3537 = vmatpush1.bf16.msra.mxu0 %v3408
        %3538 = vmatprep.subr.bf16.mxu0 %v3411
        %3539 = vmatpush1.bf16.msra.mxu0 %v3410
        %3540 = vmatprep.subr.bf16.mxu0 %v3413
        %3541 = vmatpush1.bf16.msra.mxu0 %v3412
        %3542 = vmatprep.subr.bf16.mxu0 %v3415
        %3543 = vmatpush1.bf16.msra.mxu0 %v3414
        %3544 = vmatprep.subr.bf16.mxu0 %v3417
        %3545 = vmatpush1.bf16.msra.mxu0 %v3416
        %3546 = vmatprep.subr.bf16.mxu0 %v3419
        %3547 = vmatpush1.bf16.msra.mxu0 %v3418
        %3548 = vmatprep.subr.bf16.mxu0 %v3421
        %3549 = vmatpush1.bf16.msra.mxu0 %v3420
        %3550 = vmatprep.subr.bf16.mxu0 %v3423
        %3551 = vmatpush1.bf16.msra.mxu0 %v3422
        %3552 = vmatprep.subr.bf16.mxu0 %v3425
        %3553 = vmatpush1.bf16.msra.mxu0 %v3424
        %3554 = vmatprep.subr.bf16.mxu0 %v3427
        %3555 = vmatpush1.bf16.msra.mxu0 %v3426
        %3556 = vmatprep.subr.bf16.mxu0 %v3429
        %3557 = vmatpush1.bf16.msra.mxu0 %v3428
        %3558 = vmatprep.subr.bf16.mxu0 %v3431
        %3559 = vmatpush1.bf16.msra.mxu0 %v3430
        %3560 = vmatprep.mubr.bf16.mxu0 %v3141
        %3561 = vmatmul.mubr.bf16.gmra.mrb[0].mxu0 %v3140
        %v3562 = vpop.f32.mrb[0].mxu0
        %v3563 = vadd.f32 0.0, %v3562
        %v3564 = vpop.f32.mrb[0].mxu0
        %v3565 = vadd.f32 0.0, %v3564
        %v3566 = vpop.f32.mrb[0].mxu0
        %v3567 = vpop.f32.mrb[0].mxu0
        %3568 = vdwg.mxu0
        %3569 = vmatprep.subr.bf16.mxu0 %v3433
        %3570 = vmatpush1.bf16.msra.mxu0 %v3432
        %3571 = vmatprep.subr.bf16.mxu0 %v3435
        %3572 = vmatpush1.bf16.msra.mxu0 %v3434
        %3573 = vmatprep.subr.bf16.mxu0 %v3437
        %3574 = vmatpush1.bf16.msra.mxu0 %v3436
        %3575 = vmatprep.subr.bf16.mxu0 %v3439
        %3576 = vmatpush1.bf16.msra.mxu0 %v3438
        %3577 = vmatprep.subr.bf16.mxu0 %v3441
        %3578 = vmatpush1.bf16.msra.mxu0 %v3440
        %3579 = vmatprep.subr.bf16.mxu0 %v3443
        %3580 = vmatpush1.bf16.msra.mxu0 %v3442
        %3581 = vmatprep.subr.bf16.mxu0 %v3445
        %3582 = vmatpush1.bf16.msra.mxu0 %v3444
        %3583 = vmatprep.subr.bf16.mxu0 %v3447
        %3584 = vmatpush1.bf16.msra.mxu0 %v3446
        %3585 = vmatprep.subr.bf16.mxu0 %v3449
        %3586 = vmatpush1.bf16.msra.mxu0 %v3448
        %3587 = vmatprep.subr.bf16.mxu0 %v3451
        %3588 = vmatpush1.bf16.msra.mxu0 %v3450
        %3589 = vmatprep.subr.bf16.mxu0 %v3453
        %3590 = vmatpush1.bf16.msra.mxu0 %v3452
        %3591 = vmatprep.subr.bf16.mxu0 %v3455
        %3592 = vmatpush1.bf16.msra.mxu0 %v3454
        %3593 = vmatprep.subr.bf16.mxu0 %v3457
        %3594 = vmatpush1.bf16.msra.mxu0 %v3456
        %3595 = vmatprep.subr.bf16.mxu0 %v3459
        %3596 = vmatpush1.bf16.msra.mxu0 %v3458
        %3597 = vmatprep.subr.bf16.mxu0 %v3461
        %3598 = vmatpush1.bf16.msra.mxu0 %v3460
        %3599 = vmatprep.subr.bf16.mxu0 %v3463
        %3600 = vmatpush1.bf16.msra.mxu0 %v3462
        %3601 = vmatprep.mubr.bf16.mxu0 %v3143
        %3602 = vmatmul.mubr.bf16.gmra.mrb[0].mxu0 %v3142
        %v3603 = vpop.f32.mrb[0].mxu0
        %v3604 = vadd.f32 %v3563, %v3603
        %v3605 = vpop.f32.mrb[0].mxu0
        %v3606 = vadd.f32 %v3565, %v3605
        %v3607 = vpop.f32.mrb[0].mxu0
        %v3608 = vpop.f32.mrb[0].mxu0
        %3609 = vdwg.mxu0
        %v3612 = vcombine.low %v3604, %v3606
        %v3614 = vunpack.c.l.s4 1983009808
        %v3615 = vunpack.c.0.s8 %v3614
        %v3616 = vlaneseq
        %v3617 = vshrl.u32 %v3616, 7
        %v3618 = vsub.s32 %v3615, %v3617
        %v3619 = vrot.slane %v3612, %v3618
        %v3621 = vadd.f32 %v3139, %v3619
        %3622 = vst [vmem:[#allocation2] sm:$0xf] %v3621
        %p3623 = scmp.eq.s32.totalorder %s19, 1
        // Predicated region
        $region76: #{_lambda_.7} parent=66 // pred_check
          %p3624 = pneg %p3623
        $region77: #{_lambda_.7} parent=66 // pred_check_branch
          %3626 = sbr.rel (%p3624) target = $region79
        $region78: #{_lambda_.7} parent=66 // pred_region
          %v3627 = vld [vmem:[#allocation2] sm:$0xf]
          %v3628 = vld [vmem:[%s4] sm:$0x3]
          %v3630 = vlaneseq
          %v3631 = vshrl.u32 %v3630, 7
          %v3632 = vsub.s32 0, %v3631
          %v3633 = vrot.slane %v3628, %v3632
          %v3634 = vlaneseq
          %v3635 = vshrl.u32 %v3634, 7
          %v3636 = vsub.s32 1, %v3635
          %v3637 = vrot.slane %v3628, %v3636
          %v3638 = vcombine.low %v3633, %v3637
          %v3640 = vunpack.c.l.s4 1983009808
          %v3641 = vunpack.c.0.s8 %v3640
          %v3642 = vlaneseq
          %v3643 = vshrl.u32 %v3642, 7
          %v3644 = vsub.s32 %v3641, %v3643
          %v3645 = vrot.slane %v3638, %v3644
          %v3647 = vadd.f32 %v3627, %v3645
          %v3648 = vmax.f32 %v3647, 0.0
          %v3649 = vld [vmem:[%s5] sm:$0xff]
          %v3650 = vld [vmem:[%s5 + $0x8] sm:$0xff]
          %v3651 = vld [vmem:[%s5 + $0x10] sm:$0xff]
          %v3652 = vld [vmem:[%s5 + $0x18] sm:$0xff]
          %v3653 = vld [vmem:[%s5 + $0x20] sm:$0xff]
          %v3654 = vld [vmem:[%s5 + $0x28] sm:$0xff]
          %v3655 = vld [vmem:[%s5 + $0x30] sm:$0xff]
          %v3656 = vld [vmem:[%s5 + $0x38] sm:$0xff]
          %v3657 = vld [vmem:[%s5 + $0x40] sm:$0xff]
          %v3658 = vld [vmem:[%s5 + $0x48] sm:$0xff]
          %v3659 = vld [vmem:[%s5 + $0x50] sm:$0xff]
          %v3660 = vld [vmem:[%s5 + $0x58] sm:$0xff]
          %v3661 = vld [vmem:[%s5 + $0x60] sm:$0xff]
          %v3662 = vld [vmem:[%s5 + $0x68] sm:$0xff]
          %v3663 = vld [vmem:[%s5 + $0x70] sm:$0xff]
          %v3664 = vld [vmem:[%s5 + $0x78] sm:$0xff]
          %v3665 = vld [vmem:[%s5 + $0x80] sm:$0xff]
          %v3666 = vld [vmem:[%s5 + $0x88] sm:$0xff]
          %v3667 = vld [vmem:[%s5 + $0x90] sm:$0xff]
          %v3668 = vld [vmem:[%s5 + $0x98] sm:$0xff]
          %v3669 = vld [vmem:[%s5 + $0xa0] sm:$0xff]
          %v3670 = vld [vmem:[%s5 + $0xa8] sm:$0xff]
          %v3671 = vld [vmem:[%s5 + $0xb0] sm:$0xff]
          %v3672 = vld [vmem:[%s5 + $0xb8] sm:$0xff]
          %v3673 = vld [vmem:[%s5 + $0xc0] sm:$0xff]
          %v3674 = vld [vmem:[%s5 + $0xc8] sm:$0xff]
          %v3675 = vld [vmem:[%s5 + $0xd0] sm:$0xff]
          %v3676 = vld [vmem:[%s5 + $0xd8] sm:$0xff]
          %v3677 = vld [vmem:[%s5 + $0xe0] sm:$0xff]
          %v3678 = vld [vmem:[%s5 + $0xe8] sm:$0xff]
          %v3679 = vld [vmem:[%s5 + $0xf0] sm:$0xff]
          %v3680 = vld [vmem:[%s5 + $0xf8] sm:$0xff]
          %v3681 = vld [vmem:[%s6] sm:$0x1]
          %v3683 = vlaneseq
          %v3684 = vshrl.u32 %v3683, 7
          %v3685 = vsub.s32 0, %v3684
          %v3686 = vrot.slane %v3681, %v3685
          %v3690 = vunpack.c.l.s4 1983009808
          %v3691 = vunpack.c.0.s8 %v3690
          %v3692 = vlaneseq
          %v3693 = vshrl.u32 %v3692, 7
          %v3694 = vsub.s32 %v3691, %v3693
          %v3695 = vrot.slane %v3648, %v3694
          %v3696 = vcombine.high %v3695, %v3695
          %3699 = vmatprep.subr.mxu0 0.0
          %3700 = vmatpush1.msra.mxu0 %v3649
          %3701 = vmatprep.subr.mxu0 0.0
          %3702 = vmatpush1.msra.mxu0 %v3650
          %3703 = vmatprep.subr.mxu0 0.0
          %3704 = vmatpush1.msra.mxu0 %v3651
          %3705 = vmatprep.subr.mxu0 0.0
          %3706 = vmatpush1.msra.mxu0 %v3652
          %3707 = vmatprep.subr.mxu0 0.0
          %3708 = vmatpush1.msra.mxu0 %v3653
          %3709 = vmatprep.subr.mxu0 0.0
          %3710 = vmatpush1.msra.mxu0 %v3654
          %3711 = vmatprep.subr.mxu0 0.0
          %3712 = vmatpush1.msra.mxu0 %v3655
          %3713 = vmatprep.subr.mxu0 0.0
          %3714 = vmatpush1.msra.mxu0 %v3656
          %3715 = vmatprep.subr.mxu0 0.0
          %3716 = vmatpush1.msra.mxu0 %v3657
          %3717 = vmatprep.subr.mxu0 0.0
          %3718 = vmatpush1.msra.mxu0 %v3658
          %3719 = vmatprep.subr.mxu0 0.0
          %3720 = vmatpush1.msra.mxu0 %v3659
          %3721 = vmatprep.subr.mxu0 0.0
          %3722 = vmatpush1.msra.mxu0 %v3660
          %3723 = vmatprep.subr.mxu0 0.0
          %3724 = vmatpush1.msra.mxu0 %v3661
          %3725 = vmatprep.subr.mxu0 0.0
          %3726 = vmatpush1.msra.mxu0 %v3662
          %3727 = vmatprep.subr.mxu0 0.0
          %3728 = vmatpush1.msra.mxu0 %v3663
          %3729 = vmatprep.subr.mxu0 0.0
          %3730 = vmatpush1.msra.mxu0 %v3664
          %3731 = vmatprep.subr.mxu0 0.0
          %3732 = vmatpush1.msra.mxu0 %v3665
          %3733 = vmatprep.subr.mxu0 0.0
          %3734 = vmatpush1.msra.mxu0 %v3666
          %3735 = vmatprep.subr.mxu0 0.0
          %3736 = vmatpush1.msra.mxu0 %v3667
          %3737 = vmatprep.subr.mxu0 0.0
          %3738 = vmatpush1.msra.mxu0 %v3668
          %3739 = vmatprep.subr.mxu0 0.0
          %3740 = vmatpush1.msra.mxu0 %v3669
          %3741 = vmatprep.subr.mxu0 0.0
          %3742 = vmatpush1.msra.mxu0 %v3670
          %3743 = vmatprep.subr.mxu0 0.0
          %3744 = vmatpush1.msra.mxu0 %v3671
          %3745 = vmatprep.subr.mxu0 0.0
          %3746 = vmatpush1.msra.mxu0 %v3672
          %3747 = vmatprep.subr.mxu0 0.0
          %3748 = vmatpush1.msra.mxu0 %v3673
          %3749 = vmatprep.subr.mxu0 0.0
          %3750 = vmatpush1.msra.mxu0 %v3674
          %3751 = vmatprep.subr.mxu0 0.0
          %3752 = vmatpush1.msra.mxu0 %v3675
          %3753 = vmatprep.subr.mxu0 0.0
          %3754 = vmatpush1.msra.mxu0 %v3676
          %3755 = vmatprep.subr.mxu0 0.0
          %3756 = vmatpush1.msra.mxu0 %v3677
          %3757 = vmatprep.subr.mxu0 0.0
          %3758 = vmatpush1.msra.mxu0 %v3678
          %3759 = vmatprep.subr.mxu0 0.0
          %3760 = vmatpush1.msra.mxu0 %v3679
          %3761 = vmatprep.subr.mxu0 0.0
          %3762 = vmatpush1.msra.mxu0 %v3680
          %3763 = vmatprep.mubr.f32.mxu0 %v3696
          %3764 = vmatmul.mubr.f32.gmra.mrb[0].mxu0 %v3695
          %v3765 = vpop.f32.mrb[0].mxu0
          %v3766 = vadd.f32 %v3686, %v3765
          %v3767 = vpop.f32.mrb[0].mxu0
          %3768 = vdwg.mxu0
          %3769 = vst [vmem:[#allocation4] sm:$0x3] %v3766
        $region79: #{_lambda_.7} parent=66 // pred_fallthru
          _
        // Predicated region
        $region80: #{_lambda_.7} parent=66 // pred_check
          %p3770 = pneg %p194
        $region81: #{_lambda_.7} parent=66 // pred_check_branch
          %3772 = sbr.rel (%p3770) target = $region83
        $region82: #{_lambda_.7} parent=66 // pred_region
          %s3774 = ssub.s32 32, 32
          %3775 = vsyncadd [#allocation5], %s3774
          %s3777 = sshll.u32 [#allocation4], 4
          %s3778 = int_to_ptr.vmem [resolvable:$true] %s3777
          %3780 = dma.vmem_to_hbm [thread:$0]  %s3778, 32, %s7, [#allocation5]
        $region83: #{_lambda_.7} parent=66 // pred_fallthru
          _
        // Predicated region
        $region84: #{_lambda_.7} parent=66 // pred_check
          %p3781 = pneg %p194
        $region85: #{_lambda_.7} parent=66 // pred_check_branch
          %3783 = sbr.rel (%p3781) target = $region87
        $region86: #{_lambda_.7} parent=66 // pred_region
          %3784 = dma.done [#allocation5], 32
        $region87: #{_lambda_.7} parent=66 // pred_fallthru
          _
      $region67: #{_lambda_.7} parent=5 // pred_fallthru
        _
      %p3785 = scmp.le.s32.totalorder 2, %s14
      // Predicated region
      $region88: #{_lambda_.7} parent=5 // pred_check
        %p3786 = pneg %p3785
      $region89: #{_lambda_.7} parent=5 // pred_check_branch
        %3788 = sbr.rel (%p3786) target = $region91
      $region90: #{_lambda_.7} parent=5 // pred_region
        %s3789 = ssub.s32 %s14, 2
      $region91: #{_lambda_.7} parent=5 // pred_fallthru
        _
    $region6: #{_lambda_.7} parent=1 // loop_footer
      %s18 = sadd.s32 1, %s14
    $region7: #{_lambda_.7} parent=1 // loop_footer_branch
      %13 = sbr.rel target = $region3
    $region8: #{_lambda_.7} parent=1 // loop_exit
      _
    %3790 = vsyncpa [#allocation5], 1
    %s3791 = scalar_lea.sflag [#allocation5], 1
    %3792 = vsyncpa %s3791, 1

</llo_original>
